<compile_context>
chip_gen: v6e
topology: v6e:2x2x1
jax: 0.10.0
libtpu: 0.0.40
codegen_flags: <defaults>
</compile_context>

<pallas_src>
import numpy as np
import jax
import jax.numpy as jnp
from jax.experimental import pallas as pl
from jax.experimental.pallas import tpu as pltpu

# ----------------------------- small config ---------------------------------
B = 2          # batch
CHANS = 8      # EEG channels     (original: 122)
SAMPLES = 16   # EEG time samples (original: 1651)
IMG = 16       # resized image    (original: 224)
PATCH = 8      # ViT patch size   (original: 16)
D = 32         # embed dim        (original: 768)
HEADS = 4      # attention heads  (original: 12)
DH = D // HEADS
DEPTH = 2      # transformer blocks (original: 12)
MLP = 64       # MLP hidden       (original: 3072)
CLS = 5        # classes          (original: 39)
CLS_PAD = 128  # lane-dense padded classifier width (unmasked vst; sliced on host)
N_PATCH = (IMG // PATCH) ** 2
SEQ = N_PATCH + 1          # +cls token
PP3 = 3 * PATCH * PATCH    # flattened patch length
K_IN = CHANS * SAMPLES     # flattened EEG input length
LN_EPS = 1e-6              # timm ViT LayerNorm eps


# ----------------------------- host-side constants ---------------------------
def make_wavelet_bank(T, widths=(1.0, 2.0, 4.0), klen=9):
    """3 Ricker wavelets -> 'same'-padded Toeplitz conv matrices (3, T, T)."""
    t = np.arange(klen) - (klen - 1) / 2.0
    mats = []
    for w in widths:
        a = 2.0 / (np.sqrt(3.0 * w) * np.pi ** 0.25)
        ker = a * (1.0 - (t / w) ** 2) * np.exp(-0.5 * (t / w) ** 2)
        m = np.zeros((T, T), dtype=np.float32)
        for i in range(T):
            for j, kv in enumerate(ker):
                src = i + j - (klen - 1) // 2
                if 0 <= src < T:
                    m[i, src] += kv
        mats.append(m)
    return np.stack(mats)


def make_bilinear_matrix(in_size, out_size):
    """Matches torch F.interpolate(mode='bilinear', align_corners=False)."""
    m = np.zeros((out_size, in_size), dtype=np.float32)
    scale = in_size / out_size
    for i in range(out_size):
        src = (i + 0.5) * scale - 0.5
        src = max(src, 0.0)
        i0 = min(int(np.floor(src)), in_size - 1)
        i1 = min(i0 + 1, in_size - 1)
        l1 = src - i0
        m[i, i0] += 1.0 - l1
        m[i, i1] += l1
    return m


def make_constants():
    bank = make_wavelet_bank(SAMPLES)                 # (3, T, T)
    r_mat = make_bilinear_matrix(CHANS, IMG)          # (IMG, CHANS)  height resize
    c_mat = make_bilinear_matrix(SAMPLES, IMG)        # (IMG, SAMPLES) width resize
    # wavelet + width-resize folded into one (T, 3*IMG) right-multiply matrix
    m_stack = np.concatenate([bank[w].T @ c_mat.T for w in range(3)], axis=1)
    return jnp.asarray(r_mat, jnp.float32), jnp.asarray(m_stack, jnp.float32)


# ----------------------------- in-kernel helpers ------------------------------
def _layer_norm(x, g, b):
    mean = jnp.mean(x, axis=-1, keepdims=True)
    xc = x - mean
    var = jnp.mean(xc * xc, axis=-1, keepdims=True)
    return xc * jax.lax.rsqrt(var + LN_EPS) * g + b


def _erf_poly(x):
    # Abramowitz & Stegun 7.1.26, |err| < 1.5e-7 (lax.erf has no Mosaic lowering;
    # exp goes to the EUP slot, the polynomial is a handful of VALU ops).
    a1, a2, a3, a4, a5 = 0.254829592, -0.284496736, 1.421413741, -1.453152027, 1.061405429
    p = 0.3275911
    sgn = jnp.where(x >= 0, 1.0, -1.0)
    ax = jnp.abs(x)
    t = 1.0 / (1.0 + p * ax)
    poly = ((((a5 * t + a4) * t + a3) * t + a2) * t + a1) * t
    return sgn * (1.0 - poly * jnp.exp(-ax * ax))


def _gelu_exact(x):
    return 0.5 * x * (1.0 + _erf_poly(x * np.float32(1.0 / np.sqrt(2.0))))


# ----------------------------- the fused kernel -------------------------------
def _eeg_vit_kernel(x_ref, e3_ref, add_ref,
                    ln1g_ref, ln1b_ref, qkvw_ref, qkvb_ref,
                    projw_ref, projb_ref, ln2g_ref, ln2b_ref,
                    fc1w_ref, fc1b_ref, fc2w_ref, fc2b_ref,
                    lnfg_ref, lnfb_ref, hw_ref, hb_ref,
                    o_ref, tok_ref):
    scale = np.float32(DH ** -0.5)

    # ---- front end: wavelet FIR + bilinear resize + patch unfold + patch embed,
    # all folded (exactly, since Dropout is identity in eval) into e3[p]:(K_IN, D).
    x_row = x_ref[0]                                            # (1, K_IN)
    tok_ref[0:1, :] = jnp.zeros((1, D), jnp.float32)            # cls slot (content from add_term)
    for p in range(N_PATCH):
        tok_ref[p + 1:p + 2, :] = jnp.dot(
            x_row, e3_ref[p], preferred_element_type=jnp.float32)
    # add_term carries cls_token + pos_embed + patch bias.
    x = tok_ref[...] + add_ref[...]                             # (SEQ, D) tokens

    # TODO(synk): at DEPTH=12 replace this static unroll with a depth grid axis
    #             ("arbitrary") carrying x in tok_ref-style VMEM scratch.
    for d in range(DEPTH):
        # ---- attention (fused QKV: one 96-wide matmul, then per-head slices) ----
        h = _layer_norm(x, ln1g_ref[d], ln1b_ref[d])
        qkv = jnp.dot(h, qkvw_ref[d], preferred_element_type=jnp.float32) + qkvb_ref[d]
        attn = jnp.zeros((SEQ, D), dtype=jnp.float32)
        for hh in range(HEADS):                                 # static unroll over heads
            q = qkv[:, hh * DH:(hh + 1) * DH]
            k = qkv[:, D + hh * DH:D + (hh + 1) * DH]
            v = qkv[:, 2 * D + hh * DH:2 * D + (hh + 1) * DH]
            s = jax.lax.dot_general(q, k, (((1,), (1,)), ((), ())),
                                    preferred_element_type=jnp.float32) * scale
            s = s - jnp.max(s, axis=-1, keepdims=True)
            e = jnp.exp(s)
            p_attn = e * pl.reciprocal(jnp.sum(e, axis=-1, keepdims=True), approx=True)
            o_h = jnp.dot(p_attn, v, preferred_element_type=jnp.float32)     # (SEQ, DH)
            # fold the output projection per head (avoids a lane concat)
            attn = attn + jnp.dot(o_h, projw_ref[d, hh],
                                  preferred_element_type=jnp.float32)
        x = x + attn + projb_ref[d]

        # ---- MLP ----
        h = _layer_norm(x, ln2g_ref[d], ln2b_ref[d])
        h = jnp.dot(h, fc1w_ref[d], preferred_element_type=jnp.float32) + fc1b_ref[d]
        h = _gelu_exact(h)
        x = x + jnp.dot(h, fc2w_ref[d], preferred_element_type=jnp.float32) + fc2b_ref[d]

    # ---- final LN + classifier head (padded to 128 lanes -> unmasked store) ----
    xf = _layer_norm(x, lnfg_ref[...], lnfb_ref[...])
    cls_feat = xf[0:1, :]                                        # (1, D)
    o_ref[0] = (jnp.dot(cls_feat, hw_ref[...], preferred_element_type=jnp.float32)
                + hb_ref[...]).astype(o_ref.dtype)


_WEIGHT_ORDER = ["e3", "add_term", "ln1_g", "ln1_b", "qkv_w", "qkv_b",
                 "proj_w", "proj_b", "ln2_g", "ln2_b", "fc1_w", "fc1_b",
                 "fc2_w", "fc2_b", "lnf_g", "lnf_b", "head_w", "head_b"]


def _rep(shape):
    # Grid-invariant (replicated) weight input.
    # TODO(synk): at full scale use pipeline_mode=pl.Buffered(1) or a manual one-shot
    #             DMA so replicated weights are not double-buffered in VMEM.
    n = len(shape)
    return pl.BlockSpec(shape, lambda b, n=n: (0,) * n)


@jax.jit
def eeg_vit_forward(x, pp):
    """EEGViTClassifier.forward: x (B, CHANS, SAMPLES) -> logits (B, CLS)."""
    x_flat = x.reshape(B, 1, K_IN)                 # only remaining wrapper op
    weights = [pp[name] for name in _WEIGHT_ORDER]
    in_specs = [pl.BlockSpec((1, 1, K_IN), lambda b: (b, 0, 0))]
    in_specs += [_rep(w.shape) for w in weights]

    out = pl.pallas_call(
        _eeg_vit_kernel,
        out_shape=jax.ShapeDtypeStruct((B, 1, CLS_PAD), jnp.float32),
        grid=(B,),
        in_specs=in_specs,
        out_specs=pl.BlockSpec((1, 1, CLS_PAD), lambda b: (b, 0, 0)),
        scratch_shapes=[pltpu.VMEM((SEQ, D), jnp.float32)],
        # "parallel" -> v7x's 2 TensorCores split the batch; no-op on v5e/v6e.
        # TODO(synk): on single-TC chips (v5e/v6e) fold B into one grid step instead.
        compiler_params=pltpu.CompilerParams(dimension_semantics=("parallel",)),
    )(x_flat, *weights)
    return out[:, 0, :CLS]


# ----------------------------- params ----------------------------------------
def init_params(key):
    def nrm(k, shape, std=0.02):
        return std * jax.random.normal(k, shape, dtype=jnp.float32)

    keys = iter(jax.random.split(key, 64))
    p = {
        "patch_w": nrm(next(keys), (PP3, D)),
        "patch_b": jnp.zeros((D,), jnp.float32),
        "cls_token": nrm(next(keys), (1, 1, D)),
        "pos_embed": nrm(next(keys), (1, SEQ, D)),
        "ln_f_g": jnp.ones((D,), jnp.float32),
        "ln_f_b": jnp.zeros((D,), jnp.float32),
        "head_w": nrm(next(keys), (D, CLS)),
        "head_b": jnp.zeros((CLS,), jnp.float32),
        "blocks": [],
    }
    for _ in range(DEPTH):
        p["blocks"].append({
            "ln1_g": jnp.ones((D,), jnp.float32), "ln1_b": jnp.zeros((D,), jnp.float32),
            "qkv_w": nrm(next(keys), (D, 3 * D)), "qkv_b": jnp.zeros((3 * D,), jnp.float32),
            "proj_w": nrm(next(keys), (D, D)),    "proj_b": jnp.zeros((D,), jnp.float32),
            "ln2_g": jnp.ones((D,), jnp.float32), "ln2_b": jnp.zeros((D,), jnp.float32),
            "fc1_w": nrm(next(keys), (D, MLP)),   "fc1_b": jnp.zeros((MLP,), jnp.float32),
            "fc2_w": nrm(next(keys), (MLP, D)),   "fc2_b": jnp.zeros((D,), jnp.float32),
        })
    return p


def pack_params(p, r_mat, m_stack):
    """Fold the front end into per-patch embed matrices, stack per-block weights over
    depth, and pad the classifier head to a lane-dense 128-wide output.
    TODO(synk): at full scale keep per-block weights un-stacked (depth grid axis) and
                cast matmul operands to bf16 (f32 accum) to fit v7x's 64 MiB VMEM."""
    blocks = p["blocks"]

    def st(name):
        return jnp.stack([blk[name] for blk in blocks], axis=0)

    # Composite linear map (wavelet FIR + bilinear resize + patch unfold + patch_w):
    # token_{1+q} = x_flat @ e3[q].  Built by pushing the K_IN basis vectors through
    # the exact same pipeline as the original module (one-time host precompute).
    hp = IMG // PATCH
    fe = jnp.einsum("ia,tm->atim", r_mat, m_stack).reshape(K_IN, IMG, 3 * IMG)
    img = fe.reshape(K_IN, IMG, 3, IMG).transpose(0, 2, 1, 3)            # (K, 3, IMG, IMG)
    pat = img.reshape(K_IN, 3, hp, PATCH, hp, PATCH)
    pat = pat.transpose(0, 2, 4, 1, 3, 5).reshape(K_IN, N_PATCH, PP3)    # (K, N_PATCH, PP3)
    e3 = jnp.einsum("kpf,fd->pkd", pat, p["patch_w"])                    # (N_PATCH, K, D)

    # cls token + pos-embed + patch bias folded into a single additive term:
    # row 0 = cls + pos[0]; rows 1.. = patch_b + pos[1..]
    add_term = jnp.concatenate(
        [p["cls_token"][0] + p["pos_embed"][0, 0:1],
         p["patch_b"][None, :] + p["pos_embed"][0, 1:]], axis=0)         # (SEQ, D)

    head_w = jnp.zeros((D, CLS_PAD), jnp.float32).at[:, :CLS].set(p["head_w"])
    head_b = jnp.zeros((1, CLS_PAD), jnp.float32).at[0, :CLS].set(p["head_b"])

    return {
        "e3": e3,
        "add_term": add_term,
        "ln1_g": st("ln1_g").reshape(DEPTH, 1, D), "ln1_b": st("ln1_b").reshape(DEPTH, 1, D),
        "qkv_w": st("qkv_w"),                                  # (DEPTH, D, 3D); cols = (q|k|v, head, dh)
        "qkv_b": st("qkv_b").reshape(DEPTH, 1, 3 * D),
        "proj_w": st("proj_w").reshape(DEPTH, HEADS, DH, D),   # rows = (head, dh)
        "proj_b": st("proj_b").reshape(DEPTH, 1, D),
        "ln2_g": st("ln2_g").reshape(DEPTH, 1, D), "ln2_b": st("ln2_b").reshape(DEPTH, 1, D),
        "fc1_w": st("fc1_w"), "fc1_b": st("fc1_b").reshape(DEPTH, 1, MLP),
        "fc2_w": st("fc2_w"), "fc2_b": st("fc2_b").reshape(DEPTH, 1, D),
        "lnf_g": p["ln_f_g"].reshape(1, D), "lnf_b": p["ln_f_b"].reshape(1, D),
        "head_w": head_w, "head_b": head_b,
    }


# ----------------------------- main --------------------------------------------
if __name__ == "__main__":
    key = jax.random.PRNGKey(0)
    kx, kp = jax.random.split(key)
    x = jax.random.normal(kx, (B, CHANS, SAMPLES), dtype=jnp.float32)
    params = init_params(kp)
    r_mat, m_stack = make_constants()
    packed = pack_params(params, r_mat, m_stack)

    out = eeg_vit_forward(x, packed)
    out = jax.block_until_ready(out)
    assert out.shape == (B, CLS), out.shape
    assert bool(jnp.all(jnp.isfinite(out)))
    print("KERNEL_OK")
</pallas_src>

<mosaic_0001>
module attributes {stable_mosaic.version = 11 : i64} {
  func.func @_eeg_vit_kernel(%arg0: i32, %arg1: memref<1x1x128xf32, #tpu.memory_space<vmem>>, %arg2: memref<4x128x32xf32, #tpu.memory_space<vmem>>, %arg3: memref<5x32xf32, #tpu.memory_space<vmem>>, %arg4: memref<2x1x32xf32, #tpu.memory_space<vmem>>, %arg5: memref<2x1x32xf32, #tpu.memory_space<vmem>>, %arg6: memref<2x32x96xf32, #tpu.memory_space<vmem>>, %arg7: memref<2x1x96xf32, #tpu.memory_space<vmem>>, %arg8: memref<2x4x8x32xf32, #tpu.memory_space<vmem>>, %arg9: memref<2x1x32xf32, #tpu.memory_space<vmem>>, %arg10: memref<2x1x32xf32, #tpu.memory_space<vmem>>, %arg11: memref<2x1x32xf32, #tpu.memory_space<vmem>>, %arg12: memref<2x32x64xf32, #tpu.memory_space<vmem>>, %arg13: memref<2x1x64xf32, #tpu.memory_space<vmem>>, %arg14: memref<2x64x32xf32, #tpu.memory_space<vmem>>, %arg15: memref<2x1x32xf32, #tpu.memory_space<vmem>>, %arg16: memref<1x32xf32, #tpu.memory_space<vmem>>, %arg17: memref<1x32xf32, #tpu.memory_space<vmem>>, %arg18: memref<32x128xf32, #tpu.memory_space<vmem>>, %arg19: memref<1x128xf32, #tpu.memory_space<vmem>>, %arg20: memref<1x1x128xf32, #tpu.memory_space<vmem>>, %arg21: memref<5x32xf32, #tpu.memory_space<vmem>>) attributes {dimension_semantics = [#tpu.dimension_semantics<parallel>], iteration_bounds = array<i64: 2>, scalar_prefetch = 0 : i64, scratch_operands = 1 : i64, tpu.core_type = #tpu.core_type<tc>, window_params = [{transform_indices = @transform_0, window_bounds = array<i64: 1, 1, 128>}, {pipeline_mode = #tpu.pipeline_mode<synchronous>, transform_indices = @transform_1, window_bounds = array<i64: 4, 128, 32>}, {pipeline_mode = #tpu.pipeline_mode<synchronous>, transform_indices = @transform_2, window_bounds = array<i64: 5, 32>}, {pipeline_mode = #tpu.pipeline_mode<synchronous>, transform_indices = @transform_3, window_bounds = array<i64: 2, 1, 32>}, {pipeline_mode = #tpu.pipeline_mode<synchronous>, transform_indices = @transform_4, window_bounds = array<i64: 2, 1, 32>}, {pipeline_mode = #tpu.pipeline_mode<synchronous>, transform_indices = @transform_5, window_bounds = array<i64: 2, 32, 96>}, {pipeline_mode = #tpu.pipeline_mode<synchronous>, transform_indices = @transform_6, window_bounds = array<i64: 2, 1, 96>}, {pipeline_mode = #tpu.pipeline_mode<synchronous>, transform_indices = @transform_7, window_bounds = array<i64: 2, 4, 8, 32>}, {pipeline_mode = #tpu.pipeline_mode<synchronous>, transform_indices = @transform_8, window_bounds = array<i64: 2, 1, 32>}, {pipeline_mode = #tpu.pipeline_mode<synchronous>, transform_indices = @transform_9, window_bounds = array<i64: 2, 1, 32>}, {pipeline_mode = #tpu.pipeline_mode<synchronous>, transform_indices = @transform_10, window_bounds = array<i64: 2, 1, 32>}, {pipeline_mode = #tpu.pipeline_mode<synchronous>, transform_indices = @transform_11, window_bounds = array<i64: 2, 32, 64>}, {pipeline_mode = #tpu.pipeline_mode<synchronous>, transform_indices = @transform_12, window_bounds = array<i64: 2, 1, 64>}, {pipeline_mode = #tpu.pipeline_mode<synchronous>, transform_indices = @transform_13, window_bounds = array<i64: 2, 64, 32>}, {pipeline_mode = #tpu.pipeline_mode<synchronous>, transform_indices = @transform_14, window_bounds = array<i64: 2, 1, 32>}, {pipeline_mode = #tpu.pipeline_mode<synchronous>, transform_indices = @transform_15, window_bounds = array<i64: 1, 32>}, {pipeline_mode = #tpu.pipeline_mode<synchronous>, transform_indices = @transform_16, window_bounds = array<i64: 1, 32>}, {pipeline_mode = #tpu.pipeline_mode<synchronous>, transform_indices = @transform_17, window_bounds = array<i64: 32, 128>}, {pipeline_mode = #tpu.pipeline_mode<synchronous>, transform_indices = @transform_18, window_bounds = array<i64: 1, 128>}, {transform_indices = @transform_19, window_bounds = array<i64: 1, 1, 128>}]} {
    %c0 = arith.constant 0 : index
    %c0_0 = arith.constant 0 : index
    %c0_1 = arith.constant 0 : index
    %0 = vector.load %arg1[%c0, %c0_0, %c0_1] : memref<1x1x128xf32, #tpu.memory_space<vmem>>, vector<1x1x128xf32>
    %1 = vector.shape_cast %0 : vector<1x1x128xf32> to vector<1x128xf32>
    %cst = arith.constant 0.000000e+00 : f32
    %2 = vector.broadcast %cst : f32 to vector<1x32xf32>
    %c0_2 = arith.constant 0 : index
    %c0_3 = arith.constant 0 : index
    %3 = vector.load %arg21[%c0_2, %c0_3] : memref<5x32xf32, #tpu.memory_space<vmem>>, vector<1x32xf32>
    tpu.vector_store %arg21[%c0_2, %c0_3], %2 {strides = array<i32>} : memref<5x32xf32, #tpu.memory_space<vmem>>, vector<1x32xf32>,
    %c0_4 = arith.constant 0 : index
    %c0_5 = arith.constant 0 : index
    %c0_6 = arith.constant 0 : index
    %4 = vector.load %arg2[%c0_4, %c0_5, %c0_6] : memref<4x128x32xf32, #tpu.memory_space<vmem>>, vector<1x128x32xf32>
    %5 = vector.shape_cast %4 : vector<1x128x32xf32> to vector<128x32xf32>
    %cst_7 = arith.constant dense<0.000000e+00> : vector<1x32xf32>
    %6 = tpu.matmul %1, %5, %cst_7 {dimension_numbers = #tpu.dot_dimension_numbers<[1], [0], [0], [1], [0, 0, 1, 1], [], []>} : vector<1x128xf32>, vector<128x32xf32>, vector<1x32xf32> -> vector<1x32xf32>
    %c1 = arith.constant 1 : index
    %c0_8 = arith.constant 0 : index
    %7 = vector.load %arg21[%c1, %c0_8] : memref<5x32xf32, #tpu.memory_space<vmem>>, vector<1x32xf32>
    tpu.vector_store %arg21[%c1, %c0_8], %6 {strides = array<i32>} : memref<5x32xf32, #tpu.memory_space<vmem>>, vector<1x32xf32>,
    %c1_9 = arith.constant 1 : index
    %c0_10 = arith.constant 0 : index
    %c0_11 = arith.constant 0 : index
    %8 = vector.load %arg2[%c1_9, %c0_10, %c0_11] : memref<4x128x32xf32, #tpu.memory_space<vmem>>, vector<1x128x32xf32>
    %9 = vector.shape_cast %8 : vector<1x128x32xf32> to vector<128x32xf32>
    %cst_12 = arith.constant dense<0.000000e+00> : vector<1x32xf32>
    %10 = tpu.matmul %1, %9, %cst_12 {dimension_numbers = #tpu.dot_dimension_numbers<[1], [0], [0], [1], [0, 0, 1, 1], [], []>} : vector<1x128xf32>, vector<128x32xf32>, vector<1x32xf32> -> vector<1x32xf32>
    %c2 = arith.constant 2 : index
    %c0_13 = arith.constant 0 : index
    %11 = vector.load %arg21[%c2, %c0_13] : memref<5x32xf32, #tpu.memory_space<vmem>>, vector<1x32xf32>
    tpu.vector_store %arg21[%c2, %c0_13], %10 {strides = array<i32>} : memref<5x32xf32, #tpu.memory_space<vmem>>, vector<1x32xf32>,
    %c2_14 = arith.constant 2 : index
    %c0_15 = arith.constant 0 : index
    %c0_16 = arith.constant 0 : index
    %12 = vector.load %arg2[%c2_14, %c0_15, %c0_16] : memref<4x128x32xf32, #tpu.memory_space<vmem>>, vector<1x128x32xf32>
    %13 = vector.shape_cast %12 : vector<1x128x32xf32> to vector<128x32xf32>
    %cst_17 = arith.constant dense<0.000000e+00> : vector<1x32xf32>
    %14 = tpu.matmul %1, %13, %cst_17 {dimension_numbers = #tpu.dot_dimension_numbers<[1], [0], [0], [1], [0, 0, 1, 1], [], []>} : vector<1x128xf32>, vector<128x32xf32>, vector<1x32xf32> -> vector<1x32xf32>
    %c3 = arith.constant 3 : index
    %c0_18 = arith.constant 0 : index
    %15 = vector.load %arg21[%c3, %c0_18] : memref<5x32xf32, #tpu.memory_space<vmem>>, vector<1x32xf32>
    tpu.vector_store %arg21[%c3, %c0_18], %14 {strides = array<i32>} : memref<5x32xf32, #tpu.memory_space<vmem>>, vector<1x32xf32>,
    %c3_19 = arith.constant 3 : index
    %c0_20 = arith.constant 0 : index
    %c0_21 = arith.constant 0 : index
    %16 = vector.load %arg2[%c3_19, %c0_20, %c0_21] : memref<4x128x32xf32, #tpu.memory_space<vmem>>, vector<1x128x32xf32>
    %17 = vector.shape_cast %16 : vector<1x128x32xf32> to vector<128x32xf32>
    %cst_22 = arith.constant dense<0.000000e+00> : vector<1x32xf32>
    %18 = tpu.matmul %1, %17, %cst_22 {dimension_numbers = #tpu.dot_dimension_numbers<[1], [0], [0], [1], [0, 0, 1, 1], [], []>} : vector<1x128xf32>, vector<128x32xf32>, vector<1x32xf32> -> vector<1x32xf32>
    %c4 = arith.constant 4 : index
    %c0_23 = arith.constant 0 : index
    %19 = vector.load %arg21[%c4, %c0_23] : memref<5x32xf32, #tpu.memory_space<vmem>>, vector<1x32xf32>
    tpu.vector_store %arg21[%c4, %c0_23], %18 {strides = array<i32>} : memref<5x32xf32, #tpu.memory_space<vmem>>, vector<1x32xf32>,
    %c0_24 = arith.constant 0 : index
    %c0_25 = arith.constant 0 : index
    %20 = vector.load %arg21[%c0_24, %c0_25] : memref<5x32xf32, #tpu.memory_space<vmem>>, vector<5x32xf32>
    %c0_26 = arith.constant 0 : index
    %c0_27 = arith.constant 0 : index
    %21 = vector.load %arg3[%c0_26, %c0_27] : memref<5x32xf32, #tpu.memory_space<vmem>>, vector<5x32xf32>
    %22 = arith.addf %20, %21 : vector<5x32xf32>
    %c0_28 = arith.constant 0 : index
    %c0_29 = arith.constant 0 : index
    %c0_30 = arith.constant 0 : index
    %23 = vector.load %arg4[%c0_28, %c0_29, %c0_30] : memref<2x1x32xf32, #tpu.memory_space<vmem>>, vector<1x1x32xf32>
    %24 = vector.shape_cast %23 : vector<1x1x32xf32> to vector<1x32xf32>
    %c0_31 = arith.constant 0 : index
    %c0_32 = arith.constant 0 : index
    %c0_33 = arith.constant 0 : index
    %25 = vector.load %arg5[%c0_31, %c0_32, %c0_33] : memref<2x1x32xf32, #tpu.memory_space<vmem>>, vector<1x1x32xf32>
    %26 = vector.shape_cast %25 : vector<1x1x32xf32> to vector<1x32xf32>
    %cst_34 = arith.constant dense<0.000000e+00> : vector<5xf32>
    %27 = vector.multi_reduction <add>, %22, %cst_34 [1] : vector<5x32xf32> to vector<5xf32>
    %28 = vector.shape_cast %27 : vector<5xf32> to vector<5x1xf32>
    %cst_35 = arith.constant 3.200000e+01 : f32
    %29 = vector.broadcast %cst_35 : f32 to vector<5x1xf32>
    %30 = arith.divf %28, %29 : vector<5x1xf32>
    %31 = vector.broadcast %30 : vector<5x1xf32> to vector<5x32xf32>
    %32 = arith.subf %22, %31 : vector<5x32xf32>
    %33 = arith.mulf %32, %32 : vector<5x32xf32>
    %cst_36 = arith.constant dense<0.000000e+00> : vector<5xf32>
    %34 = vector.multi_reduction <add>, %33, %cst_36 [1] : vector<5x32xf32> to vector<5xf32>
    %35 = vector.shape_cast %34 : vector<5xf32> to vector<5x1xf32>
    %cst_37 = arith.constant 3.200000e+01 : f32
    %36 = vector.broadcast %cst_37 : f32 to vector<5x1xf32>
    %37 = arith.divf %35, %36 : vector<5x1xf32>
    %cst_38 = arith.constant 9.99999997E-7 : f32
    %38 = vector.broadcast %cst_38 : f32 to vector<5x1xf32>
    %39 = arith.addf %37, %38 : vector<5x1xf32>
    %40 = math.rsqrt %39 : vector<5x1xf32>
    %41 = vector.broadcast %40 : vector<5x1xf32> to vector<5x32xf32>
    %42 = arith.mulf %32, %41 : vector<5x32xf32>
    %43 = vector.broadcast %24 : vector<1x32xf32> to vector<5x32xf32>
    %44 = arith.mulf %42, %43 : vector<5x32xf32>
    %45 = vector.broadcast %26 : vector<1x32xf32> to vector<5x32xf32>
    %46 = arith.addf %44, %45 : vector<5x32xf32>
    %c0_39 = arith.constant 0 : index
    %c0_40 = arith.constant 0 : index
    %c0_41 = arith.constant 0 : index
    %47 = vector.load %arg6[%c0_39, %c0_40, %c0_41] : memref<2x32x96xf32, #tpu.memory_space<vmem>>, vector<1x32x96xf32>
    %48 = vector.shape_cast %47 : vector<1x32x96xf32> to vector<32x96xf32>
    %cst_42 = arith.constant dense<0.000000e+00> : vector<5x96xf32>
    %49 = tpu.matmul %46, %48, %cst_42 {dimension_numbers = #tpu.dot_dimension_numbers<[1], [0], [0], [1], [0, 0, 1, 1], [], []>} : vector<5x32xf32>, vector<32x96xf32>, vector<5x96xf32> -> vector<5x96xf32>
    %c0_43 = arith.constant 0 : index
    %c0_44 = arith.constant 0 : index
    %c0_45 = arith.constant 0 : index
    %50 = vector.load %arg7[%c0_43, %c0_44, %c0_45] : memref<2x1x96xf32, #tpu.memory_space<vmem>>, vector<1x1x96xf32>
    %51 = vector.shape_cast %50 : vector<1x1x96xf32> to vector<1x96xf32>
    %52 = vector.broadcast %51 : vector<1x96xf32> to vector<5x96xf32>
    %53 = arith.addf %49, %52 : vector<5x96xf32>
    %cst_46 = arith.constant 0.000000e+00 : f32
    %54 = vector.broadcast %cst_46 : f32 to vector<5x32xf32>
    %55 = vector.extract_strided_slice %53 {offsets = [0, 0], sizes = [5, 8], strides = [1, 1]} : vector<5x96xf32> to vector<5x8xf32>
    %56 = vector.extract_strided_slice %53 {offsets = [0, 32], sizes = [5, 8], strides = [1, 1]} : vector<5x96xf32> to vector<5x8xf32>
    %57 = vector.extract_strided_slice %53 {offsets = [0, 64], sizes = [5, 8], strides = [1, 1]} : vector<5x96xf32> to vector<5x8xf32>
    %cst_47 = arith.constant dense<0.000000e+00> : vector<5x5xf32>
    %58 = tpu.matmul %55, %56, %cst_47 {dimension_numbers = #tpu.dot_dimension_numbers<[1], [1], [0], [0], [0, 0, 1, 0], [], []>} : vector<5x8xf32>, vector<5x8xf32>, vector<5x5xf32> -> vector<5x5xf32>
    %cst_48 = arith.constant 0.353553385 : f32
    %59 = vector.broadcast %cst_48 : f32 to vector<5x5xf32>
    %60 = arith.mulf %58, %59 : vector<5x5xf32>
    %cst_49 = arith.constant dense<0xFF800000> : vector<5xf32>
    %61 = vector.multi_reduction <maximumf>, %60, %cst_49 [1] : vector<5x5xf32> to vector<5xf32>
    %62 = vector.shape_cast %61 : vector<5xf32> to vector<5x1xf32>
    %63 = vector.broadcast %62 : vector<5x1xf32> to vector<5x5xf32>
    %64 = arith.subf %60, %63 : vector<5x5xf32>
    %65 = math.exp %64 : vector<5x5xf32>
    %cst_50 = arith.constant dense<0.000000e+00> : vector<5xf32>
    %66 = vector.multi_reduction <add>, %65, %cst_50 [1] : vector<5x5xf32> to vector<5xf32>
    %67 = vector.shape_cast %66 : vector<5xf32> to vector<5x1xf32>
    %68 = tpu.reciprocal %67 {approx = true} : vector<5x1xf32> -> vector<5x1xf32>
    %69 = vector.broadcast %68 : vector<5x1xf32> to vector<5x5xf32>
    %70 = arith.mulf %65, %69 : vector<5x5xf32>
    %cst_51 = arith.constant dense<0.000000e+00> : vector<5x8xf32>
    %71 = tpu.matmul %70, %57, %cst_51 {dimension_numbers = #tpu.dot_dimension_numbers<[1], [0], [0], [1], [0, 0, 1, 1], [], []>} : vector<5x5xf32>, vector<5x8xf32>, vector<5x8xf32> -> vector<5x8xf32>
    %c0_52 = arith.constant 0 : index
    %c0_53 = arith.constant 0 : index
    %c0_54 = arith.constant 0 : index
    %c0_55 = arith.constant 0 : index
    %72 = vector.load %arg8[%c0_52, %c0_53, %c0_54, %c0_55] : memref<2x4x8x32xf32, #tpu.memory_space<vmem>>, vector<1x1x8x32xf32>
    %73 = vector.shape_cast %72 : vector<1x1x8x32xf32> to vector<8x32xf32>
    %cst_56 = arith.constant dense<0.000000e+00> : vector<5x32xf32>
    %74 = tpu.matmul %71, %73, %cst_56 {dimension_numbers = #tpu.dot_dimension_numbers<[1], [0], [0], [1], [0, 0, 1, 1], [], []>} : vector<5x8xf32>, vector<8x32xf32>, vector<5x32xf32> -> vector<5x32xf32>
    %75 = arith.addf %54, %74 : vector<5x32xf32>
    %76 = vector.extract_strided_slice %53 {offsets = [0, 8], sizes = [5, 8], strides = [1, 1]} : vector<5x96xf32> to vector<5x8xf32>
    %77 = vector.extract_strided_slice %53 {offsets = [0, 40], sizes = [5, 8], strides = [1, 1]} : vector<5x96xf32> to vector<5x8xf32>
    %78 = vector.extract_strided_slice %53 {offsets = [0, 72], sizes = [5, 8], strides = [1, 1]} : vector<5x96xf32> to vector<5x8xf32>
    %cst_57 = arith.constant dense<0.000000e+00> : vector<5x5xf32>
    %79 = tpu.matmul %76, %77, %cst_57 {dimension_numbers = #tpu.dot_dimension_numbers<[1], [1], [0], [0], [0, 0, 1, 0], [], []>} : vector<5x8xf32>, vector<5x8xf32>, vector<5x5xf32> -> vector<5x5xf32>
    %cst_58 = arith.constant 0.353553385 : f32
    %80 = vector.broadcast %cst_58 : f32 to vector<5x5xf32>
    %81 = arith.mulf %79, %80 : vector<5x5xf32>
    %cst_59 = arith.constant dense<0xFF800000> : vector<5xf32>
    %82 = vector.multi_reduction <maximumf>, %81, %cst_59 [1] : vector<5x5xf32> to vector<5xf32>
    %83 = vector.shape_cast %82 : vector<5xf32> to vector<5x1xf32>
    %84 = vector.broadcast %83 : vector<5x1xf32> to vector<5x5xf32>
    %85 = arith.subf %81, %84 : vector<5x5xf32>
    %86 = math.exp %85 : vector<5x5xf32>
    %cst_60 = arith.constant dense<0.000000e+00> : vector<5xf32>
    %87 = vector.multi_reduction <add>, %86, %cst_60 [1] : vector<5x5xf32> to vector<5xf32>
    %88 = vector.shape_cast %87 : vector<5xf32> to vector<5x1xf32>
    %89 = tpu.reciprocal %88 {approx = true} : vector<5x1xf32> -> vector<5x1xf32>
    %90 = vector.broadcast %89 : vector<5x1xf32> to vector<5x5xf32>
    %91 = arith.mulf %86, %90 : vector<5x5xf32>
    %cst_61 = arith.constant dense<0.000000e+00> : vector<5x8xf32>
    %92 = tpu.matmul %91, %78, %cst_61 {dimension_numbers = #tpu.dot_dimension_numbers<[1], [0], [0], [1], [0, 0, 1, 1], [], []>} : vector<5x5xf32>, vector<5x8xf32>, vector<5x8xf32> -> vector<5x8xf32>
    %c0_62 = arith.constant 0 : index
    %c1_63 = arith.constant 1 : index
    %c0_64 = arith.constant 0 : index
    %c0_65 = arith.constant 0 : index
    %93 = vector.load %arg8[%c0_62, %c1_63, %c0_64, %c0_65] : memref<2x4x8x32xf32, #tpu.memory_space<vmem>>, vector<1x1x8x32xf32>
    %94 = vector.shape_cast %93 : vector<1x1x8x32xf32> to vector<8x32xf32>
    %cst_66 = arith.constant dense<0.000000e+00> : vector<5x32xf32>
    %95 = tpu.matmul %92, %94, %cst_66 {dimension_numbers = #tpu.dot_dimension_numbers<[1], [0], [0], [1], [0, 0, 1, 1], [], []>} : vector<5x8xf32>, vector<8x32xf32>, vector<5x32xf32> -> vector<5x32xf32>
    %96 = arith.addf %75, %95 : vector<5x32xf32>
    %97 = vector.extract_strided_slice %53 {offsets = [0, 16], sizes = [5, 8], strides = [1, 1]} : vector<5x96xf32> to vector<5x8xf32>
    %98 = vector.extract_strided_slice %53 {offsets = [0, 48], sizes = [5, 8], strides = [1, 1]} : vector<5x96xf32> to vector<5x8xf32>
    %99 = vector.extract_strided_slice %53 {offsets = [0, 80], sizes = [5, 8], strides = [1, 1]} : vector<5x96xf32> to vector<5x8xf32>
    %cst_67 = arith.constant dense<0.000000e+00> : vector<5x5xf32>
    %100 = tpu.matmul %97, %98, %cst_67 {dimension_numbers = #tpu.dot_dimension_numbers<[1], [1], [0], [0], [0, 0, 1, 0], [], []>} : vector<5x8xf32>, vector<5x8xf32>, vector<5x5xf32> -> vector<5x5xf32>
    %cst_68 = arith.constant 0.353553385 : f32
    %101 = vector.broadcast %cst_68 : f32 to vector<5x5xf32>
    %102 = arith.mulf %100, %101 : vector<5x5xf32>
    %cst_69 = arith.constant dense<0xFF800000> : vector<5xf32>
    %103 = vector.multi_reduction <maximumf>, %102, %cst_69 [1] : vector<5x5xf32> to vector<5xf32>
    %104 = vector.shape_cast %103 : vector<5xf32> to vector<5x1xf32>
    %105 = vector.broadcast %104 : vector<5x1xf32> to vector<5x5xf32>
    %106 = arith.subf %102, %105 : vector<5x5xf32>
    %107 = math.exp %106 : vector<5x5xf32>
    %cst_70 = arith.constant dense<0.000000e+00> : vector<5xf32>
    %108 = vector.multi_reduction <add>, %107, %cst_70 [1] : vector<5x5xf32> to vector<5xf32>
    %109 = vector.shape_cast %108 : vector<5xf32> to vector<5x1xf32>
    %110 = tpu.reciprocal %109 {approx = true} : vector<5x1xf32> -> vector<5x1xf32>
    %111 = vector.broadcast %110 : vector<5x1xf32> to vector<5x5xf32>
    %112 = arith.mulf %107, %111 : vector<5x5xf32>
    %cst_71 = arith.constant dense<0.000000e+00> : vector<5x8xf32>
    %113 = tpu.matmul %112, %99, %cst_71 {dimension_numbers = #tpu.dot_dimension_numbers<[1], [0], [0], [1], [0, 0, 1, 1], [], []>} : vector<5x5xf32>, vector<5x8xf32>, vector<5x8xf32> -> vector<5x8xf32>
    %c0_72 = arith.constant 0 : index
    %c2_73 = arith.constant 2 : index
    %c0_74 = arith.constant 0 : index
    %c0_75 = arith.constant 0 : index
    %114 = vector.load %arg8[%c0_72, %c2_73, %c0_74, %c0_75] : memref<2x4x8x32xf32, #tpu.memory_space<vmem>>, vector<1x1x8x32xf32>
    %115 = vector.shape_cast %114 : vector<1x1x8x32xf32> to vector<8x32xf32>
    %cst_76 = arith.constant dense<0.000000e+00> : vector<5x32xf32>
    %116 = tpu.matmul %113, %115, %cst_76 {dimension_numbers = #tpu.dot_dimension_numbers<[1], [0], [0], [1], [0, 0, 1, 1], [], []>} : vector<5x8xf32>, vector<8x32xf32>, vector<5x32xf32> -> vector<5x32xf32>
    %117 = arith.addf %96, %116 : vector<5x32xf32>
    %118 = vector.extract_strided_slice %53 {offsets = [0, 24], sizes = [5, 8], strides = [1, 1]} : vector<5x96xf32> to vector<5x8xf32>
    %119 = vector.extract_strided_slice %53 {offsets = [0, 56], sizes = [5, 8], strides = [1, 1]} : vector<5x96xf32> to vector<5x8xf32>
    %120 = vector.extract_strided_slice %53 {offsets = [0, 88], sizes = [5, 8], strides = [1, 1]} : vector<5x96xf32> to vector<5x8xf32>
    %cst_77 = arith.constant dense<0.000000e+00> : vector<5x5xf32>
    %121 = tpu.matmul %118, %119, %cst_77 {dimension_numbers = #tpu.dot_dimension_numbers<[1], [1], [0], [0], [0, 0, 1, 0], [], []>} : vector<5x8xf32>, vector<5x8xf32>, vector<5x5xf32> -> vector<5x5xf32>
    %cst_78 = arith.constant 0.353553385 : f32
    %122 = vector.broadcast %cst_78 : f32 to vector<5x5xf32>
    %123 = arith.mulf %121, %122 : vector<5x5xf32>
    %cst_79 = arith.constant dense<0xFF800000> : vector<5xf32>
    %124 = vector.multi_reduction <maximumf>, %123, %cst_79 [1] : vector<5x5xf32> to vector<5xf32>
    %125 = vector.shape_cast %124 : vector<5xf32> to vector<5x1xf32>
    %126 = vector.broadcast %125 : vector<5x1xf32> to vector<5x5xf32>
    %127 = arith.subf %123, %126 : vector<5x5xf32>
    %128 = math.exp %127 : vector<5x5xf32>
    %cst_80 = arith.constant dense<0.000000e+00> : vector<5xf32>
    %129 = vector.multi_reduction <add>, %128, %cst_80 [1] : vector<5x5xf32> to vector<5xf32>
    %130 = vector.shape_cast %129 : vector<5xf32> to vector<5x1xf32>
    %131 = tpu.reciprocal %130 {approx = true} : vector<5x1xf32> -> vector<5x1xf32>
    %132 = vector.broadcast %131 : vector<5x1xf32> to vector<5x5xf32>
    %133 = arith.mulf %128, %132 : vector<5x5xf32>
    %cst_81 = arith.constant dense<0.000000e+00> : vector<5x8xf32>
    %134 = tpu.matmul %133, %120, %cst_81 {dimension_numbers = #tpu.dot_dimension_numbers<[1], [0], [0], [1], [0, 0, 1, 1], [], []>} : vector<5x5xf32>, vector<5x8xf32>, vector<5x8xf32> -> vector<5x8xf32>
    %c0_82 = arith.constant 0 : index
    %c3_83 = arith.constant 3 : index
    %c0_84 = arith.constant 0 : index
    %c0_85 = arith.constant 0 : index
    %135 = vector.load %arg8[%c0_82, %c3_83, %c0_84, %c0_85] : memref<2x4x8x32xf32, #tpu.memory_space<vmem>>, vector<1x1x8x32xf32>
    %136 = vector.shape_cast %135 : vector<1x1x8x32xf32> to vector<8x32xf32>
    %cst_86 = arith.constant dense<0.000000e+00> : vector<5x32xf32>
    %137 = tpu.matmul %134, %136, %cst_86 {dimension_numbers = #tpu.dot_dimension_numbers<[1], [0], [0], [1], [0, 0, 1, 1], [], []>} : vector<5x8xf32>, vector<8x32xf32>, vector<5x32xf32> -> vector<5x32xf32>
    %138 = arith.addf %117, %137 : vector<5x32xf32>
    %139 = arith.addf %22, %138 : vector<5x32xf32>
    %c0_87 = arith.constant 0 : index
    %c0_88 = arith.constant 0 : index
    %c0_89 = arith.constant 0 : index
    %140 = vector.load %arg9[%c0_87, %c0_88, %c0_89] : memref<2x1x32xf32, #tpu.memory_space<vmem>>, vector<1x1x32xf32>
    %141 = vector.shape_cast %140 : vector<1x1x32xf32> to vector<1x32xf32>
    %142 = vector.broadcast %141 : vector<1x32xf32> to vector<5x32xf32>
    %143 = arith.addf %139, %142 : vector<5x32xf32>
    %c0_90 = arith.constant 0 : index
    %c0_91 = arith.constant 0 : index
    %c0_92 = arith.constant 0 : index
    %144 = vector.load %arg10[%c0_90, %c0_91, %c0_92] : memref<2x1x32xf32, #tpu.memory_space<vmem>>, vector<1x1x32xf32>
    %145 = vector.shape_cast %144 : vector<1x1x32xf32> to vector<1x32xf32>
    %c0_93 = arith.constant 0 : index
    %c0_94 = arith.constant 0 : index
    %c0_95 = arith.constant 0 : index
    %146 = vector.load %arg11[%c0_93, %c0_94, %c0_95] : memref<2x1x32xf32, #tpu.memory_space<vmem>>, vector<1x1x32xf32>
    %147 = vector.shape_cast %146 : vector<1x1x32xf32> to vector<1x32xf32>
    %cst_96 = arith.constant dense<0.000000e+00> : vector<5xf32>
    %148 = vector.multi_reduction <add>, %143, %cst_96 [1] : vector<5x32xf32> to vector<5xf32>
    %149 = vector.shape_cast %148 : vector<5xf32> to vector<5x1xf32>
    %cst_97 = arith.constant 3.200000e+01 : f32
    %150 = vector.broadcast %cst_97 : f32 to vector<5x1xf32>
    %151 = arith.divf %149, %150 : vector<5x1xf32>
    %152 = vector.broadcast %151 : vector<5x1xf32> to vector<5x32xf32>
    %153 = arith.subf %143, %152 : vector<5x32xf32>
    %154 = arith.mulf %153, %153 : vector<5x32xf32>
    %cst_98 = arith.constant dense<0.000000e+00> : vector<5xf32>
    %155 = vector.multi_reduction <add>, %154, %cst_98 [1] : vector<5x32xf32> to vector<5xf32>
    %156 = vector.shape_cast %155 : vector<5xf32> to vector<5x1xf32>
    %cst_99 = arith.constant 3.200000e+01 : f32
    %157 = vector.broadcast %cst_99 : f32 to vector<5x1xf32>
    %158 = arith.divf %156, %157 : vector<5x1xf32>
    %cst_100 = arith.constant 9.99999997E-7 : f32
    %159 = vector.broadcast %cst_100 : f32 to vector<5x1xf32>
    %160 = arith.addf %158, %159 : vector<5x1xf32>
    %161 = math.rsqrt %160 : vector<5x1xf32>
    %162 = vector.broadcast %161 : vector<5x1xf32> to vector<5x32xf32>
    %163 = arith.mulf %153, %162 : vector<5x32xf32>
    %164 = vector.broadcast %145 : vector<1x32xf32> to vector<5x32xf32>
    %165 = arith.mulf %163, %164 : vector<5x32xf32>
    %166 = vector.broadcast %147 : vector<1x32xf32> to vector<5x32xf32>
    %167 = arith.addf %165, %166 : vector<5x32xf32>
    %c0_101 = arith.constant 0 : index
    %c0_102 = arith.constant 0 : index
    %c0_103 = arith.constant 0 : index
    %168 = vector.load %arg12[%c0_101, %c0_102, %c0_103] : memref<2x32x64xf32, #tpu.memory_space<vmem>>, vector<1x32x64xf32>
    %169 = vector.shape_cast %168 : vector<1x32x64xf32> to vector<32x64xf32>
    %cst_104 = arith.constant dense<0.000000e+00> : vector<5x64xf32>
    %170 = tpu.matmul %167, %169, %cst_104 {dimension_numbers = #tpu.dot_dimension_numbers<[1], [0], [0], [1], [0, 0, 1, 1], [], []>} : vector<5x32xf32>, vector<32x64xf32>, vector<5x64xf32> -> vector<5x64xf32>
    %c0_105 = arith.constant 0 : index
    %c0_106 = arith.constant 0 : index
    %c0_107 = arith.constant 0 : index
    %171 = vector.load %arg13[%c0_105, %c0_106, %c0_107] : memref<2x1x64xf32, #tpu.memory_space<vmem>>, vector<1x1x64xf32>
    %172 = vector.shape_cast %171 : vector<1x1x64xf32> to vector<1x64xf32>
    %173 = vector.broadcast %172 : vector<1x64xf32> to vector<5x64xf32>
    %174 = arith.addf %170, %173 : vector<5x64xf32>
    %cst_108 = arith.constant 5.000000e-01 : f32
    %175 = vector.broadcast %cst_108 : f32 to vector<5x64xf32>
    %176 = arith.mulf %175, %174 : vector<5x64xf32>
    %cst_109 = arith.constant 0.707106769 : f32
    %177 = vector.broadcast %cst_109 : f32 to vector<5x64xf32>
    %178 = arith.mulf %174, %177 : vector<5x64xf32>
    %cst_110 = arith.constant 0.000000e+00 : f32
    %179 = vector.broadcast %cst_110 : f32 to vector<5x64xf32>
    %180 = arith.cmpf oge, %178, %179 : vector<5x64xf32>
    %cst_111 = arith.constant 1.000000e+00 : f32
    %cst_112 = arith.constant -1.000000e+00 : f32
    %181 = vector.broadcast %cst_111 : f32 to vector<5x64xf32>
    %182 = vector.broadcast %cst_112 : f32 to vector<5x64xf32>
    %183 = arith.select %180, %181, %182 : vector<5x64xi1>, vector<5x64xf32>
    %184 = math.absf %178 : vector<5x64xf32>
    %cst_113 = arith.constant 0.327591091 : f32
    %185 = vector.broadcast %cst_113 : f32 to vector<5x64xf32>
    %186 = arith.mulf %185, %184 : vector<5x64xf32>
    %cst_114 = arith.constant 1.000000e+00 : f32
    %187 = vector.broadcast %cst_114 : f32 to vector<5x64xf32>
    %188 = arith.addf %187, %186 : vector<5x64xf32>
    %cst_115 = arith.constant 1.000000e+00 : f32
    %189 = vector.broadcast %cst_115 : f32 to vector<5x64xf32>
    %190 = arith.divf %189, %188 : vector<5x64xf32>
    %cst_116 = arith.constant 1.06140542 : f32
    %191 = vector.broadcast %cst_116 : f32 to vector<5x64xf32>
    %192 = arith.mulf %191, %190 : vector<5x64xf32>
    %cst_117 = arith.constant -1.45315206 : f32
    %193 = vector.broadcast %cst_117 : f32 to vector<5x64xf32>
    %194 = arith.addf %192, %193 : vector<5x64xf32>
    %195 = arith.mulf %194, %190 : vector<5x64xf32>
    %cst_118 = arith.constant 1.42141378 : f32
    %196 = vector.broadcast %cst_118 : f32 to vector<5x64xf32>
    %197 = arith.addf %195, %196 : vector<5x64xf32>
    %198 = arith.mulf %197, %190 : vector<5x64xf32>
    %cst_119 = arith.constant -0.284496725 : f32
    %199 = vector.broadcast %cst_119 : f32 to vector<5x64xf32>
    %200 = arith.addf %198, %199 : vector<5x64xf32>
    %201 = arith.mulf %200, %190 : vector<5x64xf32>
    %cst_120 = arith.constant 0.254829586 : f32
    %202 = vector.broadcast %cst_120 : f32 to vector<5x64xf32>
    %203 = arith.addf %201, %202 : vector<5x64xf32>
    %204 = arith.mulf %203, %190 : vector<5x64xf32>
    %cst_121 = arith.constant 0.000000e+00 : f32
    %205 = vector.broadcast %cst_121 : f32 to vector<5x64xf32>
    %206 = arith.subf %205, %184 : vector<5x64xf32>
    %207 = arith.mulf %206, %184 : vector<5x64xf32>
    %208 = math.exp %207 : vector<5x64xf32>
    %209 = arith.mulf %204, %208 : vector<5x64xf32>
    %cst_122 = arith.constant 1.000000e+00 : f32
    %210 = vector.broadcast %cst_122 : f32 to vector<5x64xf32>
    %211 = arith.subf %210, %209 : vector<5x64xf32>
    %212 = arith.mulf %183, %211 : vector<5x64xf32>
    %cst_123 = arith.constant 1.000000e+00 : f32
    %213 = vector.broadcast %cst_123 : f32 to vector<5x64xf32>
    %214 = arith.addf %213, %212 : vector<5x64xf32>
    %215 = arith.mulf %176, %214 : vector<5x64xf32>
    %c0_124 = arith.constant 0 : index
    %c0_125 = arith.constant 0 : index
    %c0_126 = arith.constant 0 : index
    %216 = vector.load %arg14[%c0_124, %c0_125, %c0_126] : memref<2x64x32xf32, #tpu.memory_space<vmem>>, vector<1x64x32xf32>
    %217 = vector.shape_cast %216 : vector<1x64x32xf32> to vector<64x32xf32>
    %cst_127 = arith.constant dense<0.000000e+00> : vector<5x32xf32>
    %218 = tpu.matmul %215, %217, %cst_127 {dimension_numbers = #tpu.dot_dimension_numbers<[1], [0], [0], [1], [0, 0, 1, 1], [], []>} : vector<5x64xf32>, vector<64x32xf32>, vector<5x32xf32> -> vector<5x32xf32>
    %219 = arith.addf %143, %218 : vector<5x32xf32>
    %c0_128 = arith.constant 0 : index
    %c0_129 = arith.constant 0 : index
    %c0_130 = arith.constant 0 : index
    %220 = vector.load %arg15[%c0_128, %c0_129, %c0_130] : memref<2x1x32xf32, #tpu.memory_space<vmem>>, vector<1x1x32xf32>
    %221 = vector.shape_cast %220 : vector<1x1x32xf32> to vector<1x32xf32>
    %222 = vector.broadcast %221 : vector<1x32xf32> to vector<5x32xf32>
    %223 = arith.addf %219, %222 : vector<5x32xf32>
    %c1_131 = arith.constant 1 : index
    %c0_132 = arith.constant 0 : index
    %c0_133 = arith.constant 0 : index
    %224 = vector.load %arg4[%c1_131, %c0_132, %c0_133] : memref<2x1x32xf32, #tpu.memory_space<vmem>>, vector<1x1x32xf32>
    %225 = vector.shape_cast %224 : vector<1x1x32xf32> to vector<1x32xf32>
    %c1_134 = arith.constant 1 : index
    %c0_135 = arith.constant 0 : index
    %c0_136 = arith.constant 0 : index
    %226 = vector.load %arg5[%c1_134, %c0_135, %c0_136] : memref<2x1x32xf32, #tpu.memory_space<vmem>>, vector<1x1x32xf32>
    %227 = vector.shape_cast %226 : vector<1x1x32xf32> to vector<1x32xf32>
    %cst_137 = arith.constant dense<0.000000e+00> : vector<5xf32>
    %228 = vector.multi_reduction <add>, %223, %cst_137 [1] : vector<5x32xf32> to vector<5xf32>
    %229 = vector.shape_cast %228 : vector<5xf32> to vector<5x1xf32>
    %cst_138 = arith.constant 3.200000e+01 : f32
    %230 = vector.broadcast %cst_138 : f32 to vector<5x1xf32>
    %231 = arith.divf %229, %230 : vector<5x1xf32>
    %232 = vector.broadcast %231 : vector<5x1xf32> to vector<5x32xf32>
    %233 = arith.subf %223, %232 : vector<5x32xf32>
    %234 = arith.mulf %233, %233 : vector<5x32xf32>
    %cst_139 = arith.constant dense<0.000000e+00> : vector<5xf32>
    %235 = vector.multi_reduction <add>, %234, %cst_139 [1] : vector<5x32xf32> to vector<5xf32>
    %236 = vector.shape_cast %235 : vector<5xf32> to vector<5x1xf32>
    %cst_140 = arith.constant 3.200000e+01 : f32
    %237 = vector.broadcast %cst_140 : f32 to vector<5x1xf32>
    %238 = arith.divf %236, %237 : vector<5x1xf32>
    %cst_141 = arith.constant 9.99999997E-7 : f32
    %239 = vector.broadcast %cst_141 : f32 to vector<5x1xf32>
    %240 = arith.addf %238, %239 : vector<5x1xf32>
    %241 = math.rsqrt %240 : vector<5x1xf32>
    %242 = vector.broadcast %241 : vector<5x1xf32> to vector<5x32xf32>
    %243 = arith.mulf %233, %242 : vector<5x32xf32>
    %244 = vector.broadcast %225 : vector<1x32xf32> to vector<5x32xf32>
    %245 = arith.mulf %243, %244 : vector<5x32xf32>
    %246 = vector.broadcast %227 : vector<1x32xf32> to vector<5x32xf32>
    %247 = arith.addf %245, %246 : vector<5x32xf32>
    %c1_142 = arith.constant 1 : index
    %c0_143 = arith.constant 0 : index
    %c0_144 = arith.constant 0 : index
    %248 = vector.load %arg6[%c1_142, %c0_143, %c0_144] : memref<2x32x96xf32, #tpu.memory_space<vmem>>, vector<1x32x96xf32>
    %249 = vector.shape_cast %248 : vector<1x32x96xf32> to vector<32x96xf32>
    %cst_145 = arith.constant dense<0.000000e+00> : vector<5x96xf32>
    %250 = tpu.matmul %247, %249, %cst_145 {dimension_numbers = #tpu.dot_dimension_numbers<[1], [0], [0], [1], [0, 0, 1, 1], [], []>} : vector<5x32xf32>, vector<32x96xf32>, vector<5x96xf32> -> vector<5x96xf32>
    %c1_146 = arith.constant 1 : index
    %c0_147 = arith.constant 0 : index
    %c0_148 = arith.constant 0 : index
    %251 = vector.load %arg7[%c1_146, %c0_147, %c0_148] : memref<2x1x96xf32, #tpu.memory_space<vmem>>, vector<1x1x96xf32>
    %252 = vector.shape_cast %251 : vector<1x1x96xf32> to vector<1x96xf32>
    %253 = vector.broadcast %252 : vector<1x96xf32> to vector<5x96xf32>
    %254 = arith.addf %250, %253 : vector<5x96xf32>
    %cst_149 = arith.constant 0.000000e+00 : f32
    %255 = vector.broadcast %cst_149 : f32 to vector<5x32xf32>
    %256 = vector.extract_strided_slice %254 {offsets = [0, 0], sizes = [5, 8], strides = [1, 1]} : vector<5x96xf32> to vector<5x8xf32>
    %257 = vector.extract_strided_slice %254 {offsets = [0, 32], sizes = [5, 8], strides = [1, 1]} : vector<5x96xf32> to vector<5x8xf32>
    %258 = vector.extract_strided_slice %254 {offsets = [0, 64], sizes = [5, 8], strides = [1, 1]} : vector<5x96xf32> to vector<5x8xf32>
    %cst_150 = arith.constant dense<0.000000e+00> : vector<5x5xf32>
    %259 = tpu.matmul %256, %257, %cst_150 {dimension_numbers = #tpu.dot_dimension_numbers<[1], [1], [0], [0], [0, 0, 1, 0], [], []>} : vector<5x8xf32>, vector<5x8xf32>, vector<5x5xf32> -> vector<5x5xf32>
    %cst_151 = arith.constant 0.353553385 : f32
    %260 = vector.broadcast %cst_151 : f32 to vector<5x5xf32>
    %261 = arith.mulf %259, %260 : vector<5x5xf32>
    %cst_152 = arith.constant dense<0xFF800000> : vector<5xf32>
    %262 = vector.multi_reduction <maximumf>, %261, %cst_152 [1] : vector<5x5xf32> to vector<5xf32>
    %263 = vector.shape_cast %262 : vector<5xf32> to vector<5x1xf32>
    %264 = vector.broadcast %263 : vector<5x1xf32> to vector<5x5xf32>
    %265 = arith.subf %261, %264 : vector<5x5xf32>
    %266 = math.exp %265 : vector<5x5xf32>
    %cst_153 = arith.constant dense<0.000000e+00> : vector<5xf32>
    %267 = vector.multi_reduction <add>, %266, %cst_153 [1] : vector<5x5xf32> to vector<5xf32>
    %268 = vector.shape_cast %267 : vector<5xf32> to vector<5x1xf32>
    %269 = tpu.reciprocal %268 {approx = true} : vector<5x1xf32> -> vector<5x1xf32>
    %270 = vector.broadcast %269 : vector<5x1xf32> to vector<5x5xf32>
    %271 = arith.mulf %266, %270 : vector<5x5xf32>
    %cst_154 = arith.constant dense<0.000000e+00> : vector<5x8xf32>
    %272 = tpu.matmul %271, %258, %cst_154 {dimension_numbers = #tpu.dot_dimension_numbers<[1], [0], [0], [1], [0, 0, 1, 1], [], []>} : vector<5x5xf32>, vector<5x8xf32>, vector<5x8xf32> -> vector<5x8xf32>
    %c1_155 = arith.constant 1 : index
    %c0_156 = arith.constant 0 : index
    %c0_157 = arith.constant 0 : index
    %c0_158 = arith.constant 0 : index
    %273 = vector.load %arg8[%c1_155, %c0_156, %c0_157, %c0_158] : memref<2x4x8x32xf32, #tpu.memory_space<vmem>>, vector<1x1x8x32xf32>
    %274 = vector.shape_cast %273 : vector<1x1x8x32xf32> to vector<8x32xf32>
    %cst_159 = arith.constant dense<0.000000e+00> : vector<5x32xf32>
    %275 = tpu.matmul %272, %274, %cst_159 {dimension_numbers = #tpu.dot_dimension_numbers<[1], [0], [0], [1], [0, 0, 1, 1], [], []>} : vector<5x8xf32>, vector<8x32xf32>, vector<5x32xf32> -> vector<5x32xf32>
    %276 = arith.addf %255, %275 : vector<5x32xf32>
    %277 = vector.extract_strided_slice %254 {offsets = [0, 8], sizes = [5, 8], strides = [1, 1]} : vector<5x96xf32> to vector<5x8xf32>
    %278 = vector.extract_strided_slice %254 {offsets = [0, 40], sizes = [5, 8], strides = [1, 1]} : vector<5x96xf32> to vector<5x8xf32>
    %279 = vector.extract_strided_slice %254 {offsets = [0, 72], sizes = [5, 8], strides = [1, 1]} : vector<5x96xf32> to vector<5x8xf32>
    %cst_160 = arith.constant dense<0.000000e+00> : vector<5x5xf32>
    %280 = tpu.matmul %277, %278, %cst_160 {dimension_numbers = #tpu.dot_dimension_numbers<[1], [1], [0], [0], [0, 0, 1, 0], [], []>} : vector<5x8xf32>, vector<5x8xf32>, vector<5x5xf32> -> vector<5x5xf32>
    %cst_161 = arith.constant 0.353553385 : f32
    %281 = vector.broadcast %cst_161 : f32 to vector<5x5xf32>
    %282 = arith.mulf %280, %281 : vector<5x5xf32>
    %cst_162 = arith.constant dense<0xFF800000> : vector<5xf32>
    %283 = vector.multi_reduction <maximumf>, %282, %cst_162 [1] : vector<5x5xf32> to vector<5xf32>
    %284 = vector.shape_cast %283 : vector<5xf32> to vector<5x1xf32>
    %285 = vector.broadcast %284 : vector<5x1xf32> to vector<5x5xf32>
    %286 = arith.subf %282, %285 : vector<5x5xf32>
    %287 = math.exp %286 : vector<5x5xf32>
    %cst_163 = arith.constant dense<0.000000e+00> : vector<5xf32>
    %288 = vector.multi_reduction <add>, %287, %cst_163 [1] : vector<5x5xf32> to vector<5xf32>
    %289 = vector.shape_cast %288 : vector<5xf32> to vector<5x1xf32>
    %290 = tpu.reciprocal %289 {approx = true} : vector<5x1xf32> -> vector<5x1xf32>
    %291 = vector.broadcast %290 : vector<5x1xf32> to vector<5x5xf32>
    %292 = arith.mulf %287, %291 : vector<5x5xf32>
    %cst_164 = arith.constant dense<0.000000e+00> : vector<5x8xf32>
    %293 = tpu.matmul %292, %279, %cst_164 {dimension_numbers = #tpu.dot_dimension_numbers<[1], [0], [0], [1], [0, 0, 1, 1], [], []>} : vector<5x5xf32>, vector<5x8xf32>, vector<5x8xf32> -> vector<5x8xf32>
    %c1_165 = arith.constant 1 : index
    %c1_166 = arith.constant 1 : index
    %c0_167 = arith.constant 0 : index
    %c0_168 = arith.constant 0 : index
    %294 = vector.load %arg8[%c1_165, %c1_166, %c0_167, %c0_168] : memref<2x4x8x32xf32, #tpu.memory_space<vmem>>, vector<1x1x8x32xf32>
    %295 = vector.shape_cast %294 : vector<1x1x8x32xf32> to vector<8x32xf32>
    %cst_169 = arith.constant dense<0.000000e+00> : vector<5x32xf32>
    %296 = tpu.matmul %293, %295, %cst_169 {dimension_numbers = #tpu.dot_dimension_numbers<[1], [0], [0], [1], [0, 0, 1, 1], [], []>} : vector<5x8xf32>, vector<8x32xf32>, vector<5x32xf32> -> vector<5x32xf32>
    %297 = arith.addf %276, %296 : vector<5x32xf32>
    %298 = vector.extract_strided_slice %254 {offsets = [0, 16], sizes = [5, 8], strides = [1, 1]} : vector<5x96xf32> to vector<5x8xf32>
    %299 = vector.extract_strided_slice %254 {offsets = [0, 48], sizes = [5, 8], strides = [1, 1]} : vector<5x96xf32> to vector<5x8xf32>
    %300 = vector.extract_strided_slice %254 {offsets = [0, 80], sizes = [5, 8], strides = [1, 1]} : vector<5x96xf32> to vector<5x8xf32>
    %cst_170 = arith.constant dense<0.000000e+00> : vector<5x5xf32>
    %301 = tpu.matmul %298, %299, %cst_170 {dimension_numbers = #tpu.dot_dimension_numbers<[1], [1], [0], [0], [0, 0, 1, 0], [], []>} : vector<5x8xf32>, vector<5x8xf32>, vector<5x5xf32> -> vector<5x5xf32>
    %cst_171 = arith.constant 0.353553385 : f32
    %302 = vector.broadcast %cst_171 : f32 to vector<5x5xf32>
    %303 = arith.mulf %301, %302 : vector<5x5xf32>
    %cst_172 = arith.constant dense<0xFF800000> : vector<5xf32>
    %304 = vector.multi_reduction <maximumf>, %303, %cst_172 [1] : vector<5x5xf32> to vector<5xf32>
    %305 = vector.shape_cast %304 : vector<5xf32> to vector<5x1xf32>
    %306 = vector.broadcast %305 : vector<5x1xf32> to vector<5x5xf32>
    %307 = arith.subf %303, %306 : vector<5x5xf32>
    %308 = math.exp %307 : vector<5x5xf32>
    %cst_173 = arith.constant dense<0.000000e+00> : vector<5xf32>
    %309 = vector.multi_reduction <add>, %308, %cst_173 [1] : vector<5x5xf32> to vector<5xf32>
    %310 = vector.shape_cast %309 : vector<5xf32> to vector<5x1xf32>
    %311 = tpu.reciprocal %310 {approx = true} : vector<5x1xf32> -> vector<5x1xf32>
    %312 = vector.broadcast %311 : vector<5x1xf32> to vector<5x5xf32>
    %313 = arith.mulf %308, %312 : vector<5x5xf32>
    %cst_174 = arith.constant dense<0.000000e+00> : vector<5x8xf32>
    %314 = tpu.matmul %313, %300, %cst_174 {dimension_numbers = #tpu.dot_dimension_numbers<[1], [0], [0], [1], [0, 0, 1, 1], [], []>} : vector<5x5xf32>, vector<5x8xf32>, vector<5x8xf32> -> vector<5x8xf32>
    %c1_175 = arith.constant 1 : index
    %c2_176 = arith.constant 2 : index
    %c0_177 = arith.constant 0 : index
    %c0_178 = arith.constant 0 : index
    %315 = vector.load %arg8[%c1_175, %c2_176, %c0_177, %c0_178] : memref<2x4x8x32xf32, #tpu.memory_space<vmem>>, vector<1x1x8x32xf32>
    %316 = vector.shape_cast %315 : vector<1x1x8x32xf32> to vector<8x32xf32>
    %cst_179 = arith.constant dense<0.000000e+00> : vector<5x32xf32>
    %317 = tpu.matmul %314, %316, %cst_179 {dimension_numbers = #tpu.dot_dimension_numbers<[1], [0], [0], [1], [0, 0, 1, 1], [], []>} : vector<5x8xf32>, vector<8x32xf32>, vector<5x32xf32> -> vector<5x32xf32>
    %318 = arith.addf %297, %317 : vector<5x32xf32>
    %319 = vector.extract_strided_slice %254 {offsets = [0, 24], sizes = [5, 8], strides = [1, 1]} : vector<5x96xf32> to vector<5x8xf32>
    %320 = vector.extract_strided_slice %254 {offsets = [0, 56], sizes = [5, 8], strides = [1, 1]} : vector<5x96xf32> to vector<5x8xf32>
    %321 = vector.extract_strided_slice %254 {offsets = [0, 88], sizes = [5, 8], strides = [1, 1]} : vector<5x96xf32> to vector<5x8xf32>
    %cst_180 = arith.constant dense<0.000000e+00> : vector<5x5xf32>
    %322 = tpu.matmul %319, %320, %cst_180 {dimension_numbers = #tpu.dot_dimension_numbers<[1], [1], [0], [0], [0, 0, 1, 0], [], []>} : vector<5x8xf32>, vector<5x8xf32>, vector<5x5xf32> -> vector<5x5xf32>
    %cst_181 = arith.constant 0.353553385 : f32
    %323 = vector.broadcast %cst_181 : f32 to vector<5x5xf32>
    %324 = arith.mulf %322, %323 : vector<5x5xf32>
    %cst_182 = arith.constant dense<0xFF800000> : vector<5xf32>
    %325 = vector.multi_reduction <maximumf>, %324, %cst_182 [1] : vector<5x5xf32> to vector<5xf32>
    %326 = vector.shape_cast %325 : vector<5xf32> to vector<5x1xf32>
    %327 = vector.broadcast %326 : vector<5x1xf32> to vector<5x5xf32>
    %328 = arith.subf %324, %327 : vector<5x5xf32>
    %329 = math.exp %328 : vector<5x5xf32>
    %cst_183 = arith.constant dense<0.000000e+00> : vector<5xf32>
    %330 = vector.multi_reduction <add>, %329, %cst_183 [1] : vector<5x5xf32> to vector<5xf32>
    %331 = vector.shape_cast %330 : vector<5xf32> to vector<5x1xf32>
    %332 = tpu.reciprocal %331 {approx = true} : vector<5x1xf32> -> vector<5x1xf32>
    %333 = vector.broadcast %332 : vector<5x1xf32> to vector<5x5xf32>
    %334 = arith.mulf %329, %333 : vector<5x5xf32>
    %cst_184 = arith.constant dense<0.000000e+00> : vector<5x8xf32>
    %335 = tpu.matmul %334, %321, %cst_184 {dimension_numbers = #tpu.dot_dimension_numbers<[1], [0], [0], [1], [0, 0, 1, 1], [], []>} : vector<5x5xf32>, vector<5x8xf32>, vector<5x8xf32> -> vector<5x8xf32>
    %c1_185 = arith.constant 1 : index
    %c3_186 = arith.constant 3 : index
    %c0_187 = arith.constant 0 : index
    %c0_188 = arith.constant 0 : index
    %336 = vector.load %arg8[%c1_185, %c3_186, %c0_187, %c0_188] : memref<2x4x8x32xf32, #tpu.memory_space<vmem>>, vector<1x1x8x32xf32>
    %337 = vector.shape_cast %336 : vector<1x1x8x32xf32> to vector<8x32xf32>
    %cst_189 = arith.constant dense<0.000000e+00> : vector<5x32xf32>
    %338 = tpu.matmul %335, %337, %cst_189 {dimension_numbers = #tpu.dot_dimension_numbers<[1], [0], [0], [1], [0, 0, 1, 1], [], []>} : vector<5x8xf32>, vector<8x32xf32>, vector<5x32xf32> -> vector<5x32xf32>
    %339 = arith.addf %318, %338 : vector<5x32xf32>
    %340 = arith.addf %223, %339 : vector<5x32xf32>
    %c1_190 = arith.constant 1 : index
    %c0_191 = arith.constant 0 : index
    %c0_192 = arith.constant 0 : index
    %341 = vector.load %arg9[%c1_190, %c0_191, %c0_192] : memref<2x1x32xf32, #tpu.memory_space<vmem>>, vector<1x1x32xf32>
    %342 = vector.shape_cast %341 : vector<1x1x32xf32> to vector<1x32xf32>
    %343 = vector.broadcast %342 : vector<1x32xf32> to vector<5x32xf32>
    %344 = arith.addf %340, %343 : vector<5x32xf32>
    %c1_193 = arith.constant 1 : index
    %c0_194 = arith.constant 0 : index
    %c0_195 = arith.constant 0 : index
    %345 = vector.load %arg10[%c1_193, %c0_194, %c0_195] : memref<2x1x32xf32, #tpu.memory_space<vmem>>, vector<1x1x32xf32>
    %346 = vector.shape_cast %345 : vector<1x1x32xf32> to vector<1x32xf32>
    %c1_196 = arith.constant 1 : index
    %c0_197 = arith.constant 0 : index
    %c0_198 = arith.constant 0 : index
    %347 = vector.load %arg11[%c1_196, %c0_197, %c0_198] : memref<2x1x32xf32, #tpu.memory_space<vmem>>, vector<1x1x32xf32>
    %348 = vector.shape_cast %347 : vector<1x1x32xf32> to vector<1x32xf32>
    %cst_199 = arith.constant dense<0.000000e+00> : vector<5xf32>
    %349 = vector.multi_reduction <add>, %344, %cst_199 [1] : vector<5x32xf32> to vector<5xf32>
    %350 = vector.shape_cast %349 : vector<5xf32> to vector<5x1xf32>
    %cst_200 = arith.constant 3.200000e+01 : f32
    %351 = vector.broadcast %cst_200 : f32 to vector<5x1xf32>
    %352 = arith.divf %350, %351 : vector<5x1xf32>
    %353 = vector.broadcast %352 : vector<5x1xf32> to vector<5x32xf32>
    %354 = arith.subf %344, %353 : vector<5x32xf32>
    %355 = arith.mulf %354, %354 : vector<5x32xf32>
    %cst_201 = arith.constant dense<0.000000e+00> : vector<5xf32>
    %356 = vector.multi_reduction <add>, %355, %cst_201 [1] : vector<5x32xf32> to vector<5xf32>
    %357 = vector.shape_cast %356 : vector<5xf32> to vector<5x1xf32>
    %cst_202 = arith.constant 3.200000e+01 : f32
    %358 = vector.broadcast %cst_202 : f32 to vector<5x1xf32>
    %359 = arith.divf %357, %358 : vector<5x1xf32>
    %cst_203 = arith.constant 9.99999997E-7 : f32
    %360 = vector.broadcast %cst_203 : f32 to vector<5x1xf32>
    %361 = arith.addf %359, %360 : vector<5x1xf32>
    %362 = math.rsqrt %361 : vector<5x1xf32>
    %363 = vector.broadcast %362 : vector<5x1xf32> to vector<5x32xf32>
    %364 = arith.mulf %354, %363 : vector<5x32xf32>
    %365 = vector.broadcast %346 : vector<1x32xf32> to vector<5x32xf32>
    %366 = arith.mulf %364, %365 : vector<5x32xf32>
    %367 = vector.broadcast %348 : vector<1x32xf32> to vector<5x32xf32>
    %368 = arith.addf %366, %367 : vector<5x32xf32>
    %c1_204 = arith.constant 1 : index
    %c0_205 = arith.constant 0 : index
    %c0_206 = arith.constant 0 : index
    %369 = vector.load %arg12[%c1_204, %c0_205, %c0_206] : memref<2x32x64xf32, #tpu.memory_space<vmem>>, vector<1x32x64xf32>
    %370 = vector.shape_cast %369 : vector<1x32x64xf32> to vector<32x64xf32>
    %cst_207 = arith.constant dense<0.000000e+00> : vector<5x64xf32>
    %371 = tpu.matmul %368, %370, %cst_207 {dimension_numbers = #tpu.dot_dimension_numbers<[1], [0], [0], [1], [0, 0, 1, 1], [], []>} : vector<5x32xf32>, vector<32x64xf32>, vector<5x64xf32> -> vector<5x64xf32>
    %c1_208 = arith.constant 1 : index
    %c0_209 = arith.constant 0 : index
    %c0_210 = arith.constant 0 : index
    %372 = vector.load %arg13[%c1_208, %c0_209, %c0_210] : memref<2x1x64xf32, #tpu.memory_space<vmem>>, vector<1x1x64xf32>
    %373 = vector.shape_cast %372 : vector<1x1x64xf32> to vector<1x64xf32>
    %374 = vector.broadcast %373 : vector<1x64xf32> to vector<5x64xf32>
    %375 = arith.addf %371, %374 : vector<5x64xf32>
    %cst_211 = arith.constant 5.000000e-01 : f32
    %376 = vector.broadcast %cst_211 : f32 to vector<5x64xf32>
    %377 = arith.mulf %376, %375 : vector<5x64xf32>
    %cst_212 = arith.constant 0.707106769 : f32
    %378 = vector.broadcast %cst_212 : f32 to vector<5x64xf32>
    %379 = arith.mulf %375, %378 : vector<5x64xf32>
    %cst_213 = arith.constant 0.000000e+00 : f32
    %380 = vector.broadcast %cst_213 : f32 to vector<5x64xf32>
    %381 = arith.cmpf oge, %379, %380 : vector<5x64xf32>
    %cst_214 = arith.constant 1.000000e+00 : f32
    %cst_215 = arith.constant -1.000000e+00 : f32
    %382 = vector.broadcast %cst_214 : f32 to vector<5x64xf32>
    %383 = vector.broadcast %cst_215 : f32 to vector<5x64xf32>
    %384 = arith.select %381, %382, %383 : vector<5x64xi1>, vector<5x64xf32>
    %385 = math.absf %379 : vector<5x64xf32>
    %cst_216 = arith.constant 0.327591091 : f32
    %386 = vector.broadcast %cst_216 : f32 to vector<5x64xf32>
    %387 = arith.mulf %386, %385 : vector<5x64xf32>
    %cst_217 = arith.constant 1.000000e+00 : f32
    %388 = vector.broadcast %cst_217 : f32 to vector<5x64xf32>
    %389 = arith.addf %388, %387 : vector<5x64xf32>
    %cst_218 = arith.constant 1.000000e+00 : f32
    %390 = vector.broadcast %cst_218 : f32 to vector<5x64xf32>
    %391 = arith.divf %390, %389 : vector<5x64xf32>
    %cst_219 = arith.constant 1.06140542 : f32
    %392 = vector.broadcast %cst_219 : f32 to vector<5x64xf32>
    %393 = arith.mulf %392, %391 : vector<5x64xf32>
    %cst_220 = arith.constant -1.45315206 : f32
    %394 = vector.broadcast %cst_220 : f32 to vector<5x64xf32>
    %395 = arith.addf %393, %394 : vector<5x64xf32>
    %396 = arith.mulf %395, %391 : vector<5x64xf32>
    %cst_221 = arith.constant 1.42141378 : f32
    %397 = vector.broadcast %cst_221 : f32 to vector<5x64xf32>
    %398 = arith.addf %396, %397 : vector<5x64xf32>
    %399 = arith.mulf %398, %391 : vector<5x64xf32>
    %cst_222 = arith.constant -0.284496725 : f32
    %400 = vector.broadcast %cst_222 : f32 to vector<5x64xf32>
    %401 = arith.addf %399, %400 : vector<5x64xf32>
    %402 = arith.mulf %401, %391 : vector<5x64xf32>
    %cst_223 = arith.constant 0.254829586 : f32
    %403 = vector.broadcast %cst_223 : f32 to vector<5x64xf32>
    %404 = arith.addf %402, %403 : vector<5x64xf32>
    %405 = arith.mulf %404, %391 : vector<5x64xf32>
    %cst_224 = arith.constant 0.000000e+00 : f32
    %406 = vector.broadcast %cst_224 : f32 to vector<5x64xf32>
    %407 = arith.subf %406, %385 : vector<5x64xf32>
    %408 = arith.mulf %407, %385 : vector<5x64xf32>
    %409 = math.exp %408 : vector<5x64xf32>
    %410 = arith.mulf %405, %409 : vector<5x64xf32>
    %cst_225 = arith.constant 1.000000e+00 : f32
    %411 = vector.broadcast %cst_225 : f32 to vector<5x64xf32>
    %412 = arith.subf %411, %410 : vector<5x64xf32>
    %413 = arith.mulf %384, %412 : vector<5x64xf32>
    %cst_226 = arith.constant 1.000000e+00 : f32
    %414 = vector.broadcast %cst_226 : f32 to vector<5x64xf32>
    %415 = arith.addf %414, %413 : vector<5x64xf32>
    %416 = arith.mulf %377, %415 : vector<5x64xf32>
    %c1_227 = arith.constant 1 : index
    %c0_228 = arith.constant 0 : index
    %c0_229 = arith.constant 0 : index
    %417 = vector.load %arg14[%c1_227, %c0_228, %c0_229] : memref<2x64x32xf32, #tpu.memory_space<vmem>>, vector<1x64x32xf32>
    %418 = vector.shape_cast %417 : vector<1x64x32xf32> to vector<64x32xf32>
    %cst_230 = arith.constant dense<0.000000e+00> : vector<5x32xf32>
    %419 = tpu.matmul %416, %418, %cst_230 {dimension_numbers = #tpu.dot_dimension_numbers<[1], [0], [0], [1], [0, 0, 1, 1], [], []>} : vector<5x64xf32>, vector<64x32xf32>, vector<5x32xf32> -> vector<5x32xf32>
    %420 = arith.addf %344, %419 : vector<5x32xf32>
    %c1_231 = arith.constant 1 : index
    %c0_232 = arith.constant 0 : index
    %c0_233 = arith.constant 0 : index
    %421 = vector.load %arg15[%c1_231, %c0_232, %c0_233] : memref<2x1x32xf32, #tpu.memory_space<vmem>>, vector<1x1x32xf32>
    %422 = vector.shape_cast %421 : vector<1x1x32xf32> to vector<1x32xf32>
    %423 = vector.broadcast %422 : vector<1x32xf32> to vector<5x32xf32>
    %424 = arith.addf %420, %423 : vector<5x32xf32>
    %c0_234 = arith.constant 0 : index
    %c0_235 = arith.constant 0 : index
    %425 = vector.load %arg16[%c0_234, %c0_235] : memref<1x32xf32, #tpu.memory_space<vmem>>, vector<1x32xf32>
    %c0_236 = arith.constant 0 : index
    %c0_237 = arith.constant 0 : index
    %426 = vector.load %arg17[%c0_236, %c0_237] : memref<1x32xf32, #tpu.memory_space<vmem>>, vector<1x32xf32>
    %cst_238 = arith.constant dense<0.000000e+00> : vector<5xf32>
    %427 = vector.multi_reduction <add>, %424, %cst_238 [1] : vector<5x32xf32> to vector<5xf32>
    %428 = vector.shape_cast %427 : vector<5xf32> to vector<5x1xf32>
    %cst_239 = arith.constant 3.200000e+01 : f32
    %429 = vector.broadcast %cst_239 : f32 to vector<5x1xf32>
    %430 = arith.divf %428, %429 : vector<5x1xf32>
    %431 = vector.broadcast %430 : vector<5x1xf32> to vector<5x32xf32>
    %432 = arith.subf %424, %431 : vector<5x32xf32>
    %433 = arith.mulf %432, %432 : vector<5x32xf32>
    %cst_240 = arith.constant dense<0.000000e+00> : vector<5xf32>
    %434 = vector.multi_reduction <add>, %433, %cst_240 [1] : vector<5x32xf32> to vector<5xf32>
    %435 = vector.shape_cast %434 : vector<5xf32> to vector<5x1xf32>
    %cst_241 = arith.constant 3.200000e+01 : f32
    %436 = vector.broadcast %cst_241 : f32 to vector<5x1xf32>
    %437 = arith.divf %435, %436 : vector<5x1xf32>
    %cst_242 = arith.constant 9.99999997E-7 : f32
    %438 = vector.broadcast %cst_242 : f32 to vector<5x1xf32>
    %439 = arith.addf %437, %438 : vector<5x1xf32>
    %440 = math.rsqrt %439 : vector<5x1xf32>
    %441 = vector.broadcast %440 : vector<5x1xf32> to vector<5x32xf32>
    %442 = arith.mulf %432, %441 : vector<5x32xf32>
    %443 = vector.broadcast %425 : vector<1x32xf32> to vector<5x32xf32>
    %444 = arith.mulf %442, %443 : vector<5x32xf32>
    %445 = vector.broadcast %426 : vector<1x32xf32> to vector<5x32xf32>
    %446 = arith.addf %444, %445 : vector<5x32xf32>
    %447 = vector.extract_strided_slice %446 {offsets = [0, 0], sizes = [1, 32], strides = [1, 1]} : vector<5x32xf32> to vector<1x32xf32>
    %c0_243 = arith.constant 0 : index
    %c0_244 = arith.constant 0 : index
    %448 = vector.load %arg18[%c0_243, %c0_244] : memref<32x128xf32, #tpu.memory_space<vmem>>, vector<32x128xf32>
    %cst_245 = arith.constant dense<0.000000e+00> : vector<1x128xf32>
    %449 = tpu.matmul %447, %448, %cst_245 {dimension_numbers = #tpu.dot_dimension_numbers<[1], [0], [0], [1], [0, 0, 1, 1], [], []>} : vector<1x32xf32>, vector<32x128xf32>, vector<1x128xf32> -> vector<1x128xf32>
    %c0_246 = arith.constant 0 : index
    %c0_247 = arith.constant 0 : index
    %450 = vector.load %arg19[%c0_246, %c0_247] : memref<1x128xf32, #tpu.memory_space<vmem>>, vector<1x128xf32>
    %451 = arith.addf %449, %450 : vector<1x128xf32>
    %c0_248 = arith.constant 0 : index
    %c0_249 = arith.constant 0 : index
    %c0_250 = arith.constant 0 : index
    %452 = vector.load %arg20[%c0_248, %c0_249, %c0_250] : memref<1x1x128xf32, #tpu.memory_space<vmem>>, vector<1x1x128xf32>
    %453 = vector.shape_cast %452 : vector<1x1x128xf32> to vector<1x128xf32>
    %454 = vector.shape_cast %451 : vector<1x128xf32> to vector<1x1x128xf32>
    tpu.vector_store %arg20[%c0_248, %c0_249, %c0_250], %454 {strides = array<i32>} : memref<1x1x128xf32, #tpu.memory_space<vmem>>, vector<1x1x128xf32>,
    return
  }
  func.func @transform_0(%arg0: i32) -> (i32, i32, i32) {
    %c0_i32 = arith.constant 0 : i32
    %c0_i32_0 = arith.constant 0 : i32
    %c0_i32_1 = arith.constant 0 : i32
    return %arg0, %c0_i32, %c0_i32_0 : i32, i32, i32
  }
  func.func @transform_1(%arg0: i32) -> (i32, i32, i32) {
    %c0_i32 = arith.constant 0 : i32
    %c0_i32_0 = arith.constant 0 : i32
    %c0_i32_1 = arith.constant 0 : i32
    %c0_i32_2 = arith.constant 0 : i32
    return %c0_i32, %c0_i32_0, %c0_i32_1 : i32, i32, i32
  }
  func.func @transform_2(%arg0: i32) -> (i32, i32) {
    %c0_i32 = arith.constant 0 : i32
    %c0_i32_0 = arith.constant 0 : i32
    %c0_i32_1 = arith.constant 0 : i32
    return %c0_i32, %c0_i32_0 : i32, i32
  }
  func.func @transform_3(%arg0: i32) -> (i32, i32, i32) {
    %c0_i32 = arith.constant 0 : i32
    %c0_i32_0 = arith.constant 0 : i32
    %c0_i32_1 = arith.constant 0 : i32
    %c0_i32_2 = arith.constant 0 : i32
    return %c0_i32, %c0_i32_0, %c0_i32_1 : i32, i32, i32
  }
  func.func @transform_4(%arg0: i32) -> (i32, i32, i32) {
    %c0_i32 = arith.constant 0 : i32
    %c0_i32_0 = arith.constant 0 : i32
    %c0_i32_1 = arith.constant 0 : i32
    %c0_i32_2 = arith.constant 0 : i32
    return %c0_i32, %c0_i32_0, %c0_i32_1 : i32, i32, i32
  }
  func.func @transform_5(%arg0: i32) -> (i32, i32, i32) {
    %c0_i32 = arith.constant 0 : i32
    %c0_i32_0 = arith.constant 0 : i32
    %c0_i32_1 = arith.constant 0 : i32
    %c0_i32_2 = arith.constant 0 : i32
    return %c0_i32, %c0_i32_0, %c0_i32_1 : i32, i32, i32
  }
  func.func @transform_6(%arg0: i32) -> (i32, i32, i32) {
    %c0_i32 = arith.constant 0 : i32
    %c0_i32_0 = arith.constant 0 : i32
    %c0_i32_1 = arith.constant 0 : i32
    %c0_i32_2 = arith.constant 0 : i32
    return %c0_i32, %c0_i32_0, %c0_i32_1 : i32, i32, i32
  }
  func.func @transform_7(%arg0: i32) -> (i32, i32, i32, i32) {
    %c0_i32 = arith.constant 0 : i32
    %c0_i32_0 = arith.constant 0 : i32
    %c0_i32_1 = arith.constant 0 : i32
    %c0_i32_2 = arith.constant 0 : i32
    %c0_i32_3 = arith.constant 0 : i32
    return %c0_i32, %c0_i32_0, %c0_i32_1, %c0_i32_2 : i32, i32, i32, i32
  }
  func.func @transform_8(%arg0: i32) -> (i32, i32, i32) {
    %c0_i32 = arith.constant 0 : i32
    %c0_i32_0 = arith.constant 0 : i32
    %c0_i32_1 = arith.constant 0 : i32
    %c0_i32_2 = arith.constant 0 : i32
    return %c0_i32, %c0_i32_0, %c0_i32_1 : i32, i32, i32
  }
  func.func @transform_9(%arg0: i32) -> (i32, i32, i32) {
    %c0_i32 = arith.constant 0 : i32
    %c0_i32_0 = arith.constant 0 : i32
    %c0_i32_1 = arith.constant 0 : i32
    %c0_i32_2 = arith.constant 0 : i32
    return %c0_i32, %c0_i32_0, %c0_i32_1 : i32, i32, i32
  }
  func.func @transform_10(%arg0: i32) -> (i32, i32, i32) {
    %c0_i32 = arith.constant 0 : i32
    %c0_i32_0 = arith.constant 0 : i32
    %c0_i32_1 = arith.constant 0 : i32
    %c0_i32_2 = arith.constant 0 : i32
    return %c0_i32, %c0_i32_0, %c0_i32_1 : i32, i32, i32
  }
  func.func @transform_11(%arg0: i32) -> (i32, i32, i32) {
    %c0_i32 = arith.constant 0 : i32
    %c0_i32_0 = arith.constant 0 : i32
    %c0_i32_1 = arith.constant 0 : i32
    %c0_i32_2 = arith.constant 0 : i32
    return %c0_i32, %c0_i32_0, %c0_i32_1 : i32, i32, i32
  }
  func.func @transform_12(%arg0: i32) -> (i32, i32, i32) {
    %c0_i32 = arith.constant 0 : i32
    %c0_i32_0 = arith.constant 0 : i32
    %c0_i32_1 = arith.constant 0 : i32
    %c0_i32_2 = arith.constant 0 : i32
    return %c0_i32, %c0_i32_0, %c0_i32_1 : i32, i32, i32
  }
  func.func @transform_13(%arg0: i32) -> (i32, i32, i32) {
    %c0_i32 = arith.constant 0 : i32
    %c0_i32_0 = arith.constant 0 : i32
    %c0_i32_1 = arith.constant 0 : i32
    %c0_i32_2 = arith.constant 0 : i32
    return %c0_i32, %c0_i32_0, %c0_i32_1 : i32, i32, i32
  }
  func.func @transform_14(%arg0: i32) -> (i32, i32, i32) {
    %c0_i32 = arith.constant 0 : i32
    %c0_i32_0 = arith.constant 0 : i32
    %c0_i32_1 = arith.constant 0 : i32
    %c0_i32_2 = arith.constant 0 : i32
    return %c0_i32, %c0_i32_0, %c0_i32_1 : i32, i32, i32
  }
  func.func @transform_15(%arg0: i32) -> (i32, i32) {
    %c0_i32 = arith.constant 0 : i32
    %c0_i32_0 = arith.constant 0 : i32
    %c0_i32_1 = arith.constant 0 : i32
    return %c0_i32, %c0_i32_0 : i32, i32
  }
  func.func @transform_16(%arg0: i32) -> (i32, i32) {
    %c0_i32 = arith.constant 0 : i32
    %c0_i32_0 = arith.constant 0 : i32
    %c0_i32_1 = arith.constant 0 : i32
    return %c0_i32, %c0_i32_0 : i32, i32
  }
  func.func @transform_17(%arg0: i32) -> (i32, i32) {
    %c0_i32 = arith.constant 0 : i32
    %c0_i32_0 = arith.constant 0 : i32
    %c0_i32_1 = arith.constant 0 : i32
    return %c0_i32, %c0_i32_0 : i32, i32
  }
  func.func @transform_18(%arg0: i32) -> (i32, i32) {
    %c0_i32 = arith.constant 0 : i32
    %c0_i32_0 = arith.constant 0 : i32
    %c0_i32_1 = arith.constant 0 : i32
    return %c0_i32, %c0_i32_0 : i32, i32
  }
  func.func @transform_19(%arg0: i32) -> (i32, i32, i32) {
    %c0_i32 = arith.constant 0 : i32
    %c0_i32_0 = arith.constant 0 : i32
    %c0_i32_1 = arith.constant 0 : i32
    return %arg0, %c0_i32, %c0_i32_0 : i32, i32, i32
  }
}

</mosaic_0001>

<llo_original>
// kernel: eeg_vit_forward.1
$region0: #{eeg_vit_forward.1}
  #allocation0 [shape = 'u32[]', space=smem, size = 0x4, offset = 0x4, fixed_abs, tag = 'smem constant byte address 0x4 - core index']
  #allocation1 [shape = 'u32[144,128]{1,0:T(1,128)}', space=vmem, size = 0x12000, scoped, tag = 'internal scratch']
  #allocation2 [shape = 'f32[5,32]{1,0:T(8,128)}', space=vmem, size = 0x1000, scoped, tag = 'scratch operand']
  %s0 = inlined_call_operand.vmem [shape: f32[2,1,128], index: 0, kind: input, shape index: {}]
  %s1 = inlined_call_operand.vmem [shape: f32[4,128,32], index: 1, kind: input, shape index: {}]
  %s2 = inlined_call_operand.vmem [shape: f32[5,32], index: 2, kind: input, shape index: {}]
  %s3 = inlined_call_operand.vmem [shape: f32[2,1,32], index: 3, kind: input, shape index: {}]
  %s4 = inlined_call_operand.vmem [shape: f32[2,1,32], index: 4, kind: input, shape index: {}]
  %s5 = inlined_call_operand.vmem [shape: f32[2,32,96], index: 5, kind: input, shape index: {}]
  %s6 = inlined_call_operand.vmem [shape: f32[2,1,96], index: 6, kind: input, shape index: {}]
  %s7 = inlined_call_operand.vmem [shape: f32[2,4,8,32], index: 7, kind: input, shape index: {}]
  %s8 = inlined_call_operand.vmem [shape: f32[2,1,32], index: 8, kind: input, shape index: {}]
  %s9 = inlined_call_operand.vmem [shape: f32[2,1,32], index: 9, kind: input, shape index: {}]
  %s10 = inlined_call_operand.vmem [shape: f32[2,1,32], index: 10, kind: input, shape index: {}]
  %s11 = inlined_call_operand.vmem [shape: f32[2,32,64], index: 11, kind: input, shape index: {}]
  %s12 = inlined_call_operand.vmem [shape: f32[2,1,64], index: 12, kind: input, shape index: {}]
  %s13 = inlined_call_operand.vmem [shape: f32[2,64,32], index: 13, kind: input, shape index: {}]
  %s14 = inlined_call_operand.vmem [shape: f32[2,1,32], index: 14, kind: input, shape index: {}]
  %s15 = inlined_call_operand.vmem [shape: f32[1,32], index: 15, kind: input, shape index: {}]
  %s16 = inlined_call_operand.vmem [shape: f32[1,32], index: 16, kind: input, shape index: {}]
  %s17 = inlined_call_operand.vmem [shape: f32[32,128], index: 17, kind: input, shape index: {}]
  %s18 = inlined_call_operand.vmem [shape: f32[1,128], index: 18, kind: input, shape index: {}]
  %s19 = inlined_call_operand.hbm [shape: f32[2,1,128], index: 19, kind: output, shape index: {}]
  %s20 = sld [smem:[#allocation0]]
  $region109: #{eeg_vit_forward.1} parent=0
    _
  %s22 = ssub.s32 1, %s20
  %s23 = scalar_select 0, %s22, %s20
  $region1: #{eeg_vit_forward.1} parent=0
    #allocation3 [shape = 'u8[1024]{0}', space=vmem, size = 0x400, scoped, tag = 'output window, operand 0']
    #allocation4 [shape = 's32[2]{0}', space=sflag, size = 0x8, scoped, tag = 'scoped memory for eeg_vit_forward.1']
    %24 = vsyncpa [#allocation4], 0
    %s25 = scalar_lea.sflag [#allocation4], 1
    %26 = vsyncpa %s25, 0
    loop: start=0, step=1, limit=4
    $region2: #{eeg_vit_forward.1} parent=1 // loop_pre_header
      _
    $region3: #{eeg_vit_forward.1} parent=1 // loop_header
      %s28 = sphi 0, %s32
      %p29 = scmp.ge.s32.totalorder %s28, 4
      %s38 = sphi 0, %s40
      %s41 = sphi 0, %s38
      %s42 = sphi 0, %s41
      %s58 = sphi 0, %s42
      %s62 = sphi 0, %s62
      %s64 = sphi 0, %s62
      %s65 = sphi 0, %s64
      %s79 = sphi 0, %s65
      %s83 = sphi 0, %s83
      %s85 = sphi 0, %s83
      %s86 = sphi 0, %s85
      %s100 = sphi 0, %s86
      %s104 = sphi 0, %s104
      %s106 = sphi 0, %s104
      %s107 = sphi 0, %s106
      %s121 = sphi 0, %s107
      %s125 = sphi 0, %s125
      %s127 = sphi 0, %s125
      %s128 = sphi 0, %s127
      %s142 = sphi 0, %s128
      %s146 = sphi 0, %s146
      %s148 = sphi 0, %s146
      %s149 = sphi 0, %s148
      %s163 = sphi 0, %s149
      %s167 = sphi 0, %s167
      %s169 = sphi 0, %s167
      %s170 = sphi 0, %s169
      %s184 = sphi 0, %s170
      %s188 = sphi 0, %s188
      %s190 = sphi 0, %s188
      %s191 = sphi 0, %s190
      %s205 = sphi 0, %s191
      %s209 = sphi 0, %s209
      %s211 = sphi 0, %s209
      %s212 = sphi 0, %s211
      %s226 = sphi 0, %s212
      %s230 = sphi 0, %s230
      %s232 = sphi 0, %s230
      %s233 = sphi 0, %s232
      %s247 = sphi 0, %s233
      %s251 = sphi 0, %s251
      %s253 = sphi 0, %s251
      %s254 = sphi 0, %s253
      %s268 = sphi 0, %s254
      %s272 = sphi 0, %s272
      %s274 = sphi 0, %s272
      %s275 = sphi 0, %s274
      %s289 = sphi 0, %s275
      %s293 = sphi 0, %s293
      %s295 = sphi 0, %s293
      %s296 = sphi 0, %s295
      %s310 = sphi 0, %s296
      %s314 = sphi 0, %s314
      %s316 = sphi 0, %s314
      %s317 = sphi 0, %s316
      %s331 = sphi 0, %s317
      %s335 = sphi 0, %s335
      %s337 = sphi 0, %s335
      %s338 = sphi 0, %s337
      %s352 = sphi 0, %s338
      %s356 = sphi 0, %s356
      %s358 = sphi 0, %s356
      %s359 = sphi 0, %s358
      %s373 = sphi 0, %s359
      %s377 = sphi 0, %s377
      %s379 = sphi 0, %s377
      %s380 = sphi 0, %s379
      %s394 = sphi 0, %s380
      %s398 = sphi 0, %s398
      %s400 = sphi 0, %s398
      %s401 = sphi 0, %s400
      %s415 = sphi 0, %s401
      %s419 = sphi 0, %s419
      %s421 = sphi 0, %s419
      %s422 = sphi 0, %s421
      %s436 = sphi 0, %s422
      %s442 = sphi 0, %s444
      %s445 = sphi 0, %s442
      %s446 = sphi 0, %s445
      %s462 = sphi 0, %s446
    $region4: #{eeg_vit_forward.1} parent=1 // loop_header_branch
      %31 = sbr.rel (%p29) target = $region8
    $region5: #{eeg_vit_forward.1} parent=1 // loop_body
      %s33 = ssub.s32 %s28, 1
      %s34 = ssub.s32 %s28, 2
      %s35 = sadd.s32 %s28, 1
      %s36 = ssub.s32 %s28, %s35
      %p37 = scmp.eq.s32.totalorder %s36, 0
      %s39 = sadd.s32 %s38, 1
      %s40 = scalar_select %p37, %s38, %s39
      %p43 = pneg %p37
      %p44 = scmp.eq.s32.totalorder %s28, 1
      %p45 = por %p43, %p44
      %p46 = scmp.ne.s32.totalorder %s38, %s41
      %p47 = scmp.eq.s32.totalorder %s28, 0
      %p48 = por %p46, %p47
      %p49 = scmp.ne.s32.totalorder %s38, %s41
      %p50 = scmp.eq.s32.totalorder %s33, 1
      %p51 = por %p49, %p50
      %p52 = scmp.ne.s32.totalorder %s41, %s42
      %p53 = scmp.eq.s32.totalorder %s33, 0
      %p54 = por %p52, %p53
      %p55 = scmp.ne.s32.totalorder %s41, %s42
      %p56 = scmp.eq.s32.totalorder %s34, 1
      %p57 = por %p55, %p56
      %p59 = scmp.ne.s32.totalorder %s42, %s58
      %p60 = scmp.eq.s32.totalorder %s34, 0
      %p61 = por %p59, %p60
      %s63 = sadd.s32 %s62, 1
      %p66 = scmp.eq.s32.totalorder %s28, 1
      %p67 = scmp.ne.s32.totalorder %s62, %s64
      %p68 = scmp.eq.s32.totalorder %s28, 0
      %p69 = por %p67, %p68
      %p70 = scmp.ne.s32.totalorder %s62, %s64
      %p71 = scmp.eq.s32.totalorder %s33, 1
      %p72 = por %p70, %p71
      %p73 = scmp.ne.s32.totalorder %s64, %s65
      %p74 = scmp.eq.s32.totalorder %s33, 0
      %p75 = por %p73, %p74
      %p76 = scmp.ne.s32.totalorder %s64, %s65
      %p77 = scmp.eq.s32.totalorder %s34, 1
      %p78 = por %p76, %p77
      %p80 = scmp.ne.s32.totalorder %s65, %s79
      %p81 = scmp.eq.s32.totalorder %s34, 0
      %p82 = por %p80, %p81
      %s84 = sadd.s32 %s83, 1
      %p87 = scmp.eq.s32.totalorder %s28, 1
      %p88 = scmp.ne.s32.totalorder %s83, %s85
      %p89 = scmp.eq.s32.totalorder %s28, 0
      %p90 = por %p88, %p89
      %p91 = scmp.ne.s32.totalorder %s83, %s85
      %p92 = scmp.eq.s32.totalorder %s33, 1
      %p93 = por %p91, %p92
      %p94 = scmp.ne.s32.totalorder %s85, %s86
      %p95 = scmp.eq.s32.totalorder %s33, 0
      %p96 = por %p94, %p95
      %p97 = scmp.ne.s32.totalorder %s85, %s86
      %p98 = scmp.eq.s32.totalorder %s34, 1
      %p99 = por %p97, %p98
      %p101 = scmp.ne.s32.totalorder %s86, %s100
      %p102 = scmp.eq.s32.totalorder %s34, 0
      %p103 = por %p101, %p102
      %s105 = sadd.s32 %s104, 1
      %p108 = scmp.eq.s32.totalorder %s28, 1
      %p109 = scmp.ne.s32.totalorder %s104, %s106
      %p110 = scmp.eq.s32.totalorder %s28, 0
      %p111 = por %p109, %p110
      %p112 = scmp.ne.s32.totalorder %s104, %s106
      %p113 = scmp.eq.s32.totalorder %s33, 1
      %p114 = por %p112, %p113
      %p115 = scmp.ne.s32.totalorder %s106, %s107
      %p116 = scmp.eq.s32.totalorder %s33, 0
      %p117 = por %p115, %p116
      %p118 = scmp.ne.s32.totalorder %s106, %s107
      %p119 = scmp.eq.s32.totalorder %s34, 1
      %p120 = por %p118, %p119
      %p122 = scmp.ne.s32.totalorder %s107, %s121
      %p123 = scmp.eq.s32.totalorder %s34, 0
      %p124 = por %p122, %p123
      %s126 = sadd.s32 %s125, 1
      %p129 = scmp.eq.s32.totalorder %s28, 1
      %p130 = scmp.ne.s32.totalorder %s125, %s127
      %p131 = scmp.eq.s32.totalorder %s28, 0
      %p132 = por %p130, %p131
      %p133 = scmp.ne.s32.totalorder %s125, %s127
      %p134 = scmp.eq.s32.totalorder %s33, 1
      %p135 = por %p133, %p134
      %p136 = scmp.ne.s32.totalorder %s127, %s128
      %p137 = scmp.eq.s32.totalorder %s33, 0
      %p138 = por %p136, %p137
      %p139 = scmp.ne.s32.totalorder %s127, %s128
      %p140 = scmp.eq.s32.totalorder %s34, 1
      %p141 = por %p139, %p140
      %p143 = scmp.ne.s32.totalorder %s128, %s142
      %p144 = scmp.eq.s32.totalorder %s34, 0
      %p145 = por %p143, %p144
      %s147 = sadd.s32 %s146, 1
      %p150 = scmp.eq.s32.totalorder %s28, 1
      %p151 = scmp.ne.s32.totalorder %s146, %s148
      %p152 = scmp.eq.s32.totalorder %s28, 0
      %p153 = por %p151, %p152
      %p154 = scmp.ne.s32.totalorder %s146, %s148
      %p155 = scmp.eq.s32.totalorder %s33, 1
      %p156 = por %p154, %p155
      %p157 = scmp.ne.s32.totalorder %s148, %s149
      %p158 = scmp.eq.s32.totalorder %s33, 0
      %p159 = por %p157, %p158
      %p160 = scmp.ne.s32.totalorder %s148, %s149
      %p161 = scmp.eq.s32.totalorder %s34, 1
      %p162 = por %p160, %p161
      %p164 = scmp.ne.s32.totalorder %s149, %s163
      %p165 = scmp.eq.s32.totalorder %s34, 0
      %p166 = por %p164, %p165
      %s168 = sadd.s32 %s167, 1
      %p171 = scmp.eq.s32.totalorder %s28, 1
      %p172 = scmp.ne.s32.totalorder %s167, %s169
      %p173 = scmp.eq.s32.totalorder %s28, 0
      %p174 = por %p172, %p173
      %p175 = scmp.ne.s32.totalorder %s167, %s169
      %p176 = scmp.eq.s32.totalorder %s33, 1
      %p177 = por %p175, %p176
      %p178 = scmp.ne.s32.totalorder %s169, %s170
      %p179 = scmp.eq.s32.totalorder %s33, 0
      %p180 = por %p178, %p179
      %p181 = scmp.ne.s32.totalorder %s169, %s170
      %p182 = scmp.eq.s32.totalorder %s34, 1
      %p183 = por %p181, %p182
      %p185 = scmp.ne.s32.totalorder %s170, %s184
      %p186 = scmp.eq.s32.totalorder %s34, 0
      %p187 = por %p185, %p186
      %s189 = sadd.s32 %s188, 1
      %p192 = scmp.eq.s32.totalorder %s28, 1
      %p193 = scmp.ne.s32.totalorder %s188, %s190
      %p194 = scmp.eq.s32.totalorder %s28, 0
      %p195 = por %p193, %p194
      %p196 = scmp.ne.s32.totalorder %s188, %s190
      %p197 = scmp.eq.s32.totalorder %s33, 1
      %p198 = por %p196, %p197
      %p199 = scmp.ne.s32.totalorder %s190, %s191
      %p200 = scmp.eq.s32.totalorder %s33, 0
      %p201 = por %p199, %p200
      %p202 = scmp.ne.s32.totalorder %s190, %s191
      %p203 = scmp.eq.s32.totalorder %s34, 1
      %p204 = por %p202, %p203
      %p206 = scmp.ne.s32.totalorder %s191, %s205
      %p207 = scmp.eq.s32.totalorder %s34, 0
      %p208 = por %p206, %p207
      %s210 = sadd.s32 %s209, 1
      %p213 = scmp.eq.s32.totalorder %s28, 1
      %p214 = scmp.ne.s32.totalorder %s209, %s211
      %p215 = scmp.eq.s32.totalorder %s28, 0
      %p216 = por %p214, %p215
      %p217 = scmp.ne.s32.totalorder %s209, %s211
      %p218 = scmp.eq.s32.totalorder %s33, 1
      %p219 = por %p217, %p218
      %p220 = scmp.ne.s32.totalorder %s211, %s212
      %p221 = scmp.eq.s32.totalorder %s33, 0
      %p222 = por %p220, %p221
      %p223 = scmp.ne.s32.totalorder %s211, %s212
      %p224 = scmp.eq.s32.totalorder %s34, 1
      %p225 = por %p223, %p224
      %p227 = scmp.ne.s32.totalorder %s212, %s226
      %p228 = scmp.eq.s32.totalorder %s34, 0
      %p229 = por %p227, %p228
      %s231 = sadd.s32 %s230, 1
      %p234 = scmp.eq.s32.totalorder %s28, 1
      %p235 = scmp.ne.s32.totalorder %s230, %s232
      %p236 = scmp.eq.s32.totalorder %s28, 0
      %p237 = por %p235, %p236
      %p238 = scmp.ne.s32.totalorder %s230, %s232
      %p239 = scmp.eq.s32.totalorder %s33, 1
      %p240 = por %p238, %p239
      %p241 = scmp.ne.s32.totalorder %s232, %s233
      %p242 = scmp.eq.s32.totalorder %s33, 0
      %p243 = por %p241, %p242
      %p244 = scmp.ne.s32.totalorder %s232, %s233
      %p245 = scmp.eq.s32.totalorder %s34, 1
      %p246 = por %p244, %p245
      %p248 = scmp.ne.s32.totalorder %s233, %s247
      %p249 = scmp.eq.s32.totalorder %s34, 0
      %p250 = por %p248, %p249
      %s252 = sadd.s32 %s251, 1
      %p255 = scmp.eq.s32.totalorder %s28, 1
      %p256 = scmp.ne.s32.totalorder %s251, %s253
      %p257 = scmp.eq.s32.totalorder %s28, 0
      %p258 = por %p256, %p257
      %p259 = scmp.ne.s32.totalorder %s251, %s253
      %p260 = scmp.eq.s32.totalorder %s33, 1
      %p261 = por %p259, %p260
      %p262 = scmp.ne.s32.totalorder %s253, %s254
      %p263 = scmp.eq.s32.totalorder %s33, 0
      %p264 = por %p262, %p263
      %p265 = scmp.ne.s32.totalorder %s253, %s254
      %p266 = scmp.eq.s32.totalorder %s34, 1
      %p267 = por %p265, %p266
      %p269 = scmp.ne.s32.totalorder %s254, %s268
      %p270 = scmp.eq.s32.totalorder %s34, 0
      %p271 = por %p269, %p270
      %s273 = sadd.s32 %s272, 1
      %p276 = scmp.eq.s32.totalorder %s28, 1
      %p277 = scmp.ne.s32.totalorder %s272, %s274
      %p278 = scmp.eq.s32.totalorder %s28, 0
      %p279 = por %p277, %p278
      %p280 = scmp.ne.s32.totalorder %s272, %s274
      %p281 = scmp.eq.s32.totalorder %s33, 1
      %p282 = por %p280, %p281
      %p283 = scmp.ne.s32.totalorder %s274, %s275
      %p284 = scmp.eq.s32.totalorder %s33, 0
      %p285 = por %p283, %p284
      %p286 = scmp.ne.s32.totalorder %s274, %s275
      %p287 = scmp.eq.s32.totalorder %s34, 1
      %p288 = por %p286, %p287
      %p290 = scmp.ne.s32.totalorder %s275, %s289
      %p291 = scmp.eq.s32.totalorder %s34, 0
      %p292 = por %p290, %p291
      %s294 = sadd.s32 %s293, 1
      %p297 = scmp.eq.s32.totalorder %s28, 1
      %p298 = scmp.ne.s32.totalorder %s293, %s295
      %p299 = scmp.eq.s32.totalorder %s28, 0
      %p300 = por %p298, %p299
      %p301 = scmp.ne.s32.totalorder %s293, %s295
      %p302 = scmp.eq.s32.totalorder %s33, 1
      %p303 = por %p301, %p302
      %p304 = scmp.ne.s32.totalorder %s295, %s296
      %p305 = scmp.eq.s32.totalorder %s33, 0
      %p306 = por %p304, %p305
      %p307 = scmp.ne.s32.totalorder %s295, %s296
      %p308 = scmp.eq.s32.totalorder %s34, 1
      %p309 = por %p307, %p308
      %p311 = scmp.ne.s32.totalorder %s296, %s310
      %p312 = scmp.eq.s32.totalorder %s34, 0
      %p313 = por %p311, %p312
      %s315 = sadd.s32 %s314, 1
      %p318 = scmp.eq.s32.totalorder %s28, 1
      %p319 = scmp.ne.s32.totalorder %s314, %s316
      %p320 = scmp.eq.s32.totalorder %s28, 0
      %p321 = por %p319, %p320
      %p322 = scmp.ne.s32.totalorder %s314, %s316
      %p323 = scmp.eq.s32.totalorder %s33, 1
      %p324 = por %p322, %p323
      %p325 = scmp.ne.s32.totalorder %s316, %s317
      %p326 = scmp.eq.s32.totalorder %s33, 0
      %p327 = por %p325, %p326
      %p328 = scmp.ne.s32.totalorder %s316, %s317
      %p329 = scmp.eq.s32.totalorder %s34, 1
      %p330 = por %p328, %p329
      %p332 = scmp.ne.s32.totalorder %s317, %s331
      %p333 = scmp.eq.s32.totalorder %s34, 0
      %p334 = por %p332, %p333
      %s336 = sadd.s32 %s335, 1
      %p339 = scmp.eq.s32.totalorder %s28, 1
      %p340 = scmp.ne.s32.totalorder %s335, %s337
      %p341 = scmp.eq.s32.totalorder %s28, 0
      %p342 = por %p340, %p341
      %p343 = scmp.ne.s32.totalorder %s335, %s337
      %p344 = scmp.eq.s32.totalorder %s33, 1
      %p345 = por %p343, %p344
      %p346 = scmp.ne.s32.totalorder %s337, %s338
      %p347 = scmp.eq.s32.totalorder %s33, 0
      %p348 = por %p346, %p347
      %p349 = scmp.ne.s32.totalorder %s337, %s338
      %p350 = scmp.eq.s32.totalorder %s34, 1
      %p351 = por %p349, %p350
      %p353 = scmp.ne.s32.totalorder %s338, %s352
      %p354 = scmp.eq.s32.totalorder %s34, 0
      %p355 = por %p353, %p354
      %s357 = sadd.s32 %s356, 1
      %p360 = scmp.eq.s32.totalorder %s28, 1
      %p361 = scmp.ne.s32.totalorder %s356, %s358
      %p362 = scmp.eq.s32.totalorder %s28, 0
      %p363 = por %p361, %p362
      %p364 = scmp.ne.s32.totalorder %s356, %s358
      %p365 = scmp.eq.s32.totalorder %s33, 1
      %p366 = por %p364, %p365
      %p367 = scmp.ne.s32.totalorder %s358, %s359
      %p368 = scmp.eq.s32.totalorder %s33, 0
      %p369 = por %p367, %p368
      %p370 = scmp.ne.s32.totalorder %s358, %s359
      %p371 = scmp.eq.s32.totalorder %s34, 1
      %p372 = por %p370, %p371
      %p374 = scmp.ne.s32.totalorder %s359, %s373
      %p375 = scmp.eq.s32.totalorder %s34, 0
      %p376 = por %p374, %p375
      %s378 = sadd.s32 %s377, 1
      %p381 = scmp.eq.s32.totalorder %s28, 1
      %p382 = scmp.ne.s32.totalorder %s377, %s379
      %p383 = scmp.eq.s32.totalorder %s28, 0
      %p384 = por %p382, %p383
      %p385 = scmp.ne.s32.totalorder %s377, %s379
      %p386 = scmp.eq.s32.totalorder %s33, 1
      %p387 = por %p385, %p386
      %p388 = scmp.ne.s32.totalorder %s379, %s380
      %p389 = scmp.eq.s32.totalorder %s33, 0
      %p390 = por %p388, %p389
      %p391 = scmp.ne.s32.totalorder %s379, %s380
      %p392 = scmp.eq.s32.totalorder %s34, 1
      %p393 = por %p391, %p392
      %p395 = scmp.ne.s32.totalorder %s380, %s394
      %p396 = scmp.eq.s32.totalorder %s34, 0
      %p397 = por %p395, %p396
      %s399 = sadd.s32 %s398, 1
      %p402 = scmp.eq.s32.totalorder %s28, 1
      %p403 = scmp.ne.s32.totalorder %s398, %s400
      %p404 = scmp.eq.s32.totalorder %s28, 0
      %p405 = por %p403, %p404
      %p406 = scmp.ne.s32.totalorder %s398, %s400
      %p407 = scmp.eq.s32.totalorder %s33, 1
      %p408 = por %p406, %p407
      %p409 = scmp.ne.s32.totalorder %s400, %s401
      %p410 = scmp.eq.s32.totalorder %s33, 0
      %p411 = por %p409, %p410
      %p412 = scmp.ne.s32.totalorder %s400, %s401
      %p413 = scmp.eq.s32.totalorder %s34, 1
      %p414 = por %p412, %p413
      %p416 = scmp.ne.s32.totalorder %s401, %s415
      %p417 = scmp.eq.s32.totalorder %s34, 0
      %p418 = por %p416, %p417
      %s420 = sadd.s32 %s419, 1
      %p423 = scmp.eq.s32.totalorder %s28, 1
      %p424 = scmp.ne.s32.totalorder %s419, %s421
      %p425 = scmp.eq.s32.totalorder %s28, 0
      %p426 = por %p424, %p425
      %p427 = scmp.ne.s32.totalorder %s419, %s421
      %p428 = scmp.eq.s32.totalorder %s33, 1
      %p429 = por %p427, %p428
      %p430 = scmp.ne.s32.totalorder %s421, %s422
      %p431 = scmp.eq.s32.totalorder %s33, 0
      %p432 = por %p430, %p431
      %p433 = scmp.ne.s32.totalorder %s421, %s422
      %p434 = scmp.eq.s32.totalorder %s34, 1
      %p435 = por %p433, %p434
      %p437 = scmp.ne.s32.totalorder %s422, %s436
      %p438 = scmp.eq.s32.totalorder %s34, 0
      %p439 = por %p437, %p438
      %s440 = ssub.s32 %s28, %s35
      %p441 = scmp.eq.s32.totalorder %s440, 0
      %s443 = sadd.s32 %s442, 1
      %s444 = scalar_select %p441, %s442, %s443
      %p447 = pneg %p441
      %p448 = scmp.eq.s32.totalorder %s28, 1
      %p449 = por %p447, %p448
      %p450 = scmp.ne.s32.totalorder %s442, %s445
      %p451 = scmp.eq.s32.totalorder %s28, 0
      %p452 = por %p450, %p451
      %p453 = scmp.ne.s32.totalorder %s442, %s445
      %p454 = scmp.eq.s32.totalorder %s33, 1
      %p455 = por %p453, %p454
      %p456 = scmp.ne.s32.totalorder %s445, %s446
      %p457 = scmp.eq.s32.totalorder %s33, 0
      %p458 = por %p456, %p457
      %p459 = scmp.ne.s32.totalorder %s445, %s446
      %p460 = scmp.eq.s32.totalorder %s34, 1
      %p461 = por %p459, %p460
      %p463 = scmp.ne.s32.totalorder %s446, %s462
      %p464 = scmp.eq.s32.totalorder %s34, 0
      %p465 = por %p463, %p464
      %p466 = scmp.le.s32.totalorder 1, %s28
      %p467 = scmp.lt.s32.totalorder %s28, 3
      %p468 = pnand %p466, %p467
      %p469 = pneg %p468
      // Predicated region
      $region9: #{eeg_vit_forward.1} parent=5 // pred_check
        _
      $region10: #{eeg_vit_forward.1} parent=5 // pred_check_branch
        %471 = sbr.rel (%p468) target = $region12
      $region11: #{eeg_vit_forward.1} parent=5 // pred_region
        %s472 = ssub.s32 %s28, 1
        // Predicated region
        $region13: #{eeg_vit_forward.1} parent=11 // pred_check
          %p473 = pneg %p75
        $region14: #{eeg_vit_forward.1} parent=11 // pred_check_branch
          %475 = sbr.rel (%p473) target = $region16
        $region15: #{eeg_vit_forward.1} parent=11 // pred_region
          _
        $region16: #{eeg_vit_forward.1} parent=11 // pred_fallthru
          _
        // Predicated region
        $region17: #{eeg_vit_forward.1} parent=11 // pred_check
          %p476 = pneg %p96
        $region18: #{eeg_vit_forward.1} parent=11 // pred_check_branch
          %478 = sbr.rel (%p476) target = $region20
        $region19: #{eeg_vit_forward.1} parent=11 // pred_region
          _
        $region20: #{eeg_vit_forward.1} parent=11 // pred_fallthru
          _
        // Predicated region
        $region21: #{eeg_vit_forward.1} parent=11 // pred_check
          %p479 = pneg %p117
        $region22: #{eeg_vit_forward.1} parent=11 // pred_check_branch
          %481 = sbr.rel (%p479) target = $region24
        $region23: #{eeg_vit_forward.1} parent=11 // pred_region
          _
        $region24: #{eeg_vit_forward.1} parent=11 // pred_fallthru
          _
        // Predicated region
        $region25: #{eeg_vit_forward.1} parent=11 // pred_check
          %p482 = pneg %p138
        $region26: #{eeg_vit_forward.1} parent=11 // pred_check_branch
          %484 = sbr.rel (%p482) target = $region28
        $region27: #{eeg_vit_forward.1} parent=11 // pred_region
          _
        $region28: #{eeg_vit_forward.1} parent=11 // pred_fallthru
          _
        // Predicated region
        $region29: #{eeg_vit_forward.1} parent=11 // pred_check
          %p485 = pneg %p159
        $region30: #{eeg_vit_forward.1} parent=11 // pred_check_branch
          %487 = sbr.rel (%p485) target = $region32
        $region31: #{eeg_vit_forward.1} parent=11 // pred_region
          _
        $region32: #{eeg_vit_forward.1} parent=11 // pred_fallthru
          _
        // Predicated region
        $region33: #{eeg_vit_forward.1} parent=11 // pred_check
          %p488 = pneg %p180
        $region34: #{eeg_vit_forward.1} parent=11 // pred_check_branch
          %490 = sbr.rel (%p488) target = $region36
        $region35: #{eeg_vit_forward.1} parent=11 // pred_region
          _
        $region36: #{eeg_vit_forward.1} parent=11 // pred_fallthru
          _
        // Predicated region
        $region37: #{eeg_vit_forward.1} parent=11 // pred_check
          %p491 = pneg %p201
        $region38: #{eeg_vit_forward.1} parent=11 // pred_check_branch
          %493 = sbr.rel (%p491) target = $region40
        $region39: #{eeg_vit_forward.1} parent=11 // pred_region
          _
        $region40: #{eeg_vit_forward.1} parent=11 // pred_fallthru
          _
        // Predicated region
        $region41: #{eeg_vit_forward.1} parent=11 // pred_check
          %p494 = pneg %p222
        $region42: #{eeg_vit_forward.1} parent=11 // pred_check_branch
          %496 = sbr.rel (%p494) target = $region44
        $region43: #{eeg_vit_forward.1} parent=11 // pred_region
          _
        $region44: #{eeg_vit_forward.1} parent=11 // pred_fallthru
          _
        // Predicated region
        $region45: #{eeg_vit_forward.1} parent=11 // pred_check
          %p497 = pneg %p243
        $region46: #{eeg_vit_forward.1} parent=11 // pred_check_branch
          %499 = sbr.rel (%p497) target = $region48
        $region47: #{eeg_vit_forward.1} parent=11 // pred_region
          _
        $region48: #{eeg_vit_forward.1} parent=11 // pred_fallthru
          _
        // Predicated region
        $region49: #{eeg_vit_forward.1} parent=11 // pred_check
          %p500 = pneg %p264
        $region50: #{eeg_vit_forward.1} parent=11 // pred_check_branch
          %502 = sbr.rel (%p500) target = $region52
        $region51: #{eeg_vit_forward.1} parent=11 // pred_region
          _
        $region52: #{eeg_vit_forward.1} parent=11 // pred_fallthru
          _
        // Predicated region
        $region53: #{eeg_vit_forward.1} parent=11 // pred_check
          %p503 = pneg %p285
        $region54: #{eeg_vit_forward.1} parent=11 // pred_check_branch
          %505 = sbr.rel (%p503) target = $region56
        $region55: #{eeg_vit_forward.1} parent=11 // pred_region
          _
        $region56: #{eeg_vit_forward.1} parent=11 // pred_fallthru
          _
        // Predicated region
        $region57: #{eeg_vit_forward.1} parent=11 // pred_check
          %p506 = pneg %p306
        $region58: #{eeg_vit_forward.1} parent=11 // pred_check_branch
          %508 = sbr.rel (%p506) target = $region60
        $region59: #{eeg_vit_forward.1} parent=11 // pred_region
          _
        $region60: #{eeg_vit_forward.1} parent=11 // pred_fallthru
          _
        // Predicated region
        $region61: #{eeg_vit_forward.1} parent=11 // pred_check
          %p509 = pneg %p327
        $region62: #{eeg_vit_forward.1} parent=11 // pred_check_branch
          %511 = sbr.rel (%p509) target = $region64
        $region63: #{eeg_vit_forward.1} parent=11 // pred_region
          _
        $region64: #{eeg_vit_forward.1} parent=11 // pred_fallthru
          _
        // Predicated region
        $region65: #{eeg_vit_forward.1} parent=11 // pred_check
          %p512 = pneg %p348
        $region66: #{eeg_vit_forward.1} parent=11 // pred_check_branch
          %514 = sbr.rel (%p512) target = $region68
        $region67: #{eeg_vit_forward.1} parent=11 // pred_region
          _
        $region68: #{eeg_vit_forward.1} parent=11 // pred_fallthru
          _
        // Predicated region
        $region69: #{eeg_vit_forward.1} parent=11 // pred_check
          %p515 = pneg %p369
        $region70: #{eeg_vit_forward.1} parent=11 // pred_check_branch
          %517 = sbr.rel (%p515) target = $region72
        $region71: #{eeg_vit_forward.1} parent=11 // pred_region
          _
        $region72: #{eeg_vit_forward.1} parent=11 // pred_fallthru
          _
        // Predicated region
        $region73: #{eeg_vit_forward.1} parent=11 // pred_check
          %p518 = pneg %p390
        $region74: #{eeg_vit_forward.1} parent=11 // pred_check_branch
          %520 = sbr.rel (%p518) target = $region76
        $region75: #{eeg_vit_forward.1} parent=11 // pred_region
          _
        $region76: #{eeg_vit_forward.1} parent=11 // pred_fallthru
          _
        // Predicated region
        $region77: #{eeg_vit_forward.1} parent=11 // pred_check
          %p521 = pneg %p411
        $region78: #{eeg_vit_forward.1} parent=11 // pred_check_branch
          %523 = sbr.rel (%p521) target = $region80
        $region79: #{eeg_vit_forward.1} parent=11 // pred_region
          _
        $region80: #{eeg_vit_forward.1} parent=11 // pred_fallthru
          _
        // Predicated region
        $region81: #{eeg_vit_forward.1} parent=11 // pred_check
          %p524 = pneg %p432
        $region82: #{eeg_vit_forward.1} parent=11 // pred_check_branch
          %526 = sbr.rel (%p524) target = $region84
        $region83: #{eeg_vit_forward.1} parent=11 // pred_region
          _
        $region84: #{eeg_vit_forward.1} parent=11 // pred_fallthru
          _
      $region12: #{eeg_vit_forward.1} parent=5 // pred_fallthru
        _
      %p527 = scmp.lt.s32.totalorder %s28, 2
      // Predicated region
      $region85: #{eeg_vit_forward.1} parent=5 // pred_check
        %p528 = pneg %p527
      $region86: #{eeg_vit_forward.1} parent=5 // pred_check_branch
        %530 = sbr.rel (%p528) target = $region88
      $region87: #{eeg_vit_forward.1} parent=5 // pred_region
        // Predicated region
        $region89: #{eeg_vit_forward.1} parent=87 // pred_check
          %p531 = pneg %p48
        $region90: #{eeg_vit_forward.1} parent=87 // pred_check_branch
          %533 = sbr.rel (%p531) target = $region92
        $region91: #{eeg_vit_forward.1} parent=87 // pred_region
          %p534 = scmp.lt.s32.totalorder %s28, 1
          %s535 = scalar_select %p534, %s28, 1
          %s536 = scalar_lea.vmem %s0, %s535
        $region92: #{eeg_vit_forward.1} parent=87 // pred_fallthru
          _
      $region88: #{eeg_vit_forward.1} parent=5 // pred_fallthru
        _
      %p537 = scmp.le.s32.totalorder 1, %s28
      %p538 = scmp.lt.s32.totalorder %s28, 3
      %p539 = pnand %p537, %p538
      %p540 = pneg %p539
      // Predicated region
      $region93: #{eeg_vit_forward.1} parent=5 // pred_check
        _
      $region94: #{eeg_vit_forward.1} parent=5 // pred_check_branch
        %542 = sbr.rel (%p539) target = $region96
      $region95: #{eeg_vit_forward.1} parent=5 // pred_region
        %s543 = ssub.s32 %s28, 1
        %p544 = scmp.lt.s32.totalorder %s33, 1
        %s545 = scalar_select %p544, %s33, 1
        %s546 = scalar_lea.vmem %s0, %s545
        %p547 = pneg %p54
        %p548 = pneg %p51
        %p549 = pneg %p75
        %p550 = pneg %p72
        %p551 = pneg %p96
        %p552 = pneg %p93
        %p553 = pneg %p117
        %p554 = pneg %p114
        %p555 = pneg %p138
        %p556 = pneg %p135
        %p557 = pneg %p159
        %p558 = pneg %p156
        %p559 = pneg %p180
        %p560 = pneg %p177
        %p561 = pneg %p201
        %p562 = pneg %p198
        %p563 = pneg %p222
        %p564 = pneg %p219
        %p565 = pneg %p243
        %p566 = pneg %p240
        %p567 = pneg %p264
        %p568 = pneg %p261
        %p569 = pneg %p285
        %p570 = pneg %p282
        %p571 = pneg %p306
        %p572 = pneg %p303
        %p573 = pneg %p327
        %p574 = pneg %p324
        %p575 = pneg %p348
        %p576 = pneg %p345
        %p577 = pneg %p369
        %p578 = pneg %p366
        %p579 = pneg %p390
        %p580 = pneg %p387
        %p581 = pneg %p411
        %p582 = pneg %p408
        %p583 = pneg %p432
        %p584 = pneg %p429
        %p585 = pneg %p458
        %p586 = pneg %p455
        %s587 = sand.u32 %s445, 1
        %s588 = scalar_lea.sflag [#allocation4], %s587
        %s589 = sand.u32 %s445, 1
        %s590 = scalar_lea.vmem [#allocation3], %s589
        %p591 = scmp.lt.s32.totalorder %s33, 1
        %s592 = scalar_select %p591, %s33, 1
        %s593 = scalar_lea.vmem %s0, %s592
        %v594 = vld [vmem:[%s593] sm:$0x1]
        %vm595 = vcmask 253952
        %596 = vst.msk [vmem:[#allocation2] sm:$0x1] %vm595, 0.0
        %v597 = vld [vmem:[%s1] sm:$0xff]
        %v598 = vld [vmem:[%s1 + $0x8] sm:$0xff]
        %v599 = vld [vmem:[%s1 + $0x10] sm:$0xff]
        %v600 = vld [vmem:[%s1 + $0x18] sm:$0xff]
        %v601 = vld [vmem:[%s1 + $0x20] sm:$0xff]
        %v602 = vld [vmem:[%s1 + $0x28] sm:$0xff]
        %v603 = vld [vmem:[%s1 + $0x30] sm:$0xff]
        %v604 = vld [vmem:[%s1 + $0x38] sm:$0xff]
        %v605 = vld [vmem:[%s1 + $0x40] sm:$0xff]
        %v606 = vld [vmem:[%s1 + $0x48] sm:$0xff]
        %v607 = vld [vmem:[%s1 + $0x50] sm:$0xff]
        %v608 = vld [vmem:[%s1 + $0x58] sm:$0xff]
        %v609 = vld [vmem:[%s1 + $0x60] sm:$0xff]
        %v610 = vld [vmem:[%s1 + $0x68] sm:$0xff]
        %v611 = vld [vmem:[%s1 + $0x70] sm:$0xff]
        %v612 = vld [vmem:[%s1 + $0x78] sm:$0xff]
        %613 = vmatprep.subr.mxu0 0.0
        %614 = vmatpush1.msra.mxu0 %v612
        %615 = vmatprep.subr.mxu0 0.0
        %616 = vmatpush1.msra.mxu0 %v611
        %617 = vmatprep.subr.mxu0 0.0
        %618 = vmatpush1.msra.mxu0 %v610
        %619 = vmatprep.subr.mxu0 0.0
        %620 = vmatpush1.msra.mxu0 %v609
        %621 = vmatprep.subr.mxu0 0.0
        %622 = vmatpush1.msra.mxu0 %v608
        %623 = vmatprep.subr.mxu0 0.0
        %624 = vmatpush1.msra.mxu0 %v607
        %625 = vmatprep.subr.mxu0 0.0
        %626 = vmatpush1.msra.mxu0 %v606
        %627 = vmatprep.subr.mxu0 0.0
        %628 = vmatpush1.msra.mxu0 %v605
        %629 = vmatprep.subr.mxu0 0.0
        %630 = vmatpush1.msra.mxu0 %v604
        %631 = vmatprep.subr.mxu0 0.0
        %632 = vmatpush1.msra.mxu0 %v603
        %633 = vmatprep.subr.mxu0 0.0
        %634 = vmatpush1.msra.mxu0 %v602
        %635 = vmatprep.subr.mxu0 0.0
        %636 = vmatpush1.msra.mxu0 %v601
        %637 = vmatprep.subr.mxu0 0.0
        %638 = vmatpush1.msra.mxu0 %v600
        %639 = vmatprep.subr.mxu0 0.0
        %640 = vmatpush1.msra.mxu0 %v599
        %641 = vmatprep.subr.mxu0 0.0
        %642 = vmatpush1.msra.mxu0 %v598
        %643 = vmatprep.subr.mxu0 0.0
        %644 = vmatpush1.msra.mxu0 %v597
        %645 = vmatprep.subr.mxu0 0.0
        %646 = vmatpush2.msra.mxu0 0.0
        %647 = vmatprep.subr.mxu0 0.0
        %648 = vmatpush2.msra.mxu0 0.0
        %649 = vmatprep.subr.mxu0 0.0
        %650 = vmatpush2.msra.mxu0 0.0
        %651 = vmatprep.subr.mxu0 0.0
        %652 = vmatpush2.msra.mxu0 0.0
        %653 = vmatprep.subr.mxu0 0.0
        %654 = vmatpush2.msra.mxu0 0.0
        %655 = vmatprep.subr.mxu0 0.0
        %656 = vmatpush2.msra.mxu0 0.0
        %657 = vmatprep.subr.mxu0 0.0
        %658 = vmatpush2.msra.mxu0 0.0
        %659 = vmatprep.subr.mxu0 0.0
        %660 = vmatpush2.msra.mxu0 0.0
        %661 = vmatprep.subr.mxu0 0.0
        %662 = vmatpush2.msra.mxu0 0.0
        %663 = vmatprep.subr.mxu0 0.0
        %664 = vmatpush2.msra.mxu0 0.0
        %665 = vmatprep.subr.mxu0 0.0
        %666 = vmatpush2.msra.mxu0 0.0
        %667 = vmatprep.subr.mxu0 0.0
        %668 = vmatpush2.msra.mxu0 0.0
        %669 = vmatprep.subr.mxu0 0.0
        %670 = vmatpush2.msra.mxu0 0.0
        %671 = vmatprep.subr.mxu0 0.0
        %672 = vmatpush2.msra.mxu0 0.0
        %673 = vmatprep.subr.mxu0 0.0
        %674 = vmatpush2.msra.mxu0 0.0
        %675 = vmatprep.subr.mxu0 0.0
        %676 = vmatpush2.msra.mxu0 0.0
        %677 = vmatprep.mubr.f32.mxu0 0.0
        %678 = vmatmul.mubr.f32.gmra.mxu0 %v594
        %v679 = vpop.f32.mrf.mxu0
        %v680 = vadd.f32 0.0, %v679
        %v681 = vpop.f32.mrf.mxu0
        %682 = vdwg.mxu0
        %683 = vst.msk [vmem:[#allocation2 + $0x1] sm:$0x1] %vm595, %v680
        %s684 = scalar_lea.vmem %s1, 128
        %v685 = vld [vmem:[%s684] sm:$0xff]
        %v686 = vld [vmem:[%s684 + $0x8] sm:$0xff]
        %v687 = vld [vmem:[%s684 + $0x10] sm:$0xff]
        %v688 = vld [vmem:[%s684 + $0x18] sm:$0xff]
        %v689 = vld [vmem:[%s684 + $0x20] sm:$0xff]
        %v690 = vld [vmem:[%s684 + $0x28] sm:$0xff]
        %v691 = vld [vmem:[%s684 + $0x30] sm:$0xff]
        %v692 = vld [vmem:[%s684 + $0x38] sm:$0xff]
        %v693 = vld [vmem:[%s684 + $0x40] sm:$0xff]
        %v694 = vld [vmem:[%s684 + $0x48] sm:$0xff]
        %v695 = vld [vmem:[%s684 + $0x50] sm:$0xff]
        %v696 = vld [vmem:[%s684 + $0x58] sm:$0xff]
        %v697 = vld [vmem:[%s684 + $0x60] sm:$0xff]
        %v698 = vld [vmem:[%s684 + $0x68] sm:$0xff]
        %v699 = vld [vmem:[%s684 + $0x70] sm:$0xff]
        %v700 = vld [vmem:[%s684 + $0x78] sm:$0xff]
        %701 = vmatprep.subr.mxu0 0.0
        %702 = vmatpush1.msra.mxu0 %v700
        %703 = vmatprep.subr.mxu0 0.0
        %704 = vmatpush1.msra.mxu0 %v699
        %705 = vmatprep.subr.mxu0 0.0
        %706 = vmatpush1.msra.mxu0 %v698
        %707 = vmatprep.subr.mxu0 0.0
        %708 = vmatpush1.msra.mxu0 %v697
        %709 = vmatprep.subr.mxu0 0.0
        %710 = vmatpush1.msra.mxu0 %v696
        %711 = vmatprep.subr.mxu0 0.0
        %712 = vmatpush1.msra.mxu0 %v695
        %713 = vmatprep.subr.mxu0 0.0
        %714 = vmatpush1.msra.mxu0 %v694
        %715 = vmatprep.subr.mxu0 0.0
        %716 = vmatpush1.msra.mxu0 %v693
        %717 = vmatprep.subr.mxu0 0.0
        %718 = vmatpush1.msra.mxu0 %v692
        %719 = vmatprep.subr.mxu0 0.0
        %720 = vmatpush1.msra.mxu0 %v691
        %721 = vmatprep.subr.mxu0 0.0
        %722 = vmatpush1.msra.mxu0 %v690
        %723 = vmatprep.subr.mxu0 0.0
        %724 = vmatpush1.msra.mxu0 %v689
        %725 = vmatprep.subr.mxu0 0.0
        %726 = vmatpush1.msra.mxu0 %v688
        %727 = vmatprep.subr.mxu0 0.0
        %728 = vmatpush1.msra.mxu0 %v687
        %729 = vmatprep.subr.mxu0 0.0
        %730 = vmatpush1.msra.mxu0 %v686
        %731 = vmatprep.subr.mxu0 0.0
        %732 = vmatpush1.msra.mxu0 %v685
        %733 = vmatprep.subr.mxu0 0.0
        %734 = vmatpush2.msra.mxu0 0.0
        %735 = vmatprep.subr.mxu0 0.0
        %736 = vmatpush2.msra.mxu0 0.0
        %737 = vmatprep.subr.mxu0 0.0
        %738 = vmatpush2.msra.mxu0 0.0
        %739 = vmatprep.subr.mxu0 0.0
        %740 = vmatpush2.msra.mxu0 0.0
        %741 = vmatprep.subr.mxu0 0.0
        %742 = vmatpush2.msra.mxu0 0.0
        %743 = vmatprep.subr.mxu0 0.0
        %744 = vmatpush2.msra.mxu0 0.0
        %745 = vmatprep.subr.mxu0 0.0
        %746 = vmatpush2.msra.mxu0 0.0
        %747 = vmatprep.subr.mxu0 0.0
        %748 = vmatpush2.msra.mxu0 0.0
        %749 = vmatprep.subr.mxu0 0.0
        %750 = vmatpush2.msra.mxu0 0.0
        %751 = vmatprep.subr.mxu0 0.0
        %752 = vmatpush2.msra.mxu0 0.0
        %753 = vmatprep.subr.mxu0 0.0
        %754 = vmatpush2.msra.mxu0 0.0
        %755 = vmatprep.subr.mxu0 0.0
        %756 = vmatpush2.msra.mxu0 0.0
        %757 = vmatprep.subr.mxu0 0.0
        %758 = vmatpush2.msra.mxu0 0.0
        %759 = vmatprep.subr.mxu0 0.0
        %760 = vmatpush2.msra.mxu0 0.0
        %761 = vmatprep.subr.mxu0 0.0
        %762 = vmatpush2.msra.mxu0 0.0
        %763 = vmatprep.subr.mxu0 0.0
        %764 = vmatpush2.msra.mxu0 0.0
        %765 = vmatprep.mubr.f32.mxu0 0.0
        %766 = vmatmul.mubr.f32.gmra.mxu0 %v594
        %v767 = vpop.f32.mrf.mxu0
        %v768 = vadd.f32 0.0, %v767
        %v769 = vpop.f32.mrf.mxu0
        %770 = vdwg.mxu0
        %771 = vst.msk [vmem:[#allocation2 + $0x2] sm:$0x1] %vm595, %v768
        %s772 = scalar_lea.vmem %s1, 256
        %v773 = vld [vmem:[%s772] sm:$0xff]
        %v774 = vld [vmem:[%s772 + $0x8] sm:$0xff]
        %v775 = vld [vmem:[%s772 + $0x10] sm:$0xff]
        %v776 = vld [vmem:[%s772 + $0x18] sm:$0xff]
        %v777 = vld [vmem:[%s772 + $0x20] sm:$0xff]
        %v778 = vld [vmem:[%s772 + $0x28] sm:$0xff]
        %v779 = vld [vmem:[%s772 + $0x30] sm:$0xff]
        %v780 = vld [vmem:[%s772 + $0x38] sm:$0xff]
        %v781 = vld [vmem:[%s772 + $0x40] sm:$0xff]
        %v782 = vld [vmem:[%s772 + $0x48] sm:$0xff]
        %v783 = vld [vmem:[%s772 + $0x50] sm:$0xff]
        %v784 = vld [vmem:[%s772 + $0x58] sm:$0xff]
        %v785 = vld [vmem:[%s772 + $0x60] sm:$0xff]
        %v786 = vld [vmem:[%s772 + $0x68] sm:$0xff]
        %v787 = vld [vmem:[%s772 + $0x70] sm:$0xff]
        %v788 = vld [vmem:[%s772 + $0x78] sm:$0xff]
        %789 = vmatprep.subr.mxu0 0.0
        %790 = vmatpush1.msra.mxu0 %v788
        %791 = vmatprep.subr.mxu0 0.0
        %792 = vmatpush1.msra.mxu0 %v787
        %793 = vmatprep.subr.mxu0 0.0
        %794 = vmatpush1.msra.mxu0 %v786
        %795 = vmatprep.subr.mxu0 0.0
        %796 = vmatpush1.msra.mxu0 %v785
        %797 = vmatprep.subr.mxu0 0.0
        %798 = vmatpush1.msra.mxu0 %v784
        %799 = vmatprep.subr.mxu0 0.0
        %800 = vmatpush1.msra.mxu0 %v783
        %801 = vmatprep.subr.mxu0 0.0
        %802 = vmatpush1.msra.mxu0 %v782
        %803 = vmatprep.subr.mxu0 0.0
        %804 = vmatpush1.msra.mxu0 %v781
        %805 = vmatprep.subr.mxu0 0.0
        %806 = vmatpush1.msra.mxu0 %v780
        %807 = vmatprep.subr.mxu0 0.0
        %808 = vmatpush1.msra.mxu0 %v779
        %809 = vmatprep.subr.mxu0 0.0
        %810 = vmatpush1.msra.mxu0 %v778
        %811 = vmatprep.subr.mxu0 0.0
        %812 = vmatpush1.msra.mxu0 %v777
        %813 = vmatprep.subr.mxu0 0.0
        %814 = vmatpush1.msra.mxu0 %v776
        %815 = vmatprep.subr.mxu0 0.0
        %816 = vmatpush1.msra.mxu0 %v775
        %817 = vmatprep.subr.mxu0 0.0
        %818 = vmatpush1.msra.mxu0 %v774
        %819 = vmatprep.subr.mxu0 0.0
        %820 = vmatpush1.msra.mxu0 %v773
        %821 = vmatprep.subr.mxu0 0.0
        %822 = vmatpush2.msra.mxu0 0.0
        %823 = vmatprep.subr.mxu0 0.0
        %824 = vmatpush2.msra.mxu0 0.0
        %825 = vmatprep.subr.mxu0 0.0
        %826 = vmatpush2.msra.mxu0 0.0
        %827 = vmatprep.subr.mxu0 0.0
        %828 = vmatpush2.msra.mxu0 0.0
        %829 = vmatprep.subr.mxu0 0.0
        %830 = vmatpush2.msra.mxu0 0.0
        %831 = vmatprep.subr.mxu0 0.0
        %832 = vmatpush2.msra.mxu0 0.0
        %833 = vmatprep.subr.mxu0 0.0
        %834 = vmatpush2.msra.mxu0 0.0
        %835 = vmatprep.subr.mxu0 0.0
        %836 = vmatpush2.msra.mxu0 0.0
        %837 = vmatprep.subr.mxu0 0.0
        %838 = vmatpush2.msra.mxu0 0.0
        %839 = vmatprep.subr.mxu0 0.0
        %840 = vmatpush2.msra.mxu0 0.0
        %841 = vmatprep.subr.mxu0 0.0
        %842 = vmatpush2.msra.mxu0 0.0
        %843 = vmatprep.subr.mxu0 0.0
        %844 = vmatpush2.msra.mxu0 0.0
        %845 = vmatprep.subr.mxu0 0.0
        %846 = vmatpush2.msra.mxu0 0.0
        %847 = vmatprep.subr.mxu0 0.0
        %848 = vmatpush2.msra.mxu0 0.0
        %849 = vmatprep.subr.mxu0 0.0
        %850 = vmatpush2.msra.mxu0 0.0
        %851 = vmatprep.subr.mxu0 0.0
        %852 = vmatpush2.msra.mxu0 0.0
        %853 = vmatprep.mubr.f32.mxu0 0.0
        %854 = vmatmul.mubr.f32.gmra.mxu0 %v594
        %v855 = vpop.f32.mrf.mxu0
        %v856 = vadd.f32 0.0, %v855
        %v857 = vpop.f32.mrf.mxu0
        %858 = vdwg.mxu0
        %859 = vst.msk [vmem:[#allocation2 + $0x3] sm:$0x1] %vm595, %v856
        %s860 = scalar_lea.vmem %s1, 384
        %v861 = vld [vmem:[%s860] sm:$0xff]
        %v862 = vld [vmem:[%s860 + $0x8] sm:$0xff]
        %v863 = vld [vmem:[%s860 + $0x10] sm:$0xff]
        %v864 = vld [vmem:[%s860 + $0x18] sm:$0xff]
        %v865 = vld [vmem:[%s860 + $0x20] sm:$0xff]
        %v866 = vld [vmem:[%s860 + $0x28] sm:$0xff]
        %v867 = vld [vmem:[%s860 + $0x30] sm:$0xff]
        %v868 = vld [vmem:[%s860 + $0x38] sm:$0xff]
        %v869 = vld [vmem:[%s860 + $0x40] sm:$0xff]
        %v870 = vld [vmem:[%s860 + $0x48] sm:$0xff]
        %v871 = vld [vmem:[%s860 + $0x50] sm:$0xff]
        %v872 = vld [vmem:[%s860 + $0x58] sm:$0xff]
        %v873 = vld [vmem:[%s860 + $0x60] sm:$0xff]
        %v874 = vld [vmem:[%s860 + $0x68] sm:$0xff]
        %v875 = vld [vmem:[%s860 + $0x70] sm:$0xff]
        %v876 = vld [vmem:[%s860 + $0x78] sm:$0xff]
        %877 = vmatprep.subr.mxu0 0.0
        %878 = vmatpush1.msra.mxu0 %v876
        %879 = vmatprep.subr.mxu0 0.0
        %880 = vmatpush1.msra.mxu0 %v875
        %881 = vmatprep.subr.mxu0 0.0
        %882 = vmatpush1.msra.mxu0 %v874
        %883 = vmatprep.subr.mxu0 0.0
        %884 = vmatpush1.msra.mxu0 %v873
        %885 = vmatprep.subr.mxu0 0.0
        %886 = vmatpush1.msra.mxu0 %v872
        %887 = vmatprep.subr.mxu0 0.0
        %888 = vmatpush1.msra.mxu0 %v871
        %889 = vmatprep.subr.mxu0 0.0
        %890 = vmatpush1.msra.mxu0 %v870
        %891 = vmatprep.subr.mxu0 0.0
        %892 = vmatpush1.msra.mxu0 %v869
        %893 = vmatprep.subr.mxu0 0.0
        %894 = vmatpush1.msra.mxu0 %v868
        %895 = vmatprep.subr.mxu0 0.0
        %896 = vmatpush1.msra.mxu0 %v867
        %897 = vmatprep.subr.mxu0 0.0
        %898 = vmatpush1.msra.mxu0 %v866
        %899 = vmatprep.subr.mxu0 0.0
        %900 = vmatpush1.msra.mxu0 %v865
        %901 = vmatprep.subr.mxu0 0.0
        %902 = vmatpush1.msra.mxu0 %v864
        %903 = vmatprep.subr.mxu0 0.0
        %904 = vmatpush1.msra.mxu0 %v863
        %905 = vmatprep.subr.mxu0 0.0
        %906 = vmatpush1.msra.mxu0 %v862
        %907 = vmatprep.subr.mxu0 0.0
        %908 = vmatpush1.msra.mxu0 %v861
        %909 = vmatprep.subr.mxu0 0.0
        %910 = vmatpush2.msra.mxu0 0.0
        %911 = vmatprep.subr.mxu0 0.0
        %912 = vmatpush2.msra.mxu0 0.0
        %913 = vmatprep.subr.mxu0 0.0
        %914 = vmatpush2.msra.mxu0 0.0
        %915 = vmatprep.subr.mxu0 0.0
        %916 = vmatpush2.msra.mxu0 0.0
        %917 = vmatprep.subr.mxu0 0.0
        %918 = vmatpush2.msra.mxu0 0.0
        %919 = vmatprep.subr.mxu0 0.0
        %920 = vmatpush2.msra.mxu0 0.0
        %921 = vmatprep.subr.mxu0 0.0
        %922 = vmatpush2.msra.mxu0 0.0
        %923 = vmatprep.subr.mxu0 0.0
        %924 = vmatpush2.msra.mxu0 0.0
        %925 = vmatprep.subr.mxu0 0.0
        %926 = vmatpush2.msra.mxu0 0.0
        %927 = vmatprep.subr.mxu0 0.0
        %928 = vmatpush2.msra.mxu0 0.0
        %929 = vmatprep.subr.mxu0 0.0
        %930 = vmatpush2.msra.mxu0 0.0
        %931 = vmatprep.subr.mxu0 0.0
        %932 = vmatpush2.msra.mxu0 0.0
        %933 = vmatprep.subr.mxu0 0.0
        %934 = vmatpush2.msra.mxu0 0.0
        %935 = vmatprep.subr.mxu0 0.0
        %936 = vmatpush2.msra.mxu0 0.0
        %937 = vmatprep.subr.mxu0 0.0
        %938 = vmatpush2.msra.mxu0 0.0
        %939 = vmatprep.subr.mxu0 0.0
        %940 = vmatpush2.msra.mxu0 0.0
        %941 = vmatprep.mubr.f32.mxu0 0.0
        %942 = vmatmul.mubr.f32.gmra.mxu0 %v594
        %v943 = vpop.f32.mrf.mxu0
        %v944 = vadd.f32 0.0, %v943
        %v945 = vpop.f32.mrf.mxu0
        %946 = vdwg.mxu0
        %947 = vst.msk [vmem:[#allocation2 + $0x4] sm:$0x1] %vm595, %v944
        %v948 = vld [vmem:[#allocation2] sm:$0x1f]
        %v949 = vld [vmem:[%s2] sm:$0x1f]
        %v950 = vadd.f32 %v948, %v949
        %v951 = vld [vmem:[%s3] sm:$0x1]
        %v952 = vld [vmem:[%s4] sm:$0x1]
        %vm953 = vcmask 258048
        %v954 = vsel %vm953, %v950, 0.0
        %955 = vadd.xlane.f32.xlu0 %v954
        %v956 = vpop.xlane.xlu0 %955
        %v957 = vrcp.pop 32.0
        %v958 = vmul.f32 %v956, %v957
        %v959 = vsub.f32 %v950, %v958
        %v960 = vmul.f32 %v959, %v959
        %v961 = vsel %vm953, %v960, 0.0
        %962 = vadd.xlane.f32.xlu0 %v961
        %v963 = vpop.xlane.xlu0 %962
        %v964 = vmul.f32 %v963, %v957
        %v965 = vadd.f32 %v964, 1e-06
        %v966 = vrsqrt.pop %v965
        %v967 = vmul.f32 %v959, %v966
        %v969 = vlaneseq
        %v970 = vshrl.u32 %v969, 7
        %v971 = vsub.s32 0, %v970
        %v972 = vrot.slane %v951, %v971
        %v974 = vmul.f32 %v967, %v972
        %v976 = vlaneseq
        %v977 = vshrl.u32 %v976, 7
        %v978 = vsub.s32 0, %v977
        %v979 = vrot.slane %v952, %v978
        %v981 = vadd.f32 %v974, %v979
        %v982 = vld [vmem:[%s5] sm:$0xff]
        %v983 = vld [vmem:[%s5 + $0x8] sm:$0xff]
        %v984 = vld [vmem:[%s5 + $0x10] sm:$0xff]
        %v985 = vld [vmem:[%s5 + $0x18] sm:$0xff]
        %v986 = vld [vmem:[%s6] sm:$0x1]
        %v988 = vlaneseq
        %v989 = vshrl.u32 %v988, 7
        %v990 = vsub.s32 0, %v989
        %v991 = vrot.slane %v986, %v990
        %vm993 = vcmask 261120
        %v995 = vsel %vm993, %v981, 0
        %997 = vmatprep.subr.mxu0 0.0
        %998 = vmatpush1.msra.mxu0 0.0
        %999 = vmatprep.subr.mxu0 0.0
        %1000 = vmatpush1.msra.mxu0 0.0
        %1001 = vmatprep.subr.mxu0 0.0
        %1002 = vmatpush1.msra.mxu0 0.0
        %1003 = vmatprep.subr.mxu0 0.0
        %1004 = vmatpush1.msra.mxu0 0.0
        %1005 = vmatprep.subr.mxu0 0.0
        %1006 = vmatpush1.msra.mxu0 0.0
        %1007 = vmatprep.subr.mxu0 0.0
        %1008 = vmatpush1.msra.mxu0 0.0
        %1009 = vmatprep.subr.mxu0 0.0
        %1010 = vmatpush1.msra.mxu0 0.0
        %1011 = vmatprep.subr.mxu0 0.0
        %1012 = vmatpush1.msra.mxu0 0.0
        %1013 = vmatprep.subr.mxu0 0.0
        %1014 = vmatpush1.msra.mxu0 0.0
        %1015 = vmatprep.subr.mxu0 0.0
        %1016 = vmatpush1.msra.mxu0 0.0
        %1017 = vmatprep.subr.mxu0 0.0
        %1018 = vmatpush1.msra.mxu0 0.0
        %1019 = vmatprep.subr.mxu0 0.0
        %1020 = vmatpush1.msra.mxu0 0.0
        %1021 = vmatprep.subr.mxu0 0.0
        %1022 = vmatpush1.msra.mxu0 %v985
        %1023 = vmatprep.subr.mxu0 0.0
        %1024 = vmatpush1.msra.mxu0 %v984
        %1025 = vmatprep.subr.mxu0 0.0
        %1026 = vmatpush1.msra.mxu0 %v983
        %1027 = vmatprep.subr.mxu0 0.0
        %1028 = vmatpush1.msra.mxu0 %v982
        %1029 = vmatprep.subr.mxu0 0.0
        %1030 = vmatpush2.msra.mxu0 0.0
        %1031 = vmatprep.subr.mxu0 0.0
        %1032 = vmatpush2.msra.mxu0 0.0
        %1033 = vmatprep.subr.mxu0 0.0
        %1034 = vmatpush2.msra.mxu0 0.0
        %1035 = vmatprep.subr.mxu0 0.0
        %1036 = vmatpush2.msra.mxu0 0.0
        %1037 = vmatprep.subr.mxu0 0.0
        %1038 = vmatpush2.msra.mxu0 0.0
        %1039 = vmatprep.subr.mxu0 0.0
        %1040 = vmatpush2.msra.mxu0 0.0
        %1041 = vmatprep.subr.mxu0 0.0
        %1042 = vmatpush2.msra.mxu0 0.0
        %1043 = vmatprep.subr.mxu0 0.0
        %1044 = vmatpush2.msra.mxu0 0.0
        %1045 = vmatprep.subr.mxu0 0.0
        %1046 = vmatpush2.msra.mxu0 0.0
        %1047 = vmatprep.subr.mxu0 0.0
        %1048 = vmatpush2.msra.mxu0 0.0
        %1049 = vmatprep.subr.mxu0 0.0
        %1050 = vmatpush2.msra.mxu0 0.0
        %1051 = vmatprep.subr.mxu0 0.0
        %1052 = vmatpush2.msra.mxu0 0.0
        %1053 = vmatprep.subr.mxu0 0.0
        %1054 = vmatpush2.msra.mxu0 0.0
        %1055 = vmatprep.subr.mxu0 0.0
        %1056 = vmatpush2.msra.mxu0 0.0
        %1057 = vmatprep.subr.mxu0 0.0
        %1058 = vmatpush2.msra.mxu0 0.0
        %1059 = vmatprep.subr.mxu0 0.0
        %1060 = vmatpush2.msra.mxu0 0.0
        %1061 = vmatprep.mubr.f32.mxu0 0.0
        %1062 = vmatmul.mubr.f32.gmra.mxu0 %v995
        %v1063 = vpop.f32.mrf.mxu0
        %v1064 = vadd.f32 %v991, %v1063
        %v1065 = vpop.f32.mrf.mxu0
        %1066 = vdwg.mxu0
        %1068 = vrot.lane.b32.xlu0 %v1064, 96
        %v1069 = vpop.permute.xlu0 %1068
        %vm1070 = vcmask 64512
        %v1071 = vsel %vm1070, %v1064, 0
        %v1073 = vsel %vm1070, %v1069, 0
        %1075 = vmatprep.subr.mxu0 0.0
        %1076 = vmatpush1.xpose.msra.mxu0 0.0
        %1077 = vmatprep.subr.mxu0 0.0
        %1078 = vmatpush1.xpose.msra.mxu0 0.0
        %1079 = vmatprep.subr.mxu0 0.0
        %1080 = vmatpush1.xpose.msra.mxu0 0.0
        %1081 = vmatprep.subr.mxu0 0.0
        %1082 = vmatpush1.xpose.msra.mxu0 0.0
        %1083 = vmatprep.subr.mxu0 0.0
        %1084 = vmatpush1.xpose.msra.mxu0 0.0
        %1085 = vmatprep.subr.mxu0 0.0
        %1086 = vmatpush1.xpose.msra.mxu0 0.0
        %1087 = vmatprep.subr.mxu0 0.0
        %1088 = vmatpush1.xpose.msra.mxu0 0.0
        %1089 = vmatprep.subr.mxu0 0.0
        %1090 = vmatpush1.xpose.msra.mxu0 0.0
        %1091 = vmatprep.subr.mxu0 0.0
        %1092 = vmatpush1.xpose.msra.mxu0 0.0
        %1093 = vmatprep.subr.mxu0 0.0
        %1094 = vmatpush1.xpose.msra.mxu0 0.0
        %1095 = vmatprep.subr.mxu0 0.0
        %1096 = vmatpush1.xpose.msra.mxu0 0.0
        %1097 = vmatprep.subr.mxu0 0.0
        %1098 = vmatpush1.xpose.msra.mxu0 0.0
        %1099 = vmatprep.subr.mxu0 0.0
        %1100 = vmatpush1.xpose.msra.mxu0 0.0
        %1101 = vmatprep.subr.mxu0 0.0
        %1102 = vmatpush1.xpose.msra.mxu0 0.0
        %1103 = vmatprep.subr.mxu0 0.0
        %1104 = vmatpush1.xpose.msra.mxu0 0.0
        %1105 = vmatprep.subr.mxu0 0.0
        %1106 = vmatpush1.xpose.msra.mxu0 %v1073
        %1107 = vmatprep.subr.mxu0 0.0
        %1108 = vmatpush2.xpose.msra.mxu0 0.0
        %1109 = vmatprep.subr.mxu0 0.0
        %1110 = vmatpush2.xpose.msra.mxu0 0.0
        %1111 = vmatprep.subr.mxu0 0.0
        %1112 = vmatpush2.xpose.msra.mxu0 0.0
        %1113 = vmatprep.subr.mxu0 0.0
        %1114 = vmatpush2.xpose.msra.mxu0 0.0
        %1115 = vmatprep.subr.mxu0 0.0
        %1116 = vmatpush2.xpose.msra.mxu0 0.0
        %1117 = vmatprep.subr.mxu0 0.0
        %1118 = vmatpush2.xpose.msra.mxu0 0.0
        %1119 = vmatprep.subr.mxu0 0.0
        %1120 = vmatpush2.xpose.msra.mxu0 0.0
        %1121 = vmatprep.subr.mxu0 0.0
        %1122 = vmatpush2.xpose.msra.mxu0 0.0
        %1123 = vmatprep.subr.mxu0 0.0
        %1124 = vmatpush2.xpose.msra.mxu0 0.0
        %1125 = vmatprep.subr.mxu0 0.0
        %1126 = vmatpush2.xpose.msra.mxu0 0.0
        %1127 = vmatprep.subr.mxu0 0.0
        %1128 = vmatpush2.xpose.msra.mxu0 0.0
        %1129 = vmatprep.subr.mxu0 0.0
        %1130 = vmatpush2.xpose.msra.mxu0 0.0
        %1131 = vmatprep.subr.mxu0 0.0
        %1132 = vmatpush2.xpose.msra.mxu0 0.0
        %1133 = vmatprep.subr.mxu0 0.0
        %1134 = vmatpush2.xpose.msra.mxu0 0.0
        %1135 = vmatprep.subr.mxu0 0.0
        %1136 = vmatpush2.xpose.msra.mxu0 0.0
        %1137 = vmatprep.subr.mxu0 0.0
        %1138 = vmatpush2.xpose.msra.mxu0 0.0
        %1139 = vmatprep.mubr.f32.mxu0 0.0
        %1140 = vmatmul.mubr.f32.gmra.mxu0 %v1071
        %v1141 = vpop.f32.mrf.mxu0
        %v1142 = vadd.f32 0.0, %v1141
        %v1143 = vpop.f32.mrf.mxu0
        %1144 = vdwg.mxu0
        %v1145 = vmul.f32 %v1142, 0.35355338
        %vm1146 = vcmask 36864
        %v1147 = vsel %vm1146, %v1145, -inf
        %1148 = vmax.xlane.f32.xlu0 %v1147
        %v1149 = vpop.xlane.xlu0 %1148
        %v1150 = vsub.f32 %v1145, %v1149
        %v1151 = vmul.f32 %v1150, 1.442695
        %v1152 = vpow.pop %v1151
        %v1153 = vsel %vm1146, %v1152, 0.0
        %1154 = vadd.xlane.f32.xlu0 %v1153
        %v1155 = vpop.xlane.xlu0 %1154
        %v1156 = vrcp.pop %v1155
        %v1157 = vmul.f32 %v1152, %v1156
        %1158 = vrot.lane.b32.xlu0 %v1064, 64
        %v1159 = vpop.permute.xlu0 %1158
        %vm1160 = vcmask 39936
        %v1162 = vsel %vm1160, %v1157, 0
        %vm1164 = vcmask 1044480
        %v1165 = vsel %vm1164, %v1159, 0
        %1167 = vmatprep.subr.mxu0 0.0
        %1168 = vmatpush1.msra.mxu0 0.0
        %1169 = vmatprep.subr.mxu0 0.0
        %1170 = vmatpush1.msra.mxu0 0.0
        %1171 = vmatprep.subr.mxu0 0.0
        %1172 = vmatpush1.msra.mxu0 0.0
        %1173 = vmatprep.subr.mxu0 0.0
        %1174 = vmatpush1.msra.mxu0 0.0
        %1175 = vmatprep.subr.mxu0 0.0
        %1176 = vmatpush1.msra.mxu0 0.0
        %1177 = vmatprep.subr.mxu0 0.0
        %1178 = vmatpush1.msra.mxu0 0.0
        %1179 = vmatprep.subr.mxu0 0.0
        %1180 = vmatpush1.msra.mxu0 0.0
        %1181 = vmatprep.subr.mxu0 0.0
        %1182 = vmatpush1.msra.mxu0 0.0
        %1183 = vmatprep.subr.mxu0 0.0
        %1184 = vmatpush1.msra.mxu0 0.0
        %1185 = vmatprep.subr.mxu0 0.0
        %1186 = vmatpush1.msra.mxu0 0.0
        %1187 = vmatprep.subr.mxu0 0.0
        %1188 = vmatpush1.msra.mxu0 0.0
        %1189 = vmatprep.subr.mxu0 0.0
        %1190 = vmatpush1.msra.mxu0 0.0
        %1191 = vmatprep.subr.mxu0 0.0
        %1192 = vmatpush1.msra.mxu0 0.0
        %1193 = vmatprep.subr.mxu0 0.0
        %1194 = vmatpush1.msra.mxu0 0.0
        %1195 = vmatprep.subr.mxu0 0.0
        %1196 = vmatpush1.msra.mxu0 0.0
        %1197 = vmatprep.subr.mxu0 0.0
        %1198 = vmatpush1.msra.mxu0 %v1165
        %1199 = vmatprep.subr.mxu0 0.0
        %1200 = vmatpush2.msra.mxu0 0.0
        %1201 = vmatprep.subr.mxu0 0.0
        %1202 = vmatpush2.msra.mxu0 0.0
        %1203 = vmatprep.subr.mxu0 0.0
        %1204 = vmatpush2.msra.mxu0 0.0
        %1205 = vmatprep.subr.mxu0 0.0
        %1206 = vmatpush2.msra.mxu0 0.0
        %1207 = vmatprep.subr.mxu0 0.0
        %1208 = vmatpush2.msra.mxu0 0.0
        %1209 = vmatprep.subr.mxu0 0.0
        %1210 = vmatpush2.msra.mxu0 0.0
        %1211 = vmatprep.subr.mxu0 0.0
        %1212 = vmatpush2.msra.mxu0 0.0
        %1213 = vmatprep.subr.mxu0 0.0
        %1214 = vmatpush2.msra.mxu0 0.0
        %1215 = vmatprep.subr.mxu0 0.0
        %1216 = vmatpush2.msra.mxu0 0.0
        %1217 = vmatprep.subr.mxu0 0.0
        %1218 = vmatpush2.msra.mxu0 0.0
        %1219 = vmatprep.subr.mxu0 0.0
        %1220 = vmatpush2.msra.mxu0 0.0
        %1221 = vmatprep.subr.mxu0 0.0
        %1222 = vmatpush2.msra.mxu0 0.0
        %1223 = vmatprep.subr.mxu0 0.0
        %1224 = vmatpush2.msra.mxu0 0.0
        %1225 = vmatprep.subr.mxu0 0.0
        %1226 = vmatpush2.msra.mxu0 0.0
        %1227 = vmatprep.subr.mxu0 0.0
        %1228 = vmatpush2.msra.mxu0 0.0
        %1229 = vmatprep.subr.mxu0 0.0
        %1230 = vmatpush2.msra.mxu0 0.0
        %1231 = vmatprep.mubr.f32.mxu0 0.0
        %1232 = vmatmul.mubr.f32.gmra.mxu0 %v1162
        %v1233 = vpop.f32.mrf.mxu0
        %v1234 = vadd.f32 0.0, %v1233
        %v1235 = vpop.f32.mrf.mxu0
        %1236 = vdwg.mxu0
        %v1237 = vld [vmem:[%s7] sm:$0xff]
        %1238 = vrot.lane.b32.xlu0 %v1064, 120
        %v1239 = vpop.permute.xlu0 %1238
        %1240 = vrot.lane.b32.xlu0 %v1064, 88
        %v1241 = vpop.permute.xlu0 %1240
        %v1242 = vsel %vm1070, %v1239, 0
        %v1244 = vsel %vm1070, %v1241, 0
        %1246 = vmatprep.subr.mxu0 0.0
        %1247 = vmatpush1.xpose.msra.mxu0 0.0
        %1248 = vmatprep.subr.mxu0 0.0
        %1249 = vmatpush1.xpose.msra.mxu0 0.0
        %1250 = vmatprep.subr.mxu0 0.0
        %1251 = vmatpush1.xpose.msra.mxu0 0.0
        %1252 = vmatprep.subr.mxu0 0.0
        %1253 = vmatpush1.xpose.msra.mxu0 0.0
        %1254 = vmatprep.subr.mxu0 0.0
        %1255 = vmatpush1.xpose.msra.mxu0 0.0
        %1256 = vmatprep.subr.mxu0 0.0
        %1257 = vmatpush1.xpose.msra.mxu0 0.0
        %1258 = vmatprep.subr.mxu0 0.0
        %1259 = vmatpush1.xpose.msra.mxu0 0.0
        %1260 = vmatprep.subr.mxu0 0.0
        %1261 = vmatpush1.xpose.msra.mxu0 0.0
        %1262 = vmatprep.subr.mxu0 0.0
        %1263 = vmatpush1.xpose.msra.mxu0 0.0
        %1264 = vmatprep.subr.mxu0 0.0
        %1265 = vmatpush1.xpose.msra.mxu0 0.0
        %1266 = vmatprep.subr.mxu0 0.0
        %1267 = vmatpush1.xpose.msra.mxu0 0.0
        %1268 = vmatprep.subr.mxu0 0.0
        %1269 = vmatpush1.xpose.msra.mxu0 0.0
        %1270 = vmatprep.subr.mxu0 0.0
        %1271 = vmatpush1.xpose.msra.mxu0 0.0
        %1272 = vmatprep.subr.mxu0 0.0
        %1273 = vmatpush1.xpose.msra.mxu0 0.0
        %1274 = vmatprep.subr.mxu0 0.0
        %1275 = vmatpush1.xpose.msra.mxu0 0.0
        %1276 = vmatprep.subr.mxu0 0.0
        %1277 = vmatpush1.xpose.msra.mxu0 %v1244
        %1278 = vmatprep.subr.mxu0 0.0
        %1279 = vmatpush2.xpose.msra.mxu0 0.0
        %1280 = vmatprep.subr.mxu0 0.0
        %1281 = vmatpush2.xpose.msra.mxu0 0.0
        %1282 = vmatprep.subr.mxu0 0.0
        %1283 = vmatpush2.xpose.msra.mxu0 0.0
        %1284 = vmatprep.subr.mxu0 0.0
        %1285 = vmatpush2.xpose.msra.mxu0 0.0
        %1286 = vmatprep.subr.mxu0 0.0
        %1287 = vmatpush2.xpose.msra.mxu0 0.0
        %1288 = vmatprep.subr.mxu0 0.0
        %1289 = vmatpush2.xpose.msra.mxu0 0.0
        %1290 = vmatprep.subr.mxu0 0.0
        %1291 = vmatpush2.xpose.msra.mxu0 0.0
        %1292 = vmatprep.subr.mxu0 0.0
        %1293 = vmatpush2.xpose.msra.mxu0 0.0
        %1294 = vmatprep.subr.mxu0 0.0
        %1295 = vmatpush2.xpose.msra.mxu0 0.0
        %1296 = vmatprep.subr.mxu0 0.0
        %1297 = vmatpush2.xpose.msra.mxu0 0.0
        %1298 = vmatprep.subr.mxu0 0.0
        %1299 = vmatpush2.xpose.msra.mxu0 0.0
        %1300 = vmatprep.subr.mxu0 0.0
        %1301 = vmatpush2.xpose.msra.mxu0 0.0
        %1302 = vmatprep.subr.mxu0 0.0
        %1303 = vmatpush2.xpose.msra.mxu0 0.0
        %1304 = vmatprep.subr.mxu0 0.0
        %1305 = vmatpush2.xpose.msra.mxu0 0.0
        %1306 = vmatprep.subr.mxu0 0.0
        %1307 = vmatpush2.xpose.msra.mxu0 0.0
        %1308 = vmatprep.subr.mxu0 0.0
        %1309 = vmatpush2.xpose.msra.mxu0 0.0
        %1310 = vmatprep.mubr.f32.mxu0 0.0
        %1311 = vmatmul.mubr.f32.gmra.mxu0 %v1242
        %v1312 = vpop.f32.mrf.mxu0
        %v1313 = vadd.f32 0.0, %v1312
        %v1314 = vpop.f32.mrf.mxu0
        %1315 = vdwg.mxu0
        %v1316 = vmul.f32 %v1313, 0.35355338
        %v1317 = vsel %vm1146, %v1316, -inf
        %1318 = vmax.xlane.f32.xlu0 %v1317
        %v1319 = vpop.xlane.xlu0 %1318
        %v1320 = vsub.f32 %v1316, %v1319
        %v1321 = vmul.f32 %v1320, 1.442695
        %v1322 = vpow.pop %v1321
        %v1323 = vsel %vm1146, %v1322, 0.0
        %1324 = vadd.xlane.f32.xlu0 %v1323
        %v1325 = vpop.xlane.xlu0 %1324
        %v1326 = vrcp.pop %v1325
        %v1327 = vmul.f32 %v1322, %v1326
        %1328 = vrot.lane.b32.xlu0 %v1064, 56
        %v1329 = vpop.permute.xlu0 %1328
        %v1331 = vsel %vm1160, %v1327, 0
        %v1333 = vsel %vm1164, %v1329, 0
        %1335 = vmatprep.subr.mxu0 0.0
        %1336 = vmatpush1.msra.mxu0 0.0
        %1337 = vmatprep.subr.mxu0 0.0
        %1338 = vmatpush1.msra.mxu0 0.0
        %1339 = vmatprep.subr.mxu0 0.0
        %1340 = vmatpush1.msra.mxu0 0.0
        %1341 = vmatprep.subr.mxu0 0.0
        %1342 = vmatpush1.msra.mxu0 0.0
        %1343 = vmatprep.subr.mxu0 0.0
        %1344 = vmatpush1.msra.mxu0 0.0
        %1345 = vmatprep.subr.mxu0 0.0
        %1346 = vmatpush1.msra.mxu0 0.0
        %1347 = vmatprep.subr.mxu0 0.0
        %1348 = vmatpush1.msra.mxu0 0.0
        %1349 = vmatprep.subr.mxu0 0.0
        %1350 = vmatpush1.msra.mxu0 0.0
        %1351 = vmatprep.subr.mxu0 0.0
        %1352 = vmatpush1.msra.mxu0 0.0
        %1353 = vmatprep.subr.mxu0 0.0
        %1354 = vmatpush1.msra.mxu0 0.0
        %1355 = vmatprep.subr.mxu0 0.0
        %1356 = vmatpush1.msra.mxu0 0.0
        %1357 = vmatprep.subr.mxu0 0.0
        %1358 = vmatpush1.msra.mxu0 0.0
        %1359 = vmatprep.subr.mxu0 0.0
        %1360 = vmatpush1.msra.mxu0 0.0
        %1361 = vmatprep.subr.mxu0 0.0
        %1362 = vmatpush1.msra.mxu0 0.0
        %1363 = vmatprep.subr.mxu0 0.0
        %1364 = vmatpush1.msra.mxu0 0.0
        %1365 = vmatprep.subr.mxu0 0.0
        %1366 = vmatpush1.msra.mxu0 %v1333
        %1367 = vmatprep.subr.mxu0 0.0
        %1368 = vmatpush2.msra.mxu0 0.0
        %1369 = vmatprep.subr.mxu0 0.0
        %1370 = vmatpush2.msra.mxu0 0.0
        %1371 = vmatprep.subr.mxu0 0.0
        %1372 = vmatpush2.msra.mxu0 0.0
        %1373 = vmatprep.subr.mxu0 0.0
        %1374 = vmatpush2.msra.mxu0 0.0
        %1375 = vmatprep.subr.mxu0 0.0
        %1376 = vmatpush2.msra.mxu0 0.0
        %1377 = vmatprep.subr.mxu0 0.0
        %1378 = vmatpush2.msra.mxu0 0.0
        %1379 = vmatprep.subr.mxu0 0.0
        %1380 = vmatpush2.msra.mxu0 0.0
        %1381 = vmatprep.subr.mxu0 0.0
        %1382 = vmatpush2.msra.mxu0 0.0
        %1383 = vmatprep.subr.mxu0 0.0
        %1384 = vmatpush2.msra.mxu0 0.0
        %1385 = vmatprep.subr.mxu0 0.0
        %1386 = vmatpush2.msra.mxu0 0.0
        %1387 = vmatprep.subr.mxu0 0.0
        %1388 = vmatpush2.msra.mxu0 0.0
        %1389 = vmatprep.subr.mxu0 0.0
        %1390 = vmatpush2.msra.mxu0 0.0
        %1391 = vmatprep.subr.mxu0 0.0
        %1392 = vmatpush2.msra.mxu0 0.0
        %1393 = vmatprep.subr.mxu0 0.0
        %1394 = vmatpush2.msra.mxu0 0.0
        %1395 = vmatprep.subr.mxu0 0.0
        %1396 = vmatpush2.msra.mxu0 0.0
        %1397 = vmatprep.subr.mxu0 0.0
        %1398 = vmatpush2.msra.mxu0 0.0
        %1399 = vmatprep.mubr.f32.mxu0 0.0
        %1400 = vmatmul.mubr.f32.gmra.mxu0 %v1331
        %v1401 = vpop.f32.mrf.mxu0
        %v1402 = vadd.f32 0.0, %v1401
        %v1403 = vpop.f32.mrf.mxu0
        %1404 = vdwg.mxu0
        %s1405 = scalar_lea.vmem %s7, 8
        %v1406 = vld [vmem:[%s1405] sm:$0xff]
        %v1408 = vsel %vm1070, %v1402, 0
        %1410 = vmatprep.subr.mxu0 0.0
        %1411 = vmatpush1.msra.mxu0 0.0
        %1412 = vmatprep.subr.mxu0 0.0
        %1413 = vmatpush1.msra.mxu0 0.0
        %1414 = vmatprep.subr.mxu0 0.0
        %1415 = vmatpush1.msra.mxu0 0.0
        %1416 = vmatprep.subr.mxu0 0.0
        %1417 = vmatpush1.msra.mxu0 0.0
        %1418 = vmatprep.subr.mxu0 0.0
        %1419 = vmatpush1.msra.mxu0 0.0
        %1420 = vmatprep.subr.mxu0 0.0
        %1421 = vmatpush1.msra.mxu0 0.0
        %1422 = vmatprep.subr.mxu0 0.0
        %1423 = vmatpush1.msra.mxu0 0.0
        %1424 = vmatprep.subr.mxu0 0.0
        %1425 = vmatpush1.msra.mxu0 0.0
        %1426 = vmatprep.subr.mxu0 0.0
        %1427 = vmatpush1.msra.mxu0 0.0
        %1428 = vmatprep.subr.mxu0 0.0
        %1429 = vmatpush1.msra.mxu0 0.0
        %1430 = vmatprep.subr.mxu0 0.0
        %1431 = vmatpush1.msra.mxu0 0.0
        %1432 = vmatprep.subr.mxu0 0.0
        %1433 = vmatpush1.msra.mxu0 0.0
        %1434 = vmatprep.subr.mxu0 0.0
        %1435 = vmatpush1.msra.mxu0 0.0
        %1436 = vmatprep.subr.mxu0 0.0
        %1437 = vmatpush1.msra.mxu0 0.0
        %1438 = vmatprep.subr.mxu0 0.0
        %1439 = vmatpush1.msra.mxu0 0.0
        %1440 = vmatprep.subr.mxu0 0.0
        %1441 = vmatpush1.msra.mxu0 %v1406
        %1442 = vmatprep.subr.mxu0 0.0
        %1443 = vmatpush2.msra.mxu0 0.0
        %1444 = vmatprep.subr.mxu0 0.0
        %1445 = vmatpush2.msra.mxu0 0.0
        %1446 = vmatprep.subr.mxu0 0.0
        %1447 = vmatpush2.msra.mxu0 0.0
        %1448 = vmatprep.subr.mxu0 0.0
        %1449 = vmatpush2.msra.mxu0 0.0
        %1450 = vmatprep.subr.mxu0 0.0
        %1451 = vmatpush2.msra.mxu0 0.0
        %1452 = vmatprep.subr.mxu0 0.0
        %1453 = vmatpush2.msra.mxu0 0.0
        %1454 = vmatprep.subr.mxu0 0.0
        %1455 = vmatpush2.msra.mxu0 0.0
        %1456 = vmatprep.subr.mxu0 0.0
        %1457 = vmatpush2.msra.mxu0 0.0
        %1458 = vmatprep.subr.mxu0 0.0
        %1459 = vmatpush2.msra.mxu0 0.0
        %1460 = vmatprep.subr.mxu0 0.0
        %1461 = vmatpush2.msra.mxu0 0.0
        %1462 = vmatprep.subr.mxu0 0.0
        %1463 = vmatpush2.msra.mxu0 0.0
        %1464 = vmatprep.subr.mxu0 0.0
        %1465 = vmatpush2.msra.mxu0 0.0
        %1466 = vmatprep.subr.mxu0 0.0
        %1467 = vmatpush2.msra.mxu0 0.0
        %1468 = vmatprep.subr.mxu0 0.0
        %1469 = vmatpush2.msra.mxu0 0.0
        %1470 = vmatprep.subr.mxu0 0.0
        %1471 = vmatpush2.msra.mxu0 0.0
        %1472 = vmatprep.subr.mxu0 0.0
        %1473 = vmatpush2.msra.mxu0 0.0
        %1474 = vmatprep.mubr.f32.mxu0 0.0
        %1475 = vmatmul.mubr.f32.gmra.mxu0 %v1408
        %v1476 = vpop.f32.mrf.mxu0
        %v1477 = vadd.f32 0.0, %v1476
        %v1478 = vpop.f32.mrf.mxu0
        %1479 = vdwg.mxu0
        %v1481 = vsel %vm1070, %v1234, 0
        %1483 = vmatprep.subr.mxu0 0.0
        %1484 = vmatpush1.msra.mxu0 0.0
        %1485 = vmatprep.subr.mxu0 0.0
        %1486 = vmatpush1.msra.mxu0 0.0
        %1487 = vmatprep.subr.mxu0 0.0
        %1488 = vmatpush1.msra.mxu0 0.0
        %1489 = vmatprep.subr.mxu0 0.0
        %1490 = vmatpush1.msra.mxu0 0.0
        %1491 = vmatprep.subr.mxu0 0.0
        %1492 = vmatpush1.msra.mxu0 0.0
        %1493 = vmatprep.subr.mxu0 0.0
        %1494 = vmatpush1.msra.mxu0 0.0
        %1495 = vmatprep.subr.mxu0 0.0
        %1496 = vmatpush1.msra.mxu0 0.0
        %1497 = vmatprep.subr.mxu0 0.0
        %1498 = vmatpush1.msra.mxu0 0.0
        %1499 = vmatprep.subr.mxu0 0.0
        %1500 = vmatpush1.msra.mxu0 0.0
        %1501 = vmatprep.subr.mxu0 0.0
        %1502 = vmatpush1.msra.mxu0 0.0
        %1503 = vmatprep.subr.mxu0 0.0
        %1504 = vmatpush1.msra.mxu0 0.0
        %1505 = vmatprep.subr.mxu0 0.0
        %1506 = vmatpush1.msra.mxu0 0.0
        %1507 = vmatprep.subr.mxu0 0.0
        %1508 = vmatpush1.msra.mxu0 0.0
        %1509 = vmatprep.subr.mxu0 0.0
        %1510 = vmatpush1.msra.mxu0 0.0
        %1511 = vmatprep.subr.mxu0 0.0
        %1512 = vmatpush1.msra.mxu0 0.0
        %1513 = vmatprep.subr.mxu0 0.0
        %1514 = vmatpush1.msra.mxu0 %v1237
        %1515 = vmatprep.subr.mxu0 0.0
        %1516 = vmatpush2.msra.mxu0 0.0
        %1517 = vmatprep.subr.mxu0 0.0
        %1518 = vmatpush2.msra.mxu0 0.0
        %1519 = vmatprep.subr.mxu0 0.0
        %1520 = vmatpush2.msra.mxu0 0.0
        %1521 = vmatprep.subr.mxu0 0.0
        %1522 = vmatpush2.msra.mxu0 0.0
        %1523 = vmatprep.subr.mxu0 0.0
        %1524 = vmatpush2.msra.mxu0 0.0
        %1525 = vmatprep.subr.mxu0 0.0
        %1526 = vmatpush2.msra.mxu0 0.0
        %1527 = vmatprep.subr.mxu0 0.0
        %1528 = vmatpush2.msra.mxu0 0.0
        %1529 = vmatprep.subr.mxu0 0.0
        %1530 = vmatpush2.msra.mxu0 0.0
        %1531 = vmatprep.subr.mxu0 0.0
        %1532 = vmatpush2.msra.mxu0 0.0
        %1533 = vmatprep.subr.mxu0 0.0
        %1534 = vmatpush2.msra.mxu0 0.0
        %1535 = vmatprep.subr.mxu0 0.0
        %1536 = vmatpush2.msra.mxu0 0.0
        %1537 = vmatprep.subr.mxu0 0.0
        %1538 = vmatpush2.msra.mxu0 0.0
        %1539 = vmatprep.subr.mxu0 0.0
        %1540 = vmatpush2.msra.mxu0 0.0
        %1541 = vmatprep.subr.mxu0 0.0
        %1542 = vmatpush2.msra.mxu0 0.0
        %1543 = vmatprep.subr.mxu0 0.0
        %1544 = vmatpush2.msra.mxu0 0.0
        %1545 = vmatprep.subr.mxu0 0.0
        %1546 = vmatpush2.msra.mxu0 0.0
        %1547 = vmatprep.mubr.f32.mxu0 0.0
        %1548 = vmatmul.mubr.f32.gmra.mxu0 %v1481
        %v1549 = vpop.f32.mrf.mxu0
        %v1550 = vadd.f32 %v1477, %v1549
        %v1551 = vpop.f32.mrf.mxu0
        %1552 = vdwg.mxu0
        %1553 = vrot.lane.b32.xlu0 %v1064, 112
        %v1554 = vpop.permute.xlu0 %1553
        %1555 = vrot.lane.b32.xlu0 %v1064, 80
        %v1556 = vpop.permute.xlu0 %1555
        %v1557 = vsel %vm1070, %v1554, 0
        %v1559 = vsel %vm1070, %v1556, 0
        %1561 = vmatprep.subr.mxu0 0.0
        %1562 = vmatpush1.xpose.msra.mxu0 0.0
        %1563 = vmatprep.subr.mxu0 0.0
        %1564 = vmatpush1.xpose.msra.mxu0 0.0
        %1565 = vmatprep.subr.mxu0 0.0
        %1566 = vmatpush1.xpose.msra.mxu0 0.0
        %1567 = vmatprep.subr.mxu0 0.0
        %1568 = vmatpush1.xpose.msra.mxu0 0.0
        %1569 = vmatprep.subr.mxu0 0.0
        %1570 = vmatpush1.xpose.msra.mxu0 0.0
        %1571 = vmatprep.subr.mxu0 0.0
        %1572 = vmatpush1.xpose.msra.mxu0 0.0
        %1573 = vmatprep.subr.mxu0 0.0
        %1574 = vmatpush1.xpose.msra.mxu0 0.0
        %1575 = vmatprep.subr.mxu0 0.0
        %1576 = vmatpush1.xpose.msra.mxu0 0.0
        %1577 = vmatprep.subr.mxu0 0.0
        %1578 = vmatpush1.xpose.msra.mxu0 0.0
        %1579 = vmatprep.subr.mxu0 0.0
        %1580 = vmatpush1.xpose.msra.mxu0 0.0
        %1581 = vmatprep.subr.mxu0 0.0
        %1582 = vmatpush1.xpose.msra.mxu0 0.0
        %1583 = vmatprep.subr.mxu0 0.0
        %1584 = vmatpush1.xpose.msra.mxu0 0.0
        %1585 = vmatprep.subr.mxu0 0.0
        %1586 = vmatpush1.xpose.msra.mxu0 0.0
        %1587 = vmatprep.subr.mxu0 0.0
        %1588 = vmatpush1.xpose.msra.mxu0 0.0
        %1589 = vmatprep.subr.mxu0 0.0
        %1590 = vmatpush1.xpose.msra.mxu0 0.0
        %1591 = vmatprep.subr.mxu0 0.0
        %1592 = vmatpush1.xpose.msra.mxu0 %v1559
        %1593 = vmatprep.subr.mxu0 0.0
        %1594 = vmatpush2.xpose.msra.mxu0 0.0
        %1595 = vmatprep.subr.mxu0 0.0
        %1596 = vmatpush2.xpose.msra.mxu0 0.0
        %1597 = vmatprep.subr.mxu0 0.0
        %1598 = vmatpush2.xpose.msra.mxu0 0.0
        %1599 = vmatprep.subr.mxu0 0.0
        %1600 = vmatpush2.xpose.msra.mxu0 0.0
        %1601 = vmatprep.subr.mxu0 0.0
        %1602 = vmatpush2.xpose.msra.mxu0 0.0
        %1603 = vmatprep.subr.mxu0 0.0
        %1604 = vmatpush2.xpose.msra.mxu0 0.0
        %1605 = vmatprep.subr.mxu0 0.0
        %1606 = vmatpush2.xpose.msra.mxu0 0.0
        %1607 = vmatprep.subr.mxu0 0.0
        %1608 = vmatpush2.xpose.msra.mxu0 0.0
        %1609 = vmatprep.subr.mxu0 0.0
        %1610 = vmatpush2.xpose.msra.mxu0 0.0
        %1611 = vmatprep.subr.mxu0 0.0
        %1612 = vmatpush2.xpose.msra.mxu0 0.0
        %1613 = vmatprep.subr.mxu0 0.0
        %1614 = vmatpush2.xpose.msra.mxu0 0.0
        %1615 = vmatprep.subr.mxu0 0.0
        %1616 = vmatpush2.xpose.msra.mxu0 0.0
        %1617 = vmatprep.subr.mxu0 0.0
        %1618 = vmatpush2.xpose.msra.mxu0 0.0
        %1619 = vmatprep.subr.mxu0 0.0
        %1620 = vmatpush2.xpose.msra.mxu0 0.0
        %1621 = vmatprep.subr.mxu0 0.0
        %1622 = vmatpush2.xpose.msra.mxu0 0.0
        %1623 = vmatprep.subr.mxu0 0.0
        %1624 = vmatpush2.xpose.msra.mxu0 0.0
        %1625 = vmatprep.mubr.f32.mxu0 0.0
        %1626 = vmatmul.mubr.f32.gmra.mxu0 %v1557
        %v1627 = vpop.f32.mrf.mxu0
        %v1628 = vadd.f32 0.0, %v1627
        %v1629 = vpop.f32.mrf.mxu0
        %1630 = vdwg.mxu0
        %v1631 = vmul.f32 %v1628, 0.35355338
        %v1632 = vsel %vm1146, %v1631, -inf
        %1633 = vmax.xlane.f32.xlu0 %v1632
        %v1634 = vpop.xlane.xlu0 %1633
        %v1635 = vsub.f32 %v1631, %v1634
        %v1636 = vmul.f32 %v1635, 1.442695
        %v1637 = vpow.pop %v1636
        %v1638 = vsel %vm1146, %v1637, 0.0
        %1639 = vadd.xlane.f32.xlu0 %v1638
        %v1640 = vpop.xlane.xlu0 %1639
        %v1641 = vrcp.pop %v1640
        %v1642 = vmul.f32 %v1637, %v1641
        %1643 = vrot.lane.b32.xlu0 %v1064, 48
        %v1644 = vpop.permute.xlu0 %1643
        %v1646 = vsel %vm1160, %v1642, 0
        %v1648 = vsel %vm1164, %v1644, 0
        %1650 = vmatprep.subr.mxu0 0.0
        %1651 = vmatpush1.msra.mxu0 0.0
        %1652 = vmatprep.subr.mxu0 0.0
        %1653 = vmatpush1.msra.mxu0 0.0
        %1654 = vmatprep.subr.mxu0 0.0
        %1655 = vmatpush1.msra.mxu0 0.0
        %1656 = vmatprep.subr.mxu0 0.0
        %1657 = vmatpush1.msra.mxu0 0.0
        %1658 = vmatprep.subr.mxu0 0.0
        %1659 = vmatpush1.msra.mxu0 0.0
        %1660 = vmatprep.subr.mxu0 0.0
        %1661 = vmatpush1.msra.mxu0 0.0
        %1662 = vmatprep.subr.mxu0 0.0
        %1663 = vmatpush1.msra.mxu0 0.0
        %1664 = vmatprep.subr.mxu0 0.0
        %1665 = vmatpush1.msra.mxu0 0.0
        %1666 = vmatprep.subr.mxu0 0.0
        %1667 = vmatpush1.msra.mxu0 0.0
        %1668 = vmatprep.subr.mxu0 0.0
        %1669 = vmatpush1.msra.mxu0 0.0
        %1670 = vmatprep.subr.mxu0 0.0
        %1671 = vmatpush1.msra.mxu0 0.0
        %1672 = vmatprep.subr.mxu0 0.0
        %1673 = vmatpush1.msra.mxu0 0.0
        %1674 = vmatprep.subr.mxu0 0.0
        %1675 = vmatpush1.msra.mxu0 0.0
        %1676 = vmatprep.subr.mxu0 0.0
        %1677 = vmatpush1.msra.mxu0 0.0
        %1678 = vmatprep.subr.mxu0 0.0
        %1679 = vmatpush1.msra.mxu0 0.0
        %1680 = vmatprep.subr.mxu0 0.0
        %1681 = vmatpush1.msra.mxu0 %v1648
        %1682 = vmatprep.subr.mxu0 0.0
        %1683 = vmatpush2.msra.mxu0 0.0
        %1684 = vmatprep.subr.mxu0 0.0
        %1685 = vmatpush2.msra.mxu0 0.0
        %1686 = vmatprep.subr.mxu0 0.0
        %1687 = vmatpush2.msra.mxu0 0.0
        %1688 = vmatprep.subr.mxu0 0.0
        %1689 = vmatpush2.msra.mxu0 0.0
        %1690 = vmatprep.subr.mxu0 0.0
        %1691 = vmatpush2.msra.mxu0 0.0
        %1692 = vmatprep.subr.mxu0 0.0
        %1693 = vmatpush2.msra.mxu0 0.0
        %1694 = vmatprep.subr.mxu0 0.0
        %1695 = vmatpush2.msra.mxu0 0.0
        %1696 = vmatprep.subr.mxu0 0.0
        %1697 = vmatpush2.msra.mxu0 0.0
        %1698 = vmatprep.subr.mxu0 0.0
        %1699 = vmatpush2.msra.mxu0 0.0
        %1700 = vmatprep.subr.mxu0 0.0
        %1701 = vmatpush2.msra.mxu0 0.0
        %1702 = vmatprep.subr.mxu0 0.0
        %1703 = vmatpush2.msra.mxu0 0.0
        %1704 = vmatprep.subr.mxu0 0.0
        %1705 = vmatpush2.msra.mxu0 0.0
        %1706 = vmatprep.subr.mxu0 0.0
        %1707 = vmatpush2.msra.mxu0 0.0
        %1708 = vmatprep.subr.mxu0 0.0
        %1709 = vmatpush2.msra.mxu0 0.0
        %1710 = vmatprep.subr.mxu0 0.0
        %1711 = vmatpush2.msra.mxu0 0.0
        %1712 = vmatprep.subr.mxu0 0.0
        %1713 = vmatpush2.msra.mxu0 0.0
        %1714 = vmatprep.mubr.f32.mxu0 0.0
        %1715 = vmatmul.mubr.f32.gmra.mxu0 %v1646
        %v1716 = vpop.f32.mrf.mxu0
        %v1717 = vadd.f32 0.0, %v1716
        %v1718 = vpop.f32.mrf.mxu0
        %1719 = vdwg.mxu0
        %s1720 = scalar_lea.vmem %s7, 16
        %v1721 = vld [vmem:[%s1720] sm:$0xff]
        %v1723 = vsel %vm1070, %v1717, 0
        %1725 = vmatprep.subr.mxu0 0.0
        %1726 = vmatpush1.msra.mxu0 0.0
        %1727 = vmatprep.subr.mxu0 0.0
        %1728 = vmatpush1.msra.mxu0 0.0
        %1729 = vmatprep.subr.mxu0 0.0
        %1730 = vmatpush1.msra.mxu0 0.0
        %1731 = vmatprep.subr.mxu0 0.0
        %1732 = vmatpush1.msra.mxu0 0.0
        %1733 = vmatprep.subr.mxu0 0.0
        %1734 = vmatpush1.msra.mxu0 0.0
        %1735 = vmatprep.subr.mxu0 0.0
        %1736 = vmatpush1.msra.mxu0 0.0
        %1737 = vmatprep.subr.mxu0 0.0
        %1738 = vmatpush1.msra.mxu0 0.0
        %1739 = vmatprep.subr.mxu0 0.0
        %1740 = vmatpush1.msra.mxu0 0.0
        %1741 = vmatprep.subr.mxu0 0.0
        %1742 = vmatpush1.msra.mxu0 0.0
        %1743 = vmatprep.subr.mxu0 0.0
        %1744 = vmatpush1.msra.mxu0 0.0
        %1745 = vmatprep.subr.mxu0 0.0
        %1746 = vmatpush1.msra.mxu0 0.0
        %1747 = vmatprep.subr.mxu0 0.0
        %1748 = vmatpush1.msra.mxu0 0.0
        %1749 = vmatprep.subr.mxu0 0.0
        %1750 = vmatpush1.msra.mxu0 0.0
        %1751 = vmatprep.subr.mxu0 0.0
        %1752 = vmatpush1.msra.mxu0 0.0
        %1753 = vmatprep.subr.mxu0 0.0
        %1754 = vmatpush1.msra.mxu0 0.0
        %1755 = vmatprep.subr.mxu0 0.0
        %1756 = vmatpush1.msra.mxu0 %v1721
        %1757 = vmatprep.subr.mxu0 0.0
        %1758 = vmatpush2.msra.mxu0 0.0
        %1759 = vmatprep.subr.mxu0 0.0
        %1760 = vmatpush2.msra.mxu0 0.0
        %1761 = vmatprep.subr.mxu0 0.0
        %1762 = vmatpush2.msra.mxu0 0.0
        %1763 = vmatprep.subr.mxu0 0.0
        %1764 = vmatpush2.msra.mxu0 0.0
        %1765 = vmatprep.subr.mxu0 0.0
        %1766 = vmatpush2.msra.mxu0 0.0
        %1767 = vmatprep.subr.mxu0 0.0
        %1768 = vmatpush2.msra.mxu0 0.0
        %1769 = vmatprep.subr.mxu0 0.0
        %1770 = vmatpush2.msra.mxu0 0.0
        %1771 = vmatprep.subr.mxu0 0.0
        %1772 = vmatpush2.msra.mxu0 0.0
        %1773 = vmatprep.subr.mxu0 0.0
        %1774 = vmatpush2.msra.mxu0 0.0
        %1775 = vmatprep.subr.mxu0 0.0
        %1776 = vmatpush2.msra.mxu0 0.0
        %1777 = vmatprep.subr.mxu0 0.0
        %1778 = vmatpush2.msra.mxu0 0.0
        %1779 = vmatprep.subr.mxu0 0.0
        %1780 = vmatpush2.msra.mxu0 0.0
        %1781 = vmatprep.subr.mxu0 0.0
        %1782 = vmatpush2.msra.mxu0 0.0
        %1783 = vmatprep.subr.mxu0 0.0
        %1784 = vmatpush2.msra.mxu0 0.0
        %1785 = vmatprep.subr.mxu0 0.0
        %1786 = vmatpush2.msra.mxu0 0.0
        %1787 = vmatprep.subr.mxu0 0.0
        %1788 = vmatpush2.msra.mxu0 0.0
        %1789 = vmatprep.mubr.f32.mxu0 0.0
        %1790 = vmatmul.mubr.f32.gmra.mxu0 %v1723
        %v1791 = vpop.f32.mrf.mxu0
        %v1792 = vadd.f32 0.0, %v1791
        %v1793 = vpop.f32.mrf.mxu0
        %1794 = vdwg.mxu0
        %v1795 = vadd.f32 %v1550, %v1792
        %1796 = vrot.lane.b32.xlu0 %v1064, 104
        %v1797 = vpop.permute.xlu0 %1796
        %1798 = vrot.lane.b32.xlu0 %v1064, 72
        %v1799 = vpop.permute.xlu0 %1798
        %v1800 = vsel %vm1070, %v1797, 0
        %v1802 = vsel %vm1070, %v1799, 0
        %1804 = vmatprep.subr.mxu0 0.0
        %1805 = vmatpush1.xpose.msra.mxu0 0.0
        %1806 = vmatprep.subr.mxu0 0.0
        %1807 = vmatpush1.xpose.msra.mxu0 0.0
        %1808 = vmatprep.subr.mxu0 0.0
        %1809 = vmatpush1.xpose.msra.mxu0 0.0
        %1810 = vmatprep.subr.mxu0 0.0
        %1811 = vmatpush1.xpose.msra.mxu0 0.0
        %1812 = vmatprep.subr.mxu0 0.0
        %1813 = vmatpush1.xpose.msra.mxu0 0.0
        %1814 = vmatprep.subr.mxu0 0.0
        %1815 = vmatpush1.xpose.msra.mxu0 0.0
        %1816 = vmatprep.subr.mxu0 0.0
        %1817 = vmatpush1.xpose.msra.mxu0 0.0
        %1818 = vmatprep.subr.mxu0 0.0
        %1819 = vmatpush1.xpose.msra.mxu0 0.0
        %1820 = vmatprep.subr.mxu0 0.0
        %1821 = vmatpush1.xpose.msra.mxu0 0.0
        %1822 = vmatprep.subr.mxu0 0.0
        %1823 = vmatpush1.xpose.msra.mxu0 0.0
        %1824 = vmatprep.subr.mxu0 0.0
        %1825 = vmatpush1.xpose.msra.mxu0 0.0
        %1826 = vmatprep.subr.mxu0 0.0
        %1827 = vmatpush1.xpose.msra.mxu0 0.0
        %1828 = vmatprep.subr.mxu0 0.0
        %1829 = vmatpush1.xpose.msra.mxu0 0.0
        %1830 = vmatprep.subr.mxu0 0.0
        %1831 = vmatpush1.xpose.msra.mxu0 0.0
        %1832 = vmatprep.subr.mxu0 0.0
        %1833 = vmatpush1.xpose.msra.mxu0 0.0
        %1834 = vmatprep.subr.mxu0 0.0
        %1835 = vmatpush1.xpose.msra.mxu0 %v1802
        %1836 = vmatprep.subr.mxu0 0.0
        %1837 = vmatpush2.xpose.msra.mxu0 0.0
        %1838 = vmatprep.subr.mxu0 0.0
        %1839 = vmatpush2.xpose.msra.mxu0 0.0
        %1840 = vmatprep.subr.mxu0 0.0
        %1841 = vmatpush2.xpose.msra.mxu0 0.0
        %1842 = vmatprep.subr.mxu0 0.0
        %1843 = vmatpush2.xpose.msra.mxu0 0.0
        %1844 = vmatprep.subr.mxu0 0.0
        %1845 = vmatpush2.xpose.msra.mxu0 0.0
        %1846 = vmatprep.subr.mxu0 0.0
        %1847 = vmatpush2.xpose.msra.mxu0 0.0
        %1848 = vmatprep.subr.mxu0 0.0
        %1849 = vmatpush2.xpose.msra.mxu0 0.0
        %1850 = vmatprep.subr.mxu0 0.0
        %1851 = vmatpush2.xpose.msra.mxu0 0.0
        %1852 = vmatprep.subr.mxu0 0.0
        %1853 = vmatpush2.xpose.msra.mxu0 0.0
        %1854 = vmatprep.subr.mxu0 0.0
        %1855 = vmatpush2.xpose.msra.mxu0 0.0
        %1856 = vmatprep.subr.mxu0 0.0
        %1857 = vmatpush2.xpose.msra.mxu0 0.0
        %1858 = vmatprep.subr.mxu0 0.0
        %1859 = vmatpush2.xpose.msra.mxu0 0.0
        %1860 = vmatprep.subr.mxu0 0.0
        %1861 = vmatpush2.xpose.msra.mxu0 0.0
        %1862 = vmatprep.subr.mxu0 0.0
        %1863 = vmatpush2.xpose.msra.mxu0 0.0
        %1864 = vmatprep.subr.mxu0 0.0
        %1865 = vmatpush2.xpose.msra.mxu0 0.0
        %1866 = vmatprep.subr.mxu0 0.0
        %1867 = vmatpush2.xpose.msra.mxu0 0.0
        %1868 = vmatprep.mubr.f32.mxu0 0.0
        %1869 = vmatmul.mubr.f32.gmra.mxu0 %v1800
        %v1870 = vpop.f32.mrf.mxu0
        %v1871 = vadd.f32 0.0, %v1870
        %v1872 = vpop.f32.mrf.mxu0
        %1873 = vdwg.mxu0
        %v1874 = vmul.f32 %v1871, 0.35355338
        %v1875 = vsel %vm1146, %v1874, -inf
        %1876 = vmax.xlane.f32.xlu0 %v1875
        %v1877 = vpop.xlane.xlu0 %1876
        %v1878 = vsub.f32 %v1874, %v1877
        %v1879 = vmul.f32 %v1878, 1.442695
        %v1880 = vpow.pop %v1879
        %v1881 = vsel %vm1146, %v1880, 0.0
        %1882 = vadd.xlane.f32.xlu0 %v1881
        %v1883 = vpop.xlane.xlu0 %1882
        %v1884 = vrcp.pop %v1883
        %v1885 = vmul.f32 %v1880, %v1884
        %1886 = vrot.lane.b32.xlu0 %v1064, 40
        %v1887 = vpop.permute.xlu0 %1886
        %v1889 = vsel %vm1160, %v1885, 0
        %v1891 = vsel %vm1164, %v1887, 0
        %1893 = vmatprep.subr.mxu0 0.0
        %1894 = vmatpush1.msra.mxu0 0.0
        %1895 = vmatprep.subr.mxu0 0.0
        %1896 = vmatpush1.msra.mxu0 0.0
        %1897 = vmatprep.subr.mxu0 0.0
        %1898 = vmatpush1.msra.mxu0 0.0
        %1899 = vmatprep.subr.mxu0 0.0
        %1900 = vmatpush1.msra.mxu0 0.0
        %1901 = vmatprep.subr.mxu0 0.0
        %1902 = vmatpush1.msra.mxu0 0.0
        %1903 = vmatprep.subr.mxu0 0.0
        %1904 = vmatpush1.msra.mxu0 0.0
        %1905 = vmatprep.subr.mxu0 0.0
        %1906 = vmatpush1.msra.mxu0 0.0
        %1907 = vmatprep.subr.mxu0 0.0
        %1908 = vmatpush1.msra.mxu0 0.0
        %1909 = vmatprep.subr.mxu0 0.0
        %1910 = vmatpush1.msra.mxu0 0.0
        %1911 = vmatprep.subr.mxu0 0.0
        %1912 = vmatpush1.msra.mxu0 0.0
        %1913 = vmatprep.subr.mxu0 0.0
        %1914 = vmatpush1.msra.mxu0 0.0
        %1915 = vmatprep.subr.mxu0 0.0
        %1916 = vmatpush1.msra.mxu0 0.0
        %1917 = vmatprep.subr.mxu0 0.0
        %1918 = vmatpush1.msra.mxu0 0.0
        %1919 = vmatprep.subr.mxu0 0.0
        %1920 = vmatpush1.msra.mxu0 0.0
        %1921 = vmatprep.subr.mxu0 0.0
        %1922 = vmatpush1.msra.mxu0 0.0
        %1923 = vmatprep.subr.mxu0 0.0
        %1924 = vmatpush1.msra.mxu0 %v1891
        %1925 = vmatprep.subr.mxu0 0.0
        %1926 = vmatpush2.msra.mxu0 0.0
        %1927 = vmatprep.subr.mxu0 0.0
        %1928 = vmatpush2.msra.mxu0 0.0
        %1929 = vmatprep.subr.mxu0 0.0
        %1930 = vmatpush2.msra.mxu0 0.0
        %1931 = vmatprep.subr.mxu0 0.0
        %1932 = vmatpush2.msra.mxu0 0.0
        %1933 = vmatprep.subr.mxu0 0.0
        %1934 = vmatpush2.msra.mxu0 0.0
        %1935 = vmatprep.subr.mxu0 0.0
        %1936 = vmatpush2.msra.mxu0 0.0
        %1937 = vmatprep.subr.mxu0 0.0
        %1938 = vmatpush2.msra.mxu0 0.0
        %1939 = vmatprep.subr.mxu0 0.0
        %1940 = vmatpush2.msra.mxu0 0.0
        %1941 = vmatprep.subr.mxu0 0.0
        %1942 = vmatpush2.msra.mxu0 0.0
        %1943 = vmatprep.subr.mxu0 0.0
        %1944 = vmatpush2.msra.mxu0 0.0
        %1945 = vmatprep.subr.mxu0 0.0
        %1946 = vmatpush2.msra.mxu0 0.0
        %1947 = vmatprep.subr.mxu0 0.0
        %1948 = vmatpush2.msra.mxu0 0.0
        %1949 = vmatprep.subr.mxu0 0.0
        %1950 = vmatpush2.msra.mxu0 0.0
        %1951 = vmatprep.subr.mxu0 0.0
        %1952 = vmatpush2.msra.mxu0 0.0
        %1953 = vmatprep.subr.mxu0 0.0
        %1954 = vmatpush2.msra.mxu0 0.0
        %1955 = vmatprep.subr.mxu0 0.0
        %1956 = vmatpush2.msra.mxu0 0.0
        %1957 = vmatprep.mubr.f32.mxu0 0.0
        %1958 = vmatmul.mubr.f32.gmra.mxu0 %v1889
        %v1959 = vpop.f32.mrf.mxu0
        %v1960 = vadd.f32 0.0, %v1959
        %v1961 = vpop.f32.mrf.mxu0
        %1962 = vdwg.mxu0
        %s1963 = scalar_lea.vmem %s7, 24
        %v1964 = vld [vmem:[%s1963] sm:$0xff]
        %v1966 = vsel %vm1070, %v1960, 0
        %1968 = vmatprep.subr.mxu0 0.0
        %1969 = vmatpush1.msra.mxu0 0.0
        %1970 = vmatprep.subr.mxu0 0.0
        %1971 = vmatpush1.msra.mxu0 0.0
        %1972 = vmatprep.subr.mxu0 0.0
        %1973 = vmatpush1.msra.mxu0 0.0
        %1974 = vmatprep.subr.mxu0 0.0
        %1975 = vmatpush1.msra.mxu0 0.0
        %1976 = vmatprep.subr.mxu0 0.0
        %1977 = vmatpush1.msra.mxu0 0.0
        %1978 = vmatprep.subr.mxu0 0.0
        %1979 = vmatpush1.msra.mxu0 0.0
        %1980 = vmatprep.subr.mxu0 0.0
        %1981 = vmatpush1.msra.mxu0 0.0
        %1982 = vmatprep.subr.mxu0 0.0
        %1983 = vmatpush1.msra.mxu0 0.0
        %1984 = vmatprep.subr.mxu0 0.0
        %1985 = vmatpush1.msra.mxu0 0.0
        %1986 = vmatprep.subr.mxu0 0.0
        %1987 = vmatpush1.msra.mxu0 0.0
        %1988 = vmatprep.subr.mxu0 0.0
        %1989 = vmatpush1.msra.mxu0 0.0
        %1990 = vmatprep.subr.mxu0 0.0
        %1991 = vmatpush1.msra.mxu0 0.0
        %1992 = vmatprep.subr.mxu0 0.0
        %1993 = vmatpush1.msra.mxu0 0.0
        %1994 = vmatprep.subr.mxu0 0.0
        %1995 = vmatpush1.msra.mxu0 0.0
        %1996 = vmatprep.subr.mxu0 0.0
        %1997 = vmatpush1.msra.mxu0 0.0
        %1998 = vmatprep.subr.mxu0 0.0
        %1999 = vmatpush1.msra.mxu0 %v1964
        %2000 = vmatprep.subr.mxu0 0.0
        %2001 = vmatpush2.msra.mxu0 0.0
        %2002 = vmatprep.subr.mxu0 0.0
        %2003 = vmatpush2.msra.mxu0 0.0
        %2004 = vmatprep.subr.mxu0 0.0
        %2005 = vmatpush2.msra.mxu0 0.0
        %2006 = vmatprep.subr.mxu0 0.0
        %2007 = vmatpush2.msra.mxu0 0.0
        %2008 = vmatprep.subr.mxu0 0.0
        %2009 = vmatpush2.msra.mxu0 0.0
        %2010 = vmatprep.subr.mxu0 0.0
        %2011 = vmatpush2.msra.mxu0 0.0
        %2012 = vmatprep.subr.mxu0 0.0
        %2013 = vmatpush2.msra.mxu0 0.0
        %2014 = vmatprep.subr.mxu0 0.0
        %2015 = vmatpush2.msra.mxu0 0.0
        %2016 = vmatprep.subr.mxu0 0.0
        %2017 = vmatpush2.msra.mxu0 0.0
        %2018 = vmatprep.subr.mxu0 0.0
        %2019 = vmatpush2.msra.mxu0 0.0
        %2020 = vmatprep.subr.mxu0 0.0
        %2021 = vmatpush2.msra.mxu0 0.0
        %2022 = vmatprep.subr.mxu0 0.0
        %2023 = vmatpush2.msra.mxu0 0.0
        %2024 = vmatprep.subr.mxu0 0.0
        %2025 = vmatpush2.msra.mxu0 0.0
        %2026 = vmatprep.subr.mxu0 0.0
        %2027 = vmatpush2.msra.mxu0 0.0
        %2028 = vmatprep.subr.mxu0 0.0
        %2029 = vmatpush2.msra.mxu0 0.0
        %2030 = vmatprep.subr.mxu0 0.0
        %2031 = vmatpush2.msra.mxu0 0.0
        %2032 = vmatprep.mubr.f32.mxu0 0.0
        %2033 = vmatmul.mubr.f32.gmra.mxu0 %v1966
        %v2034 = vpop.f32.mrf.mxu0
        %v2035 = vadd.f32 0.0, %v2034
        %v2036 = vpop.f32.mrf.mxu0
        %2037 = vdwg.mxu0
        %v2038 = vadd.f32 %v1795, %v2035
        %v2039 = vadd.f32 %v950, %v2038
        %v2040 = vld [vmem:[%s8] sm:$0x1]
        %v2042 = vlaneseq
        %v2043 = vshrl.u32 %v2042, 7
        %v2044 = vsub.s32 0, %v2043
        %v2045 = vrot.slane %v2040, %v2044
        %v2047 = vadd.f32 %v2039, %v2045
        %v2048 = vld [vmem:[%s9] sm:$0x1]
        %v2049 = vld [vmem:[%s10] sm:$0x1]
        %v2050 = vsel %vm953, %v2047, 0.0
        %2051 = vadd.xlane.f32.xlu0 %v2050
        %v2052 = vpop.xlane.xlu0 %2051
        %v2053 = vmul.f32 %v2052, %v957
        %v2054 = vsub.f32 %v2047, %v2053
        %v2055 = vmul.f32 %v2054, %v2054
        %v2056 = vsel %vm953, %v2055, 0.0
        %2057 = vadd.xlane.f32.xlu0 %v2056
        %v2058 = vpop.xlane.xlu0 %2057
        %v2059 = vmul.f32 %v2058, %v957
        %v2060 = vadd.f32 %v2059, 1e-06
        %v2061 = vrsqrt.pop %v2060
        %v2062 = vmul.f32 %v2054, %v2061
        %v2064 = vlaneseq
        %v2065 = vshrl.u32 %v2064, 7
        %v2066 = vsub.s32 0, %v2065
        %v2067 = vrot.slane %v2048, %v2066
        %v2069 = vmul.f32 %v2062, %v2067
        %v2071 = vlaneseq
        %v2072 = vshrl.u32 %v2071, 7
        %v2073 = vsub.s32 0, %v2072
        %v2074 = vrot.slane %v2049, %v2073
        %v2076 = vadd.f32 %v2069, %v2074
        %v2077 = vld [vmem:[%s11] sm:$0xff]
        %v2078 = vld [vmem:[%s11 + $0x8] sm:$0xff]
        %v2079 = vld [vmem:[%s11 + $0x10] sm:$0xff]
        %v2080 = vld [vmem:[%s11 + $0x18] sm:$0xff]
        %v2081 = vld [vmem:[%s12] sm:$0x1]
        %v2083 = vlaneseq
        %v2084 = vshrl.u32 %v2083, 7
        %v2085 = vsub.s32 0, %v2084
        %v2086 = vrot.slane %v2081, %v2085
        %v2089 = vsel %vm993, %v2076, 0
        %2091 = vmatprep.subr.mxu0 0.0
        %2092 = vmatpush1.msra.mxu0 0.0
        %2093 = vmatprep.subr.mxu0 0.0
        %2094 = vmatpush1.msra.mxu0 0.0
        %2095 = vmatprep.subr.mxu0 0.0
        %2096 = vmatpush1.msra.mxu0 0.0
        %2097 = vmatprep.subr.mxu0 0.0
        %2098 = vmatpush1.msra.mxu0 0.0
        %2099 = vmatprep.subr.mxu0 0.0
        %2100 = vmatpush1.msra.mxu0 0.0
        %2101 = vmatprep.subr.mxu0 0.0
        %2102 = vmatpush1.msra.mxu0 0.0
        %2103 = vmatprep.subr.mxu0 0.0
        %2104 = vmatpush1.msra.mxu0 0.0
        %2105 = vmatprep.subr.mxu0 0.0
        %2106 = vmatpush1.msra.mxu0 0.0
        %2107 = vmatprep.subr.mxu0 0.0
        %2108 = vmatpush1.msra.mxu0 0.0
        %2109 = vmatprep.subr.mxu0 0.0
        %2110 = vmatpush1.msra.mxu0 0.0
        %2111 = vmatprep.subr.mxu0 0.0
        %2112 = vmatpush1.msra.mxu0 0.0
        %2113 = vmatprep.subr.mxu0 0.0
        %2114 = vmatpush1.msra.mxu0 0.0
        %2115 = vmatprep.subr.mxu0 0.0
        %2116 = vmatpush1.msra.mxu0 %v2080
        %2117 = vmatprep.subr.mxu0 0.0
        %2118 = vmatpush1.msra.mxu0 %v2079
        %2119 = vmatprep.subr.mxu0 0.0
        %2120 = vmatpush1.msra.mxu0 %v2078
        %2121 = vmatprep.subr.mxu0 0.0
        %2122 = vmatpush1.msra.mxu0 %v2077
        %2123 = vmatprep.subr.mxu0 0.0
        %2124 = vmatpush2.msra.mxu0 0.0
        %2125 = vmatprep.subr.mxu0 0.0
        %2126 = vmatpush2.msra.mxu0 0.0
        %2127 = vmatprep.subr.mxu0 0.0
        %2128 = vmatpush2.msra.mxu0 0.0
        %2129 = vmatprep.subr.mxu0 0.0
        %2130 = vmatpush2.msra.mxu0 0.0
        %2131 = vmatprep.subr.mxu0 0.0
        %2132 = vmatpush2.msra.mxu0 0.0
        %2133 = vmatprep.subr.mxu0 0.0
        %2134 = vmatpush2.msra.mxu0 0.0
        %2135 = vmatprep.subr.mxu0 0.0
        %2136 = vmatpush2.msra.mxu0 0.0
        %2137 = vmatprep.subr.mxu0 0.0
        %2138 = vmatpush2.msra.mxu0 0.0
        %2139 = vmatprep.subr.mxu0 0.0
        %2140 = vmatpush2.msra.mxu0 0.0
        %2141 = vmatprep.subr.mxu0 0.0
        %2142 = vmatpush2.msra.mxu0 0.0
        %2143 = vmatprep.subr.mxu0 0.0
        %2144 = vmatpush2.msra.mxu0 0.0
        %2145 = vmatprep.subr.mxu0 0.0
        %2146 = vmatpush2.msra.mxu0 0.0
        %2147 = vmatprep.subr.mxu0 0.0
        %2148 = vmatpush2.msra.mxu0 0.0
        %2149 = vmatprep.subr.mxu0 0.0
        %2150 = vmatpush2.msra.mxu0 0.0
        %2151 = vmatprep.subr.mxu0 0.0
        %2152 = vmatpush2.msra.mxu0 0.0
        %2153 = vmatprep.subr.mxu0 0.0
        %2154 = vmatpush2.msra.mxu0 0.0
        %2155 = vmatprep.mubr.f32.mxu0 0.0
        %2156 = vmatmul.mubr.f32.gmra.mxu0 %v2089
        %v2157 = vpop.f32.mrf.mxu0
        %v2158 = vadd.f32 %v2086, %v2157
        %v2159 = vpop.f32.mrf.mxu0
        %2160 = vdwg.mxu0
        %v2161 = vmul.f32 %v2158, 0.5
        %v2162 = vmul.f32 %v2158, 0.70710677
        %vm2163 = vcmp.ge.f32.partialorder %v2162, 0.0
        %v2164 = vsel %vm2163, 1.0, -1.0
        %v2165 = vand.u32 2147483647, %v2162
        %v2166 = vmul.f32 %v2165, 0.3275911
        %v2167 = vadd.f32 %v2166, 1.0
        %v2168 = vrcp.pop %v2167
        %v2169 = vmul.f32 1.0, %v2168
        %v2170 = vmul.f32 %v2169, 1.0614054
        %v2171 = vadd.f32 %v2170, -1.4531521
        %v2172 = vmul.f32 %v2171, %v2169
        %v2173 = vadd.f32 %v2172, 1.4214138
        %v2174 = vmul.f32 %v2173, %v2169
        %v2175 = vadd.f32 %v2174, -0.28449672
        %v2176 = vmul.f32 %v2175, %v2169
        %v2177 = vadd.f32 %v2176, 0.2548296
        %v2178 = vmul.f32 %v2177, %v2169
        %v2179 = vsub.f32 0.0, %v2165
        %v2180 = vmul.f32 %v2179, %v2165
        %v2181 = vmul.f32 %v2180, 1.442695
        %v2182 = vpow.pop %v2181
        %v2183 = vmul.f32 %v2178, %v2182
        %v2184 = vsub.f32 1.0, %v2183
        %v2185 = vmul.f32 %v2164, %v2184
        %v2186 = vadd.f32 %v2185, 1.0
        %v2187 = vmul.f32 %v2161, %v2186
        %v2188 = vld [vmem:[%s13] sm:$0xff]
        %v2189 = vld [vmem:[%s13 + $0x8] sm:$0xff]
        %v2190 = vld [vmem:[%s13 + $0x10] sm:$0xff]
        %v2191 = vld [vmem:[%s13 + $0x18] sm:$0xff]
        %v2192 = vld [vmem:[%s13 + $0x20] sm:$0xff]
        %v2193 = vld [vmem:[%s13 + $0x28] sm:$0xff]
        %v2194 = vld [vmem:[%s13 + $0x30] sm:$0xff]
        %v2195 = vld [vmem:[%s13 + $0x38] sm:$0xff]
        %vm2196 = vcmask 523264
        %v2198 = vsel %vm2196, %v2187, 0
        %2200 = vmatprep.subr.mxu0 0.0
        %2201 = vmatpush1.msra.mxu0 0.0
        %2202 = vmatprep.subr.mxu0 0.0
        %2203 = vmatpush1.msra.mxu0 0.0
        %2204 = vmatprep.subr.mxu0 0.0
        %2205 = vmatpush1.msra.mxu0 0.0
        %2206 = vmatprep.subr.mxu0 0.0
        %2207 = vmatpush1.msra.mxu0 0.0
        %2208 = vmatprep.subr.mxu0 0.0
        %2209 = vmatpush1.msra.mxu0 0.0
        %2210 = vmatprep.subr.mxu0 0.0
        %2211 = vmatpush1.msra.mxu0 0.0
        %2212 = vmatprep.subr.mxu0 0.0
        %2213 = vmatpush1.msra.mxu0 0.0
        %2214 = vmatprep.subr.mxu0 0.0
        %2215 = vmatpush1.msra.mxu0 0.0
        %2216 = vmatprep.subr.mxu0 0.0
        %2217 = vmatpush1.msra.mxu0 %v2195
        %2218 = vmatprep.subr.mxu0 0.0
        %2219 = vmatpush1.msra.mxu0 %v2194
        %2220 = vmatprep.subr.mxu0 0.0
        %2221 = vmatpush1.msra.mxu0 %v2193
        %2222 = vmatprep.subr.mxu0 0.0
        %2223 = vmatpush1.msra.mxu0 %v2192
        %2224 = vmatprep.subr.mxu0 0.0
        %2225 = vmatpush1.msra.mxu0 %v2191
        %2226 = vmatprep.subr.mxu0 0.0
        %2227 = vmatpush1.msra.mxu0 %v2190
        %2228 = vmatprep.subr.mxu0 0.0
        %2229 = vmatpush1.msra.mxu0 %v2189
        %2230 = vmatprep.subr.mxu0 0.0
        %2231 = vmatpush1.msra.mxu0 %v2188
        %2232 = vmatprep.subr.mxu0 0.0
        %2233 = vmatpush2.msra.mxu0 0.0
        %2234 = vmatprep.subr.mxu0 0.0
        %2235 = vmatpush2.msra.mxu0 0.0
        %2236 = vmatprep.subr.mxu0 0.0
        %2237 = vmatpush2.msra.mxu0 0.0
        %2238 = vmatprep.subr.mxu0 0.0
        %2239 = vmatpush2.msra.mxu0 0.0
        %2240 = vmatprep.subr.mxu0 0.0
        %2241 = vmatpush2.msra.mxu0 0.0
        %2242 = vmatprep.subr.mxu0 0.0
        %2243 = vmatpush2.msra.mxu0 0.0
        %2244 = vmatprep.subr.mxu0 0.0
        %2245 = vmatpush2.msra.mxu0 0.0
        %2246 = vmatprep.subr.mxu0 0.0
        %2247 = vmatpush2.msra.mxu0 0.0
        %2248 = vmatprep.subr.mxu0 0.0
        %2249 = vmatpush2.msra.mxu0 0.0
        %2250 = vmatprep.subr.mxu0 0.0
        %2251 = vmatpush2.msra.mxu0 0.0
        %2252 = vmatprep.subr.mxu0 0.0
        %2253 = vmatpush2.msra.mxu0 0.0
        %2254 = vmatprep.subr.mxu0 0.0
        %2255 = vmatpush2.msra.mxu0 0.0
        %2256 = vmatprep.subr.mxu0 0.0
        %2257 = vmatpush2.msra.mxu0 0.0
        %2258 = vmatprep.subr.mxu0 0.0
        %2259 = vmatpush2.msra.mxu0 0.0
        %2260 = vmatprep.subr.mxu0 0.0
        %2261 = vmatpush2.msra.mxu0 0.0
        %2262 = vmatprep.subr.mxu0 0.0
        %2263 = vmatpush2.msra.mxu0 0.0
        %2264 = vmatprep.mubr.f32.mxu0 0.0
        %2265 = vmatmul.mubr.f32.gmra.mxu0 %v2198
        %v2266 = vpop.f32.mrf.mxu0
        %v2267 = vadd.f32 0.0, %v2266
        %v2268 = vpop.f32.mrf.mxu0
        %2269 = vdwg.mxu0
        %v2270 = vadd.f32 %v2047, %v2267
        %v2271 = vld [vmem:[%s14] sm:$0x1]
        %v2273 = vlaneseq
        %v2274 = vshrl.u32 %v2273, 7
        %v2275 = vsub.s32 0, %v2274
        %v2276 = vrot.slane %v2271, %v2275
        %v2278 = vadd.f32 %v2270, %v2276
        %s2279 = scalar_lea.vmem %s3, 1
        %v2280 = vld [vmem:[%s2279] sm:$0x1]
        %s2281 = scalar_lea.vmem %s4, 1
        %v2282 = vld [vmem:[%s2281] sm:$0x1]
        %v2283 = vsel %vm953, %v2278, 0.0
        %2284 = vadd.xlane.f32.xlu0 %v2283
        %v2285 = vpop.xlane.xlu0 %2284
        %v2286 = vmul.f32 %v2285, %v957
        %v2287 = vsub.f32 %v2278, %v2286
        %v2288 = vmul.f32 %v2287, %v2287
        %v2289 = vsel %vm953, %v2288, 0.0
        %2290 = vadd.xlane.f32.xlu0 %v2289
        %v2291 = vpop.xlane.xlu0 %2290
        %v2292 = vmul.f32 %v2291, %v957
        %v2293 = vadd.f32 %v2292, 1e-06
        %v2294 = vrsqrt.pop %v2293
        %v2295 = vmul.f32 %v2287, %v2294
        %v2297 = vlaneseq
        %v2298 = vshrl.u32 %v2297, 7
        %v2299 = vsub.s32 0, %v2298
        %v2300 = vrot.slane %v2280, %v2299
        %v2302 = vmul.f32 %v2295, %v2300
        %v2304 = vlaneseq
        %v2305 = vshrl.u32 %v2304, 7
        %v2306 = vsub.s32 0, %v2305
        %v2307 = vrot.slane %v2282, %v2306
        %v2309 = vadd.f32 %v2302, %v2307
        %s2310 = scalar_lea.vmem %s5, 32
        %v2311 = vld [vmem:[%s2310] sm:$0xff]
        %v2312 = vld [vmem:[%s2310 + $0x8] sm:$0xff]
        %v2313 = vld [vmem:[%s2310 + $0x10] sm:$0xff]
        %v2314 = vld [vmem:[%s2310 + $0x18] sm:$0xff]
        %s2315 = scalar_lea.vmem %s6, 1
        %v2316 = vld [vmem:[%s2315] sm:$0x1]
        %v2318 = vlaneseq
        %v2319 = vshrl.u32 %v2318, 7
        %v2320 = vsub.s32 0, %v2319
        %v2321 = vrot.slane %v2316, %v2320
        %v2324 = vsel %vm993, %v2309, 0
        %2326 = vmatprep.subr.mxu0 0.0
        %2327 = vmatpush1.msra.mxu0 0.0
        %2328 = vmatprep.subr.mxu0 0.0
        %2329 = vmatpush1.msra.mxu0 0.0
        %2330 = vmatprep.subr.mxu0 0.0
        %2331 = vmatpush1.msra.mxu0 0.0
        %2332 = vmatprep.subr.mxu0 0.0
        %2333 = vmatpush1.msra.mxu0 0.0
        %2334 = vmatprep.subr.mxu0 0.0
        %2335 = vmatpush1.msra.mxu0 0.0
        %2336 = vmatprep.subr.mxu0 0.0
        %2337 = vmatpush1.msra.mxu0 0.0
        %2338 = vmatprep.subr.mxu0 0.0
        %2339 = vmatpush1.msra.mxu0 0.0
        %2340 = vmatprep.subr.mxu0 0.0
        %2341 = vmatpush1.msra.mxu0 0.0
        %2342 = vmatprep.subr.mxu0 0.0
        %2343 = vmatpush1.msra.mxu0 0.0
        %2344 = vmatprep.subr.mxu0 0.0
        %2345 = vmatpush1.msra.mxu0 0.0
        %2346 = vmatprep.subr.mxu0 0.0
        %2347 = vmatpush1.msra.mxu0 0.0
        %2348 = vmatprep.subr.mxu0 0.0
        %2349 = vmatpush1.msra.mxu0 0.0
        %2350 = vmatprep.subr.mxu0 0.0
        %2351 = vmatpush1.msra.mxu0 %v2314
        %2352 = vmatprep.subr.mxu0 0.0
        %2353 = vmatpush1.msra.mxu0 %v2313
        %2354 = vmatprep.subr.mxu0 0.0
        %2355 = vmatpush1.msra.mxu0 %v2312
        %2356 = vmatprep.subr.mxu0 0.0
        %2357 = vmatpush1.msra.mxu0 %v2311
        %2358 = vmatprep.subr.mxu0 0.0
        %2359 = vmatpush2.msra.mxu0 0.0
        %2360 = vmatprep.subr.mxu0 0.0
        %2361 = vmatpush2.msra.mxu0 0.0
        %2362 = vmatprep.subr.mxu0 0.0
        %2363 = vmatpush2.msra.mxu0 0.0
        %2364 = vmatprep.subr.mxu0 0.0
        %2365 = vmatpush2.msra.mxu0 0.0
        %2366 = vmatprep.subr.mxu0 0.0
        %2367 = vmatpush2.msra.mxu0 0.0
        %2368 = vmatprep.subr.mxu0 0.0
        %2369 = vmatpush2.msra.mxu0 0.0
        %2370 = vmatprep.subr.mxu0 0.0
        %2371 = vmatpush2.msra.mxu0 0.0
        %2372 = vmatprep.subr.mxu0 0.0
        %2373 = vmatpush2.msra.mxu0 0.0
        %2374 = vmatprep.subr.mxu0 0.0
        %2375 = vmatpush2.msra.mxu0 0.0
        %2376 = vmatprep.subr.mxu0 0.0
        %2377 = vmatpush2.msra.mxu0 0.0
        %2378 = vmatprep.subr.mxu0 0.0
        %2379 = vmatpush2.msra.mxu0 0.0
        %2380 = vmatprep.subr.mxu0 0.0
        %2381 = vmatpush2.msra.mxu0 0.0
        %2382 = vmatprep.subr.mxu0 0.0
        %2383 = vmatpush2.msra.mxu0 0.0
        %2384 = vmatprep.subr.mxu0 0.0
        %2385 = vmatpush2.msra.mxu0 0.0
        %2386 = vmatprep.subr.mxu0 0.0
        %2387 = vmatpush2.msra.mxu0 0.0
        %2388 = vmatprep.subr.mxu0 0.0
        %2389 = vmatpush2.msra.mxu0 0.0
        %2390 = vmatprep.mubr.f32.mxu0 0.0
        %2391 = vmatmul.mubr.f32.gmra.mxu0 %v2324
        %v2392 = vpop.f32.mrf.mxu0
        %v2393 = vadd.f32 %v2321, %v2392
        %v2394 = vpop.f32.mrf.mxu0
        %2395 = vdwg.mxu0
        %2397 = vrot.lane.b32.xlu0 %v2393, 96
        %v2398 = vpop.permute.xlu0 %2397
        %v2399 = vsel %vm1070, %v2393, 0
        %v2401 = vsel %vm1070, %v2398, 0
        %2403 = vmatprep.subr.mxu0 0.0
        %2404 = vmatpush1.xpose.msra.mxu0 0.0
        %2405 = vmatprep.subr.mxu0 0.0
        %2406 = vmatpush1.xpose.msra.mxu0 0.0
        %2407 = vmatprep.subr.mxu0 0.0
        %2408 = vmatpush1.xpose.msra.mxu0 0.0
        %2409 = vmatprep.subr.mxu0 0.0
        %2410 = vmatpush1.xpose.msra.mxu0 0.0
        %2411 = vmatprep.subr.mxu0 0.0
        %2412 = vmatpush1.xpose.msra.mxu0 0.0
        %2413 = vmatprep.subr.mxu0 0.0
        %2414 = vmatpush1.xpose.msra.mxu0 0.0
        %2415 = vmatprep.subr.mxu0 0.0
        %2416 = vmatpush1.xpose.msra.mxu0 0.0
        %2417 = vmatprep.subr.mxu0 0.0
        %2418 = vmatpush1.xpose.msra.mxu0 0.0
        %2419 = vmatprep.subr.mxu0 0.0
        %2420 = vmatpush1.xpose.msra.mxu0 0.0
        %2421 = vmatprep.subr.mxu0 0.0
        %2422 = vmatpush1.xpose.msra.mxu0 0.0
        %2423 = vmatprep.subr.mxu0 0.0
        %2424 = vmatpush1.xpose.msra.mxu0 0.0
        %2425 = vmatprep.subr.mxu0 0.0
        %2426 = vmatpush1.xpose.msra.mxu0 0.0
        %2427 = vmatprep.subr.mxu0 0.0
        %2428 = vmatpush1.xpose.msra.mxu0 0.0
        %2429 = vmatprep.subr.mxu0 0.0
        %2430 = vmatpush1.xpose.msra.mxu0 0.0
        %2431 = vmatprep.subr.mxu0 0.0
        %2432 = vmatpush1.xpose.msra.mxu0 0.0
        %2433 = vmatprep.subr.mxu0 0.0
        %2434 = vmatpush1.xpose.msra.mxu0 %v2401
        %2435 = vmatprep.subr.mxu0 0.0
        %2436 = vmatpush2.xpose.msra.mxu0 0.0
        %2437 = vmatprep.subr.mxu0 0.0
        %2438 = vmatpush2.xpose.msra.mxu0 0.0
        %2439 = vmatprep.subr.mxu0 0.0
        %2440 = vmatpush2.xpose.msra.mxu0 0.0
        %2441 = vmatprep.subr.mxu0 0.0
        %2442 = vmatpush2.xpose.msra.mxu0 0.0
        %2443 = vmatprep.subr.mxu0 0.0
        %2444 = vmatpush2.xpose.msra.mxu0 0.0
        %2445 = vmatprep.subr.mxu0 0.0
        %2446 = vmatpush2.xpose.msra.mxu0 0.0
        %2447 = vmatprep.subr.mxu0 0.0
        %2448 = vmatpush2.xpose.msra.mxu0 0.0
        %2449 = vmatprep.subr.mxu0 0.0
        %2450 = vmatpush2.xpose.msra.mxu0 0.0
        %2451 = vmatprep.subr.mxu0 0.0
        %2452 = vmatpush2.xpose.msra.mxu0 0.0
        %2453 = vmatprep.subr.mxu0 0.0
        %2454 = vmatpush2.xpose.msra.mxu0 0.0
        %2455 = vmatprep.subr.mxu0 0.0
        %2456 = vmatpush2.xpose.msra.mxu0 0.0
        %2457 = vmatprep.subr.mxu0 0.0
        %2458 = vmatpush2.xpose.msra.mxu0 0.0
        %2459 = vmatprep.subr.mxu0 0.0
        %2460 = vmatpush2.xpose.msra.mxu0 0.0
        %2461 = vmatprep.subr.mxu0 0.0
        %2462 = vmatpush2.xpose.msra.mxu0 0.0
        %2463 = vmatprep.subr.mxu0 0.0
        %2464 = vmatpush2.xpose.msra.mxu0 0.0
        %2465 = vmatprep.subr.mxu0 0.0
        %2466 = vmatpush2.xpose.msra.mxu0 0.0
        %2467 = vmatprep.mubr.f32.mxu0 0.0
        %2468 = vmatmul.mubr.f32.gmra.mxu0 %v2399
        %v2469 = vpop.f32.mrf.mxu0
        %v2470 = vadd.f32 0.0, %v2469
        %v2471 = vpop.f32.mrf.mxu0
        %2472 = vdwg.mxu0
        %v2473 = vmul.f32 %v2470, 0.35355338
        %v2474 = vsel %vm1146, %v2473, -inf
        %2475 = vmax.xlane.f32.xlu0 %v2474
        %v2476 = vpop.xlane.xlu0 %2475
        %v2477 = vsub.f32 %v2473, %v2476
        %v2478 = vmul.f32 %v2477, 1.442695
        %v2479 = vpow.pop %v2478
        %v2480 = vsel %vm1146, %v2479, 0.0
        %2481 = vadd.xlane.f32.xlu0 %v2480
        %v2482 = vpop.xlane.xlu0 %2481
        %v2483 = vrcp.pop %v2482
        %v2484 = vmul.f32 %v2479, %v2483
        %2485 = vrot.lane.b32.xlu0 %v2393, 64
        %v2486 = vpop.permute.xlu0 %2485
        %v2488 = vsel %vm1160, %v2484, 0
        %v2490 = vsel %vm1164, %v2486, 0
        %2492 = vmatprep.subr.mxu0 0.0
        %2493 = vmatpush1.msra.mxu0 0.0
        %2494 = vmatprep.subr.mxu0 0.0
        %2495 = vmatpush1.msra.mxu0 0.0
        %2496 = vmatprep.subr.mxu0 0.0
        %2497 = vmatpush1.msra.mxu0 0.0
        %2498 = vmatprep.subr.mxu0 0.0
        %2499 = vmatpush1.msra.mxu0 0.0
        %2500 = vmatprep.subr.mxu0 0.0
        %2501 = vmatpush1.msra.mxu0 0.0
        %2502 = vmatprep.subr.mxu0 0.0
        %2503 = vmatpush1.msra.mxu0 0.0
        %2504 = vmatprep.subr.mxu0 0.0
        %2505 = vmatpush1.msra.mxu0 0.0
        %2506 = vmatprep.subr.mxu0 0.0
        %2507 = vmatpush1.msra.mxu0 0.0
        %2508 = vmatprep.subr.mxu0 0.0
        %2509 = vmatpush1.msra.mxu0 0.0
        %2510 = vmatprep.subr.mxu0 0.0
        %2511 = vmatpush1.msra.mxu0 0.0
        %2512 = vmatprep.subr.mxu0 0.0
        %2513 = vmatpush1.msra.mxu0 0.0
        %2514 = vmatprep.subr.mxu0 0.0
        %2515 = vmatpush1.msra.mxu0 0.0
        %2516 = vmatprep.subr.mxu0 0.0
        %2517 = vmatpush1.msra.mxu0 0.0
        %2518 = vmatprep.subr.mxu0 0.0
        %2519 = vmatpush1.msra.mxu0 0.0
        %2520 = vmatprep.subr.mxu0 0.0
        %2521 = vmatpush1.msra.mxu0 0.0
        %2522 = vmatprep.subr.mxu0 0.0
        %2523 = vmatpush1.msra.mxu0 %v2490
        %2524 = vmatprep.subr.mxu0 0.0
        %2525 = vmatpush2.msra.mxu0 0.0
        %2526 = vmatprep.subr.mxu0 0.0
        %2527 = vmatpush2.msra.mxu0 0.0
        %2528 = vmatprep.subr.mxu0 0.0
        %2529 = vmatpush2.msra.mxu0 0.0
        %2530 = vmatprep.subr.mxu0 0.0
        %2531 = vmatpush2.msra.mxu0 0.0
        %2532 = vmatprep.subr.mxu0 0.0
        %2533 = vmatpush2.msra.mxu0 0.0
        %2534 = vmatprep.subr.mxu0 0.0
        %2535 = vmatpush2.msra.mxu0 0.0
        %2536 = vmatprep.subr.mxu0 0.0
        %2537 = vmatpush2.msra.mxu0 0.0
        %2538 = vmatprep.subr.mxu0 0.0
        %2539 = vmatpush2.msra.mxu0 0.0
        %2540 = vmatprep.subr.mxu0 0.0
        %2541 = vmatpush2.msra.mxu0 0.0
        %2542 = vmatprep.subr.mxu0 0.0
        %2543 = vmatpush2.msra.mxu0 0.0
        %2544 = vmatprep.subr.mxu0 0.0
        %2545 = vmatpush2.msra.mxu0 0.0
        %2546 = vmatprep.subr.mxu0 0.0
        %2547 = vmatpush2.msra.mxu0 0.0
        %2548 = vmatprep.subr.mxu0 0.0
        %2549 = vmatpush2.msra.mxu0 0.0
        %2550 = vmatprep.subr.mxu0 0.0
        %2551 = vmatpush2.msra.mxu0 0.0
        %2552 = vmatprep.subr.mxu0 0.0
        %2553 = vmatpush2.msra.mxu0 0.0
        %2554 = vmatprep.subr.mxu0 0.0
        %2555 = vmatpush2.msra.mxu0 0.0
        %2556 = vmatprep.mubr.f32.mxu0 0.0
        %2557 = vmatmul.mubr.f32.gmra.mxu0 %v2488
        %v2558 = vpop.f32.mrf.mxu0
        %v2559 = vadd.f32 0.0, %v2558
        %v2560 = vpop.f32.mrf.mxu0
        %2561 = vdwg.mxu0
        %s2562 = scalar_lea.vmem %s7, 32
        %v2563 = vld [vmem:[%s2562] sm:$0xff]
        %2564 = vrot.lane.b32.xlu0 %v2393, 120
        %v2565 = vpop.permute.xlu0 %2564
        %2566 = vrot.lane.b32.xlu0 %v2393, 88
        %v2567 = vpop.permute.xlu0 %2566
        %v2568 = vsel %vm1070, %v2565, 0
        %v2570 = vsel %vm1070, %v2567, 0
        %2572 = vmatprep.subr.mxu0 0.0
        %2573 = vmatpush1.xpose.msra.mxu0 0.0
        %2574 = vmatprep.subr.mxu0 0.0
        %2575 = vmatpush1.xpose.msra.mxu0 0.0
        %2576 = vmatprep.subr.mxu0 0.0
        %2577 = vmatpush1.xpose.msra.mxu0 0.0
        %2578 = vmatprep.subr.mxu0 0.0
        %2579 = vmatpush1.xpose.msra.mxu0 0.0
        %2580 = vmatprep.subr.mxu0 0.0
        %2581 = vmatpush1.xpose.msra.mxu0 0.0
        %2582 = vmatprep.subr.mxu0 0.0
        %2583 = vmatpush1.xpose.msra.mxu0 0.0
        %2584 = vmatprep.subr.mxu0 0.0
        %2585 = vmatpush1.xpose.msra.mxu0 0.0
        %2586 = vmatprep.subr.mxu0 0.0
        %2587 = vmatpush1.xpose.msra.mxu0 0.0
        %2588 = vmatprep.subr.mxu0 0.0
        %2589 = vmatpush1.xpose.msra.mxu0 0.0
        %2590 = vmatprep.subr.mxu0 0.0
        %2591 = vmatpush1.xpose.msra.mxu0 0.0
        %2592 = vmatprep.subr.mxu0 0.0
        %2593 = vmatpush1.xpose.msra.mxu0 0.0
        %2594 = vmatprep.subr.mxu0 0.0
        %2595 = vmatpush1.xpose.msra.mxu0 0.0
        %2596 = vmatprep.subr.mxu0 0.0
        %2597 = vmatpush1.xpose.msra.mxu0 0.0
        %2598 = vmatprep.subr.mxu0 0.0
        %2599 = vmatpush1.xpose.msra.mxu0 0.0
        %2600 = vmatprep.subr.mxu0 0.0
        %2601 = vmatpush1.xpose.msra.mxu0 0.0
        %2602 = vmatprep.subr.mxu0 0.0
        %2603 = vmatpush1.xpose.msra.mxu0 %v2570
        %2604 = vmatprep.subr.mxu0 0.0
        %2605 = vmatpush2.xpose.msra.mxu0 0.0
        %2606 = vmatprep.subr.mxu0 0.0
        %2607 = vmatpush2.xpose.msra.mxu0 0.0
        %2608 = vmatprep.subr.mxu0 0.0
        %2609 = vmatpush2.xpose.msra.mxu0 0.0
        %2610 = vmatprep.subr.mxu0 0.0
        %2611 = vmatpush2.xpose.msra.mxu0 0.0
        %2612 = vmatprep.subr.mxu0 0.0
        %2613 = vmatpush2.xpose.msra.mxu0 0.0
        %2614 = vmatprep.subr.mxu0 0.0
        %2615 = vmatpush2.xpose.msra.mxu0 0.0
        %2616 = vmatprep.subr.mxu0 0.0
        %2617 = vmatpush2.xpose.msra.mxu0 0.0
        %2618 = vmatprep.subr.mxu0 0.0
        %2619 = vmatpush2.xpose.msra.mxu0 0.0
        %2620 = vmatprep.subr.mxu0 0.0
        %2621 = vmatpush2.xpose.msra.mxu0 0.0
        %2622 = vmatprep.subr.mxu0 0.0
        %2623 = vmatpush2.xpose.msra.mxu0 0.0
        %2624 = vmatprep.subr.mxu0 0.0
        %2625 = vmatpush2.xpose.msra.mxu0 0.0
        %2626 = vmatprep.subr.mxu0 0.0
        %2627 = vmatpush2.xpose.msra.mxu0 0.0
        %2628 = vmatprep.subr.mxu0 0.0
        %2629 = vmatpush2.xpose.msra.mxu0 0.0
        %2630 = vmatprep.subr.mxu0 0.0
        %2631 = vmatpush2.xpose.msra.mxu0 0.0
        %2632 = vmatprep.subr.mxu0 0.0
        %2633 = vmatpush2.xpose.msra.mxu0 0.0
        %2634 = vmatprep.subr.mxu0 0.0
        %2635 = vmatpush2.xpose.msra.mxu0 0.0
        %2636 = vmatprep.mubr.f32.mxu0 0.0
        %2637 = vmatmul.mubr.f32.gmra.mxu0 %v2568
        %v2638 = vpop.f32.mrf.mxu0
        %v2639 = vadd.f32 0.0, %v2638
        %v2640 = vpop.f32.mrf.mxu0
        %2641 = vdwg.mxu0
        %v2642 = vmul.f32 %v2639, 0.35355338
        %v2643 = vsel %vm1146, %v2642, -inf
        %2644 = vmax.xlane.f32.xlu0 %v2643
        %v2645 = vpop.xlane.xlu0 %2644
        %v2646 = vsub.f32 %v2642, %v2645
        %v2647 = vmul.f32 %v2646, 1.442695
        %v2648 = vpow.pop %v2647
        %v2649 = vsel %vm1146, %v2648, 0.0
        %2650 = vadd.xlane.f32.xlu0 %v2649
        %v2651 = vpop.xlane.xlu0 %2650
        %v2652 = vrcp.pop %v2651
        %v2653 = vmul.f32 %v2648, %v2652
        %2654 = vrot.lane.b32.xlu0 %v2393, 56
        %v2655 = vpop.permute.xlu0 %2654
        %v2657 = vsel %vm1160, %v2653, 0
        %v2659 = vsel %vm1164, %v2655, 0
        %2661 = vmatprep.subr.mxu0 0.0
        %2662 = vmatpush1.msra.mxu0 0.0
        %2663 = vmatprep.subr.mxu0 0.0
        %2664 = vmatpush1.msra.mxu0 0.0
        %2665 = vmatprep.subr.mxu0 0.0
        %2666 = vmatpush1.msra.mxu0 0.0
        %2667 = vmatprep.subr.mxu0 0.0
        %2668 = vmatpush1.msra.mxu0 0.0
        %2669 = vmatprep.subr.mxu0 0.0
        %2670 = vmatpush1.msra.mxu0 0.0
        %2671 = vmatprep.subr.mxu0 0.0
        %2672 = vmatpush1.msra.mxu0 0.0
        %2673 = vmatprep.subr.mxu0 0.0
        %2674 = vmatpush1.msra.mxu0 0.0
        %2675 = vmatprep.subr.mxu0 0.0
        %2676 = vmatpush1.msra.mxu0 0.0
        %2677 = vmatprep.subr.mxu0 0.0
        %2678 = vmatpush1.msra.mxu0 0.0
        %2679 = vmatprep.subr.mxu0 0.0
        %2680 = vmatpush1.msra.mxu0 0.0
        %2681 = vmatprep.subr.mxu0 0.0
        %2682 = vmatpush1.msra.mxu0 0.0
        %2683 = vmatprep.subr.mxu0 0.0
        %2684 = vmatpush1.msra.mxu0 0.0
        %2685 = vmatprep.subr.mxu0 0.0
        %2686 = vmatpush1.msra.mxu0 0.0
        %2687 = vmatprep.subr.mxu0 0.0
        %2688 = vmatpush1.msra.mxu0 0.0
        %2689 = vmatprep.subr.mxu0 0.0
        %2690 = vmatpush1.msra.mxu0 0.0
        %2691 = vmatprep.subr.mxu0 0.0
        %2692 = vmatpush1.msra.mxu0 %v2659
        %2693 = vmatprep.subr.mxu0 0.0
        %2694 = vmatpush2.msra.mxu0 0.0
        %2695 = vmatprep.subr.mxu0 0.0
        %2696 = vmatpush2.msra.mxu0 0.0
        %2697 = vmatprep.subr.mxu0 0.0
        %2698 = vmatpush2.msra.mxu0 0.0
        %2699 = vmatprep.subr.mxu0 0.0
        %2700 = vmatpush2.msra.mxu0 0.0
        %2701 = vmatprep.subr.mxu0 0.0
        %2702 = vmatpush2.msra.mxu0 0.0
        %2703 = vmatprep.subr.mxu0 0.0
        %2704 = vmatpush2.msra.mxu0 0.0
        %2705 = vmatprep.subr.mxu0 0.0
        %2706 = vmatpush2.msra.mxu0 0.0
        %2707 = vmatprep.subr.mxu0 0.0
        %2708 = vmatpush2.msra.mxu0 0.0
        %2709 = vmatprep.subr.mxu0 0.0
        %2710 = vmatpush2.msra.mxu0 0.0
        %2711 = vmatprep.subr.mxu0 0.0
        %2712 = vmatpush2.msra.mxu0 0.0
        %2713 = vmatprep.subr.mxu0 0.0
        %2714 = vmatpush2.msra.mxu0 0.0
        %2715 = vmatprep.subr.mxu0 0.0
        %2716 = vmatpush2.msra.mxu0 0.0
        %2717 = vmatprep.subr.mxu0 0.0
        %2718 = vmatpush2.msra.mxu0 0.0
        %2719 = vmatprep.subr.mxu0 0.0
        %2720 = vmatpush2.msra.mxu0 0.0
        %2721 = vmatprep.subr.mxu0 0.0
        %2722 = vmatpush2.msra.mxu0 0.0
        %2723 = vmatprep.subr.mxu0 0.0
        %2724 = vmatpush2.msra.mxu0 0.0
        %2725 = vmatprep.mubr.f32.mxu0 0.0
        %2726 = vmatmul.mubr.f32.gmra.mxu0 %v2657
        %v2727 = vpop.f32.mrf.mxu0
        %v2728 = vadd.f32 0.0, %v2727
        %v2729 = vpop.f32.mrf.mxu0
        %2730 = vdwg.mxu0
        %s2731 = scalar_lea.vmem %s7, 40
        %v2732 = vld [vmem:[%s2731] sm:$0xff]
        %v2734 = vsel %vm1070, %v2728, 0
        %2736 = vmatprep.subr.mxu0 0.0
        %2737 = vmatpush1.msra.mxu0 0.0
        %2738 = vmatprep.subr.mxu0 0.0
        %2739 = vmatpush1.msra.mxu0 0.0
        %2740 = vmatprep.subr.mxu0 0.0
        %2741 = vmatpush1.msra.mxu0 0.0
        %2742 = vmatprep.subr.mxu0 0.0
        %2743 = vmatpush1.msra.mxu0 0.0
        %2744 = vmatprep.subr.mxu0 0.0
        %2745 = vmatpush1.msra.mxu0 0.0
        %2746 = vmatprep.subr.mxu0 0.0
        %2747 = vmatpush1.msra.mxu0 0.0
        %2748 = vmatprep.subr.mxu0 0.0
        %2749 = vmatpush1.msra.mxu0 0.0
        %2750 = vmatprep.subr.mxu0 0.0
        %2751 = vmatpush1.msra.mxu0 0.0
        %2752 = vmatprep.subr.mxu0 0.0
        %2753 = vmatpush1.msra.mxu0 0.0
        %2754 = vmatprep.subr.mxu0 0.0
        %2755 = vmatpush1.msra.mxu0 0.0
        %2756 = vmatprep.subr.mxu0 0.0
        %2757 = vmatpush1.msra.mxu0 0.0
        %2758 = vmatprep.subr.mxu0 0.0
        %2759 = vmatpush1.msra.mxu0 0.0
        %2760 = vmatprep.subr.mxu0 0.0
        %2761 = vmatpush1.msra.mxu0 0.0
        %2762 = vmatprep.subr.mxu0 0.0
        %2763 = vmatpush1.msra.mxu0 0.0
        %2764 = vmatprep.subr.mxu0 0.0
        %2765 = vmatpush1.msra.mxu0 0.0
        %2766 = vmatprep.subr.mxu0 0.0
        %2767 = vmatpush1.msra.mxu0 %v2732
        %2768 = vmatprep.subr.mxu0 0.0
        %2769 = vmatpush2.msra.mxu0 0.0
        %2770 = vmatprep.subr.mxu0 0.0
        %2771 = vmatpush2.msra.mxu0 0.0
        %2772 = vmatprep.subr.mxu0 0.0
        %2773 = vmatpush2.msra.mxu0 0.0
        %2774 = vmatprep.subr.mxu0 0.0
        %2775 = vmatpush2.msra.mxu0 0.0
        %2776 = vmatprep.subr.mxu0 0.0
        %2777 = vmatpush2.msra.mxu0 0.0
        %2778 = vmatprep.subr.mxu0 0.0
        %2779 = vmatpush2.msra.mxu0 0.0
        %2780 = vmatprep.subr.mxu0 0.0
        %2781 = vmatpush2.msra.mxu0 0.0
        %2782 = vmatprep.subr.mxu0 0.0
        %2783 = vmatpush2.msra.mxu0 0.0
        %2784 = vmatprep.subr.mxu0 0.0
        %2785 = vmatpush2.msra.mxu0 0.0
        %2786 = vmatprep.subr.mxu0 0.0
        %2787 = vmatpush2.msra.mxu0 0.0
        %2788 = vmatprep.subr.mxu0 0.0
        %2789 = vmatpush2.msra.mxu0 0.0
        %2790 = vmatprep.subr.mxu0 0.0
        %2791 = vmatpush2.msra.mxu0 0.0
        %2792 = vmatprep.subr.mxu0 0.0
        %2793 = vmatpush2.msra.mxu0 0.0
        %2794 = vmatprep.subr.mxu0 0.0
        %2795 = vmatpush2.msra.mxu0 0.0
        %2796 = vmatprep.subr.mxu0 0.0
        %2797 = vmatpush2.msra.mxu0 0.0
        %2798 = vmatprep.subr.mxu0 0.0
        %2799 = vmatpush2.msra.mxu0 0.0
        %2800 = vmatprep.mubr.f32.mxu0 0.0
        %2801 = vmatmul.mubr.f32.gmra.mxu0 %v2734
        %v2802 = vpop.f32.mrf.mxu0
        %v2803 = vadd.f32 0.0, %v2802
        %v2804 = vpop.f32.mrf.mxu0
        %2805 = vdwg.mxu0
        %v2807 = vsel %vm1070, %v2559, 0
        %2809 = vmatprep.subr.mxu0 0.0
        %2810 = vmatpush1.msra.mxu0 0.0
        %2811 = vmatprep.subr.mxu0 0.0
        %2812 = vmatpush1.msra.mxu0 0.0
        %2813 = vmatprep.subr.mxu0 0.0
        %2814 = vmatpush1.msra.mxu0 0.0
        %2815 = vmatprep.subr.mxu0 0.0
        %2816 = vmatpush1.msra.mxu0 0.0
        %2817 = vmatprep.subr.mxu0 0.0
        %2818 = vmatpush1.msra.mxu0 0.0
        %2819 = vmatprep.subr.mxu0 0.0
        %2820 = vmatpush1.msra.mxu0 0.0
        %2821 = vmatprep.subr.mxu0 0.0
        %2822 = vmatpush1.msra.mxu0 0.0
        %2823 = vmatprep.subr.mxu0 0.0
        %2824 = vmatpush1.msra.mxu0 0.0
        %2825 = vmatprep.subr.mxu0 0.0
        %2826 = vmatpush1.msra.mxu0 0.0
        %2827 = vmatprep.subr.mxu0 0.0
        %2828 = vmatpush1.msra.mxu0 0.0
        %2829 = vmatprep.subr.mxu0 0.0
        %2830 = vmatpush1.msra.mxu0 0.0
        %2831 = vmatprep.subr.mxu0 0.0
        %2832 = vmatpush1.msra.mxu0 0.0
        %2833 = vmatprep.subr.mxu0 0.0
        %2834 = vmatpush1.msra.mxu0 0.0
        %2835 = vmatprep.subr.mxu0 0.0
        %2836 = vmatpush1.msra.mxu0 0.0
        %2837 = vmatprep.subr.mxu0 0.0
        %2838 = vmatpush1.msra.mxu0 0.0
        %2839 = vmatprep.subr.mxu0 0.0
        %2840 = vmatpush1.msra.mxu0 %v2563
        %2841 = vmatprep.subr.mxu0 0.0
        %2842 = vmatpush2.msra.mxu0 0.0
        %2843 = vmatprep.subr.mxu0 0.0
        %2844 = vmatpush2.msra.mxu0 0.0
        %2845 = vmatprep.subr.mxu0 0.0
        %2846 = vmatpush2.msra.mxu0 0.0
        %2847 = vmatprep.subr.mxu0 0.0
        %2848 = vmatpush2.msra.mxu0 0.0
        %2849 = vmatprep.subr.mxu0 0.0
        %2850 = vmatpush2.msra.mxu0 0.0
        %2851 = vmatprep.subr.mxu0 0.0
        %2852 = vmatpush2.msra.mxu0 0.0
        %2853 = vmatprep.subr.mxu0 0.0
        %2854 = vmatpush2.msra.mxu0 0.0
        %2855 = vmatprep.subr.mxu0 0.0
        %2856 = vmatpush2.msra.mxu0 0.0
        %2857 = vmatprep.subr.mxu0 0.0
        %2858 = vmatpush2.msra.mxu0 0.0
        %2859 = vmatprep.subr.mxu0 0.0
        %2860 = vmatpush2.msra.mxu0 0.0
        %2861 = vmatprep.subr.mxu0 0.0
        %2862 = vmatpush2.msra.mxu0 0.0
        %2863 = vmatprep.subr.mxu0 0.0
        %2864 = vmatpush2.msra.mxu0 0.0
        %2865 = vmatprep.subr.mxu0 0.0
        %2866 = vmatpush2.msra.mxu0 0.0
        %2867 = vmatprep.subr.mxu0 0.0
        %2868 = vmatpush2.msra.mxu0 0.0
        %2869 = vmatprep.subr.mxu0 0.0
        %2870 = vmatpush2.msra.mxu0 0.0
        %2871 = vmatprep.subr.mxu0 0.0
        %2872 = vmatpush2.msra.mxu0 0.0
        %2873 = vmatprep.mubr.f32.mxu0 0.0
        %2874 = vmatmul.mubr.f32.gmra.mxu0 %v2807
        %v2875 = vpop.f32.mrf.mxu0
        %v2876 = vadd.f32 %v2803, %v2875
        %v2877 = vpop.f32.mrf.mxu0
        %2878 = vdwg.mxu0
        %2879 = vrot.lane.b32.xlu0 %v2393, 112
        %v2880 = vpop.permute.xlu0 %2879
        %2881 = vrot.lane.b32.xlu0 %v2393, 80
        %v2882 = vpop.permute.xlu0 %2881
        %v2883 = vsel %vm1070, %v2880, 0
        %v2885 = vsel %vm1070, %v2882, 0
        %2887 = vmatprep.subr.mxu0 0.0
        %2888 = vmatpush1.xpose.msra.mxu0 0.0
        %2889 = vmatprep.subr.mxu0 0.0
        %2890 = vmatpush1.xpose.msra.mxu0 0.0
        %2891 = vmatprep.subr.mxu0 0.0
        %2892 = vmatpush1.xpose.msra.mxu0 0.0
        %2893 = vmatprep.subr.mxu0 0.0
        %2894 = vmatpush1.xpose.msra.mxu0 0.0
        %2895 = vmatprep.subr.mxu0 0.0
        %2896 = vmatpush1.xpose.msra.mxu0 0.0
        %2897 = vmatprep.subr.mxu0 0.0
        %2898 = vmatpush1.xpose.msra.mxu0 0.0
        %2899 = vmatprep.subr.mxu0 0.0
        %2900 = vmatpush1.xpose.msra.mxu0 0.0
        %2901 = vmatprep.subr.mxu0 0.0
        %2902 = vmatpush1.xpose.msra.mxu0 0.0
        %2903 = vmatprep.subr.mxu0 0.0
        %2904 = vmatpush1.xpose.msra.mxu0 0.0
        %2905 = vmatprep.subr.mxu0 0.0
        %2906 = vmatpush1.xpose.msra.mxu0 0.0
        %2907 = vmatprep.subr.mxu0 0.0
        %2908 = vmatpush1.xpose.msra.mxu0 0.0
        %2909 = vmatprep.subr.mxu0 0.0
        %2910 = vmatpush1.xpose.msra.mxu0 0.0
        %2911 = vmatprep.subr.mxu0 0.0
        %2912 = vmatpush1.xpose.msra.mxu0 0.0
        %2913 = vmatprep.subr.mxu0 0.0
        %2914 = vmatpush1.xpose.msra.mxu0 0.0
        %2915 = vmatprep.subr.mxu0 0.0
        %2916 = vmatpush1.xpose.msra.mxu0 0.0
        %2917 = vmatprep.subr.mxu0 0.0
        %2918 = vmatpush1.xpose.msra.mxu0 %v2885
        %2919 = vmatprep.subr.mxu0 0.0
        %2920 = vmatpush2.xpose.msra.mxu0 0.0
        %2921 = vmatprep.subr.mxu0 0.0
        %2922 = vmatpush2.xpose.msra.mxu0 0.0
        %2923 = vmatprep.subr.mxu0 0.0
        %2924 = vmatpush2.xpose.msra.mxu0 0.0
        %2925 = vmatprep.subr.mxu0 0.0
        %2926 = vmatpush2.xpose.msra.mxu0 0.0
        %2927 = vmatprep.subr.mxu0 0.0
        %2928 = vmatpush2.xpose.msra.mxu0 0.0
        %2929 = vmatprep.subr.mxu0 0.0
        %2930 = vmatpush2.xpose.msra.mxu0 0.0
        %2931 = vmatprep.subr.mxu0 0.0
        %2932 = vmatpush2.xpose.msra.mxu0 0.0
        %2933 = vmatprep.subr.mxu0 0.0
        %2934 = vmatpush2.xpose.msra.mxu0 0.0
        %2935 = vmatprep.subr.mxu0 0.0
        %2936 = vmatpush2.xpose.msra.mxu0 0.0
        %2937 = vmatprep.subr.mxu0 0.0
        %2938 = vmatpush2.xpose.msra.mxu0 0.0
        %2939 = vmatprep.subr.mxu0 0.0
        %2940 = vmatpush2.xpose.msra.mxu0 0.0
        %2941 = vmatprep.subr.mxu0 0.0
        %2942 = vmatpush2.xpose.msra.mxu0 0.0
        %2943 = vmatprep.subr.mxu0 0.0
        %2944 = vmatpush2.xpose.msra.mxu0 0.0
        %2945 = vmatprep.subr.mxu0 0.0
        %2946 = vmatpush2.xpose.msra.mxu0 0.0
        %2947 = vmatprep.subr.mxu0 0.0
        %2948 = vmatpush2.xpose.msra.mxu0 0.0
        %2949 = vmatprep.subr.mxu0 0.0
        %2950 = vmatpush2.xpose.msra.mxu0 0.0
        %2951 = vmatprep.mubr.f32.mxu0 0.0
        %2952 = vmatmul.mubr.f32.gmra.mxu0 %v2883
        %v2953 = vpop.f32.mrf.mxu0
        %v2954 = vadd.f32 0.0, %v2953
        %v2955 = vpop.f32.mrf.mxu0
        %2956 = vdwg.mxu0
        %v2957 = vmul.f32 %v2954, 0.35355338
        %v2958 = vsel %vm1146, %v2957, -inf
        %2959 = vmax.xlane.f32.xlu0 %v2958
        %v2960 = vpop.xlane.xlu0 %2959
        %v2961 = vsub.f32 %v2957, %v2960
        %v2962 = vmul.f32 %v2961, 1.442695
        %v2963 = vpow.pop %v2962
        %v2964 = vsel %vm1146, %v2963, 0.0
        %2965 = vadd.xlane.f32.xlu0 %v2964
        %v2966 = vpop.xlane.xlu0 %2965
        %v2967 = vrcp.pop %v2966
        %v2968 = vmul.f32 %v2963, %v2967
        %2969 = vrot.lane.b32.xlu0 %v2393, 48
        %v2970 = vpop.permute.xlu0 %2969
        %v2972 = vsel %vm1160, %v2968, 0
        %v2974 = vsel %vm1164, %v2970, 0
        %2976 = vmatprep.subr.mxu0 0.0
        %2977 = vmatpush1.msra.mxu0 0.0
        %2978 = vmatprep.subr.mxu0 0.0
        %2979 = vmatpush1.msra.mxu0 0.0
        %2980 = vmatprep.subr.mxu0 0.0
        %2981 = vmatpush1.msra.mxu0 0.0
        %2982 = vmatprep.subr.mxu0 0.0
        %2983 = vmatpush1.msra.mxu0 0.0
        %2984 = vmatprep.subr.mxu0 0.0
        %2985 = vmatpush1.msra.mxu0 0.0
        %2986 = vmatprep.subr.mxu0 0.0
        %2987 = vmatpush1.msra.mxu0 0.0
        %2988 = vmatprep.subr.mxu0 0.0
        %2989 = vmatpush1.msra.mxu0 0.0
        %2990 = vmatprep.subr.mxu0 0.0
        %2991 = vmatpush1.msra.mxu0 0.0
        %2992 = vmatprep.subr.mxu0 0.0
        %2993 = vmatpush1.msra.mxu0 0.0
        %2994 = vmatprep.subr.mxu0 0.0
        %2995 = vmatpush1.msra.mxu0 0.0
        %2996 = vmatprep.subr.mxu0 0.0
        %2997 = vmatpush1.msra.mxu0 0.0
        %2998 = vmatprep.subr.mxu0 0.0
        %2999 = vmatpush1.msra.mxu0 0.0
        %3000 = vmatprep.subr.mxu0 0.0
        %3001 = vmatpush1.msra.mxu0 0.0
        %3002 = vmatprep.subr.mxu0 0.0
        %3003 = vmatpush1.msra.mxu0 0.0
        %3004 = vmatprep.subr.mxu0 0.0
        %3005 = vmatpush1.msra.mxu0 0.0
        %3006 = vmatprep.subr.mxu0 0.0
        %3007 = vmatpush1.msra.mxu0 %v2974
        %3008 = vmatprep.subr.mxu0 0.0
        %3009 = vmatpush2.msra.mxu0 0.0
        %3010 = vmatprep.subr.mxu0 0.0
        %3011 = vmatpush2.msra.mxu0 0.0
        %3012 = vmatprep.subr.mxu0 0.0
        %3013 = vmatpush2.msra.mxu0 0.0
        %3014 = vmatprep.subr.mxu0 0.0
        %3015 = vmatpush2.msra.mxu0 0.0
        %3016 = vmatprep.subr.mxu0 0.0
        %3017 = vmatpush2.msra.mxu0 0.0
        %3018 = vmatprep.subr.mxu0 0.0
        %3019 = vmatpush2.msra.mxu0 0.0
        %3020 = vmatprep.subr.mxu0 0.0
        %3021 = vmatpush2.msra.mxu0 0.0
        %3022 = vmatprep.subr.mxu0 0.0
        %3023 = vmatpush2.msra.mxu0 0.0
        %3024 = vmatprep.subr.mxu0 0.0
        %3025 = vmatpush2.msra.mxu0 0.0
        %3026 = vmatprep.subr.mxu0 0.0
        %3027 = vmatpush2.msra.mxu0 0.0
        %3028 = vmatprep.subr.mxu0 0.0
        %3029 = vmatpush2.msra.mxu0 0.0
        %3030 = vmatprep.subr.mxu0 0.0
        %3031 = vmatpush2.msra.mxu0 0.0
        %3032 = vmatprep.subr.mxu0 0.0
        %3033 = vmatpush2.msra.mxu0 0.0
        %3034 = vmatprep.subr.mxu0 0.0
        %3035 = vmatpush2.msra.mxu0 0.0
        %3036 = vmatprep.subr.mxu0 0.0
        %3037 = vmatpush2.msra.mxu0 0.0
        %3038 = vmatprep.subr.mxu0 0.0
        %3039 = vmatpush2.msra.mxu0 0.0
        %3040 = vmatprep.mubr.f32.mxu0 0.0
        %3041 = vmatmul.mubr.f32.gmra.mxu0 %v2972
        %v3042 = vpop.f32.mrf.mxu0
        %v3043 = vadd.f32 0.0, %v3042
        %v3044 = vpop.f32.mrf.mxu0
        %3045 = vdwg.mxu0
        %s3046 = scalar_lea.vmem %s7, 48
        %v3047 = vld [vmem:[%s3046] sm:$0xff]
        %v3049 = vsel %vm1070, %v3043, 0
        %3051 = vmatprep.subr.mxu0 0.0
        %3052 = vmatpush1.msra.mxu0 0.0
        %3053 = vmatprep.subr.mxu0 0.0
        %3054 = vmatpush1.msra.mxu0 0.0
        %3055 = vmatprep.subr.mxu0 0.0
        %3056 = vmatpush1.msra.mxu0 0.0
        %3057 = vmatprep.subr.mxu0 0.0
        %3058 = vmatpush1.msra.mxu0 0.0
        %3059 = vmatprep.subr.mxu0 0.0
        %3060 = vmatpush1.msra.mxu0 0.0
        %3061 = vmatprep.subr.mxu0 0.0
        %3062 = vmatpush1.msra.mxu0 0.0
        %3063 = vmatprep.subr.mxu0 0.0
        %3064 = vmatpush1.msra.mxu0 0.0
        %3065 = vmatprep.subr.mxu0 0.0
        %3066 = vmatpush1.msra.mxu0 0.0
        %3067 = vmatprep.subr.mxu0 0.0
        %3068 = vmatpush1.msra.mxu0 0.0
        %3069 = vmatprep.subr.mxu0 0.0
        %3070 = vmatpush1.msra.mxu0 0.0
        %3071 = vmatprep.subr.mxu0 0.0
        %3072 = vmatpush1.msra.mxu0 0.0
        %3073 = vmatprep.subr.mxu0 0.0
        %3074 = vmatpush1.msra.mxu0 0.0
        %3075 = vmatprep.subr.mxu0 0.0
        %3076 = vmatpush1.msra.mxu0 0.0
        %3077 = vmatprep.subr.mxu0 0.0
        %3078 = vmatpush1.msra.mxu0 0.0
        %3079 = vmatprep.subr.mxu0 0.0
        %3080 = vmatpush1.msra.mxu0 0.0
        %3081 = vmatprep.subr.mxu0 0.0
        %3082 = vmatpush1.msra.mxu0 %v3047
        %3083 = vmatprep.subr.mxu0 0.0
        %3084 = vmatpush2.msra.mxu0 0.0
        %3085 = vmatprep.subr.mxu0 0.0
        %3086 = vmatpush2.msra.mxu0 0.0
        %3087 = vmatprep.subr.mxu0 0.0
        %3088 = vmatpush2.msra.mxu0 0.0
        %3089 = vmatprep.subr.mxu0 0.0
        %3090 = vmatpush2.msra.mxu0 0.0
        %3091 = vmatprep.subr.mxu0 0.0
        %3092 = vmatpush2.msra.mxu0 0.0
        %3093 = vmatprep.subr.mxu0 0.0
        %3094 = vmatpush2.msra.mxu0 0.0
        %3095 = vmatprep.subr.mxu0 0.0
        %3096 = vmatpush2.msra.mxu0 0.0
        %3097 = vmatprep.subr.mxu0 0.0
        %3098 = vmatpush2.msra.mxu0 0.0
        %3099 = vmatprep.subr.mxu0 0.0
        %3100 = vmatpush2.msra.mxu0 0.0
        %3101 = vmatprep.subr.mxu0 0.0
        %3102 = vmatpush2.msra.mxu0 0.0
        %3103 = vmatprep.subr.mxu0 0.0
        %3104 = vmatpush2.msra.mxu0 0.0
        %3105 = vmatprep.subr.mxu0 0.0
        %3106 = vmatpush2.msra.mxu0 0.0
        %3107 = vmatprep.subr.mxu0 0.0
        %3108 = vmatpush2.msra.mxu0 0.0
        %3109 = vmatprep.subr.mxu0 0.0
        %3110 = vmatpush2.msra.mxu0 0.0
        %3111 = vmatprep.subr.mxu0 0.0
        %3112 = vmatpush2.msra.mxu0 0.0
        %3113 = vmatprep.subr.mxu0 0.0
        %3114 = vmatpush2.msra.mxu0 0.0
        %3115 = vmatprep.mubr.f32.mxu0 0.0
        %3116 = vmatmul.mubr.f32.gmra.mxu0 %v3049
        %v3117 = vpop.f32.mrf.mxu0
        %v3118 = vadd.f32 0.0, %v3117
        %v3119 = vpop.f32.mrf.mxu0
        %3120 = vdwg.mxu0
        %v3121 = vadd.f32 %v2876, %v3118
        %3122 = vrot.lane.b32.xlu0 %v2393, 104
        %v3123 = vpop.permute.xlu0 %3122
        %3124 = vrot.lane.b32.xlu0 %v2393, 72
        %v3125 = vpop.permute.xlu0 %3124
        %v3126 = vsel %vm1070, %v3123, 0
        %v3128 = vsel %vm1070, %v3125, 0
        %3130 = vmatprep.subr.mxu0 0.0
        %3131 = vmatpush1.xpose.msra.mxu0 0.0
        %3132 = vmatprep.subr.mxu0 0.0
        %3133 = vmatpush1.xpose.msra.mxu0 0.0
        %3134 = vmatprep.subr.mxu0 0.0
        %3135 = vmatpush1.xpose.msra.mxu0 0.0
        %3136 = vmatprep.subr.mxu0 0.0
        %3137 = vmatpush1.xpose.msra.mxu0 0.0
        %3138 = vmatprep.subr.mxu0 0.0
        %3139 = vmatpush1.xpose.msra.mxu0 0.0
        %3140 = vmatprep.subr.mxu0 0.0
        %3141 = vmatpush1.xpose.msra.mxu0 0.0
        %3142 = vmatprep.subr.mxu0 0.0
        %3143 = vmatpush1.xpose.msra.mxu0 0.0
        %3144 = vmatprep.subr.mxu0 0.0
        %3145 = vmatpush1.xpose.msra.mxu0 0.0
        %3146 = vmatprep.subr.mxu0 0.0
        %3147 = vmatpush1.xpose.msra.mxu0 0.0
        %3148 = vmatprep.subr.mxu0 0.0
        %3149 = vmatpush1.xpose.msra.mxu0 0.0
        %3150 = vmatprep.subr.mxu0 0.0
        %3151 = vmatpush1.xpose.msra.mxu0 0.0
        %3152 = vmatprep.subr.mxu0 0.0
        %3153 = vmatpush1.xpose.msra.mxu0 0.0
        %3154 = vmatprep.subr.mxu0 0.0
        %3155 = vmatpush1.xpose.msra.mxu0 0.0
        %3156 = vmatprep.subr.mxu0 0.0
        %3157 = vmatpush1.xpose.msra.mxu0 0.0
        %3158 = vmatprep.subr.mxu0 0.0
        %3159 = vmatpush1.xpose.msra.mxu0 0.0
        %3160 = vmatprep.subr.mxu0 0.0
        %3161 = vmatpush1.xpose.msra.mxu0 %v3128
        %3162 = vmatprep.subr.mxu0 0.0
        %3163 = vmatpush2.xpose.msra.mxu0 0.0
        %3164 = vmatprep.subr.mxu0 0.0
        %3165 = vmatpush2.xpose.msra.mxu0 0.0
        %3166 = vmatprep.subr.mxu0 0.0
        %3167 = vmatpush2.xpose.msra.mxu0 0.0
        %3168 = vmatprep.subr.mxu0 0.0
        %3169 = vmatpush2.xpose.msra.mxu0 0.0
        %3170 = vmatprep.subr.mxu0 0.0
        %3171 = vmatpush2.xpose.msra.mxu0 0.0
        %3172 = vmatprep.subr.mxu0 0.0
        %3173 = vmatpush2.xpose.msra.mxu0 0.0
        %3174 = vmatprep.subr.mxu0 0.0
        %3175 = vmatpush2.xpose.msra.mxu0 0.0
        %3176 = vmatprep.subr.mxu0 0.0
        %3177 = vmatpush2.xpose.msra.mxu0 0.0
        %3178 = vmatprep.subr.mxu0 0.0
        %3179 = vmatpush2.xpose.msra.mxu0 0.0
        %3180 = vmatprep.subr.mxu0 0.0
        %3181 = vmatpush2.xpose.msra.mxu0 0.0
        %3182 = vmatprep.subr.mxu0 0.0
        %3183 = vmatpush2.xpose.msra.mxu0 0.0
        %3184 = vmatprep.subr.mxu0 0.0
        %3185 = vmatpush2.xpose.msra.mxu0 0.0
        %3186 = vmatprep.subr.mxu0 0.0
        %3187 = vmatpush2.xpose.msra.mxu0 0.0
        %3188 = vmatprep.subr.mxu0 0.0
        %3189 = vmatpush2.xpose.msra.mxu0 0.0
        %3190 = vmatprep.subr.mxu0 0.0
        %3191 = vmatpush2.xpose.msra.mxu0 0.0
        %3192 = vmatprep.subr.mxu0 0.0
        %3193 = vmatpush2.xpose.msra.mxu0 0.0
        %3194 = vmatprep.mubr.f32.mxu0 0.0
        %3195 = vmatmul.mubr.f32.gmra.mxu0 %v3126
        %v3196 = vpop.f32.mrf.mxu0
        %v3197 = vadd.f32 0.0, %v3196
        %v3198 = vpop.f32.mrf.mxu0
        %3199 = vdwg.mxu0
        %v3200 = vmul.f32 %v3197, 0.35355338
        %v3201 = vsel %vm1146, %v3200, -inf
        %3202 = vmax.xlane.f32.xlu0 %v3201
        %v3203 = vpop.xlane.xlu0 %3202
        %v3204 = vsub.f32 %v3200, %v3203
        %v3205 = vmul.f32 %v3204, 1.442695
        %v3206 = vpow.pop %v3205
        %v3207 = vsel %vm1146, %v3206, 0.0
        %3208 = vadd.xlane.f32.xlu0 %v3207
        %v3209 = vpop.xlane.xlu0 %3208
        %v3210 = vrcp.pop %v3209
        %v3211 = vmul.f32 %v3206, %v3210
        %3212 = vrot.lane.b32.xlu0 %v2393, 40
        %v3213 = vpop.permute.xlu0 %3212
        %v3215 = vsel %vm1160, %v3211, 0
        %v3217 = vsel %vm1164, %v3213, 0
        %3219 = vmatprep.subr.mxu0 0.0
        %3220 = vmatpush1.msra.mxu0 0.0
        %3221 = vmatprep.subr.mxu0 0.0
        %3222 = vmatpush1.msra.mxu0 0.0
        %3223 = vmatprep.subr.mxu0 0.0
        %3224 = vmatpush1.msra.mxu0 0.0
        %3225 = vmatprep.subr.mxu0 0.0
        %3226 = vmatpush1.msra.mxu0 0.0
        %3227 = vmatprep.subr.mxu0 0.0
        %3228 = vmatpush1.msra.mxu0 0.0
        %3229 = vmatprep.subr.mxu0 0.0
        %3230 = vmatpush1.msra.mxu0 0.0
        %3231 = vmatprep.subr.mxu0 0.0
        %3232 = vmatpush1.msra.mxu0 0.0
        %3233 = vmatprep.subr.mxu0 0.0
        %3234 = vmatpush1.msra.mxu0 0.0
        %3235 = vmatprep.subr.mxu0 0.0
        %3236 = vmatpush1.msra.mxu0 0.0
        %3237 = vmatprep.subr.mxu0 0.0
        %3238 = vmatpush1.msra.mxu0 0.0
        %3239 = vmatprep.subr.mxu0 0.0
        %3240 = vmatpush1.msra.mxu0 0.0
        %3241 = vmatprep.subr.mxu0 0.0
        %3242 = vmatpush1.msra.mxu0 0.0
        %3243 = vmatprep.subr.mxu0 0.0
        %3244 = vmatpush1.msra.mxu0 0.0
        %3245 = vmatprep.subr.mxu0 0.0
        %3246 = vmatpush1.msra.mxu0 0.0
        %3247 = vmatprep.subr.mxu0 0.0
        %3248 = vmatpush1.msra.mxu0 0.0
        %3249 = vmatprep.subr.mxu0 0.0
        %3250 = vmatpush1.msra.mxu0 %v3217
        %3251 = vmatprep.subr.mxu0 0.0
        %3252 = vmatpush2.msra.mxu0 0.0
        %3253 = vmatprep.subr.mxu0 0.0
        %3254 = vmatpush2.msra.mxu0 0.0
        %3255 = vmatprep.subr.mxu0 0.0
        %3256 = vmatpush2.msra.mxu0 0.0
        %3257 = vmatprep.subr.mxu0 0.0
        %3258 = vmatpush2.msra.mxu0 0.0
        %3259 = vmatprep.subr.mxu0 0.0
        %3260 = vmatpush2.msra.mxu0 0.0
        %3261 = vmatprep.subr.mxu0 0.0
        %3262 = vmatpush2.msra.mxu0 0.0
        %3263 = vmatprep.subr.mxu0 0.0
        %3264 = vmatpush2.msra.mxu0 0.0
        %3265 = vmatprep.subr.mxu0 0.0
        %3266 = vmatpush2.msra.mxu0 0.0
        %3267 = vmatprep.subr.mxu0 0.0
        %3268 = vmatpush2.msra.mxu0 0.0
        %3269 = vmatprep.subr.mxu0 0.0
        %3270 = vmatpush2.msra.mxu0 0.0
        %3271 = vmatprep.subr.mxu0 0.0
        %3272 = vmatpush2.msra.mxu0 0.0
        %3273 = vmatprep.subr.mxu0 0.0
        %3274 = vmatpush2.msra.mxu0 0.0
        %3275 = vmatprep.subr.mxu0 0.0
        %3276 = vmatpush2.msra.mxu0 0.0
        %3277 = vmatprep.subr.mxu0 0.0
        %3278 = vmatpush2.msra.mxu0 0.0
        %3279 = vmatprep.subr.mxu0 0.0
        %3280 = vmatpush2.msra.mxu0 0.0
        %3281 = vmatprep.subr.mxu0 0.0
        %3282 = vmatpush2.msra.mxu0 0.0
        %3283 = vmatprep.mubr.f32.mxu0 0.0
        %3284 = vmatmul.mubr.f32.gmra.mxu0 %v3215
        %v3285 = vpop.f32.mrf.mxu0
        %v3286 = vadd.f32 0.0, %v3285
        %v3287 = vpop.f32.mrf.mxu0
        %3288 = vdwg.mxu0
        %s3289 = scalar_lea.vmem %s7, 56
        %v3290 = vld [vmem:[%s3289] sm:$0xff]
        %v3292 = vsel %vm1070, %v3286, 0
        %3294 = vmatprep.subr.mxu0 0.0
        %3295 = vmatpush1.msra.mxu0 0.0
        %3296 = vmatprep.subr.mxu0 0.0
        %3297 = vmatpush1.msra.mxu0 0.0
        %3298 = vmatprep.subr.mxu0 0.0
        %3299 = vmatpush1.msra.mxu0 0.0
        %3300 = vmatprep.subr.mxu0 0.0
        %3301 = vmatpush1.msra.mxu0 0.0
        %3302 = vmatprep.subr.mxu0 0.0
        %3303 = vmatpush1.msra.mxu0 0.0
        %3304 = vmatprep.subr.mxu0 0.0
        %3305 = vmatpush1.msra.mxu0 0.0
        %3306 = vmatprep.subr.mxu0 0.0
        %3307 = vmatpush1.msra.mxu0 0.0
        %3308 = vmatprep.subr.mxu0 0.0
        %3309 = vmatpush1.msra.mxu0 0.0
        %3310 = vmatprep.subr.mxu0 0.0
        %3311 = vmatpush1.msra.mxu0 0.0
        %3312 = vmatprep.subr.mxu0 0.0
        %3313 = vmatpush1.msra.mxu0 0.0
        %3314 = vmatprep.subr.mxu0 0.0
        %3315 = vmatpush1.msra.mxu0 0.0
        %3316 = vmatprep.subr.mxu0 0.0
        %3317 = vmatpush1.msra.mxu0 0.0
        %3318 = vmatprep.subr.mxu0 0.0
        %3319 = vmatpush1.msra.mxu0 0.0
        %3320 = vmatprep.subr.mxu0 0.0
        %3321 = vmatpush1.msra.mxu0 0.0
        %3322 = vmatprep.subr.mxu0 0.0
        %3323 = vmatpush1.msra.mxu0 0.0
        %3324 = vmatprep.subr.mxu0 0.0
        %3325 = vmatpush1.msra.mxu0 %v3290
        %3326 = vmatprep.subr.mxu0 0.0
        %3327 = vmatpush2.msra.mxu0 0.0
        %3328 = vmatprep.subr.mxu0 0.0
        %3329 = vmatpush2.msra.mxu0 0.0
        %3330 = vmatprep.subr.mxu0 0.0
        %3331 = vmatpush2.msra.mxu0 0.0
        %3332 = vmatprep.subr.mxu0 0.0
        %3333 = vmatpush2.msra.mxu0 0.0
        %3334 = vmatprep.subr.mxu0 0.0
        %3335 = vmatpush2.msra.mxu0 0.0
        %3336 = vmatprep.subr.mxu0 0.0
        %3337 = vmatpush2.msra.mxu0 0.0
        %3338 = vmatprep.subr.mxu0 0.0
        %3339 = vmatpush2.msra.mxu0 0.0
        %3340 = vmatprep.subr.mxu0 0.0
        %3341 = vmatpush2.msra.mxu0 0.0
        %3342 = vmatprep.subr.mxu0 0.0
        %3343 = vmatpush2.msra.mxu0 0.0
        %3344 = vmatprep.subr.mxu0 0.0
        %3345 = vmatpush2.msra.mxu0 0.0
        %3346 = vmatprep.subr.mxu0 0.0
        %3347 = vmatpush2.msra.mxu0 0.0
        %3348 = vmatprep.subr.mxu0 0.0
        %3349 = vmatpush2.msra.mxu0 0.0
        %3350 = vmatprep.subr.mxu0 0.0
        %3351 = vmatpush2.msra.mxu0 0.0
        %3352 = vmatprep.subr.mxu0 0.0
        %3353 = vmatpush2.msra.mxu0 0.0
        %3354 = vmatprep.subr.mxu0 0.0
        %3355 = vmatpush2.msra.mxu0 0.0
        %3356 = vmatprep.subr.mxu0 0.0
        %3357 = vmatpush2.msra.mxu0 0.0
        %3358 = vmatprep.mubr.f32.mxu0 0.0
        %3359 = vmatmul.mubr.f32.gmra.mxu0 %v3292
        %v3360 = vpop.f32.mrf.mxu0
        %v3361 = vadd.f32 0.0, %v3360
        %v3362 = vpop.f32.mrf.mxu0
        %3363 = vdwg.mxu0
        %v3364 = vadd.f32 %v3121, %v3361
        %v3365 = vadd.f32 %v2278, %v3364
        %s3366 = scalar_lea.vmem %s8, 1
        %v3367 = vld [vmem:[%s3366] sm:$0x1]
        %v3369 = vlaneseq
        %v3370 = vshrl.u32 %v3369, 7
        %v3371 = vsub.s32 0, %v3370
        %v3372 = vrot.slane %v3367, %v3371
        %v3374 = vadd.f32 %v3365, %v3372
        %s3375 = scalar_lea.vmem %s9, 1
        %v3376 = vld [vmem:[%s3375] sm:$0x1]
        %s3377 = scalar_lea.vmem %s10, 1
        %v3378 = vld [vmem:[%s3377] sm:$0x1]
        %v3379 = vsel %vm953, %v3374, 0.0
        %3380 = vadd.xlane.f32.xlu0 %v3379
        %v3381 = vpop.xlane.xlu0 %3380
        %v3382 = vmul.f32 %v3381, %v957
        %v3383 = vsub.f32 %v3374, %v3382
        %v3384 = vmul.f32 %v3383, %v3383
        %v3385 = vsel %vm953, %v3384, 0.0
        %3386 = vadd.xlane.f32.xlu0 %v3385
        %v3387 = vpop.xlane.xlu0 %3386
        %v3388 = vmul.f32 %v3387, %v957
        %v3389 = vadd.f32 %v3388, 1e-06
        %v3390 = vrsqrt.pop %v3389
        %v3391 = vmul.f32 %v3383, %v3390
        %v3393 = vlaneseq
        %v3394 = vshrl.u32 %v3393, 7
        %v3395 = vsub.s32 0, %v3394
        %v3396 = vrot.slane %v3376, %v3395
        %v3398 = vmul.f32 %v3391, %v3396
        %v3400 = vlaneseq
        %v3401 = vshrl.u32 %v3400, 7
        %v3402 = vsub.s32 0, %v3401
        %v3403 = vrot.slane %v3378, %v3402
        %v3405 = vadd.f32 %v3398, %v3403
        %s3406 = scalar_lea.vmem %s11, 32
        %v3407 = vld [vmem:[%s3406] sm:$0xff]
        %v3408 = vld [vmem:[%s3406 + $0x8] sm:$0xff]
        %v3409 = vld [vmem:[%s3406 + $0x10] sm:$0xff]
        %v3410 = vld [vmem:[%s3406 + $0x18] sm:$0xff]
        %s3411 = scalar_lea.vmem %s12, 1
        %v3412 = vld [vmem:[%s3411] sm:$0x1]
        %v3414 = vlaneseq
        %v3415 = vshrl.u32 %v3414, 7
        %v3416 = vsub.s32 0, %v3415
        %v3417 = vrot.slane %v3412, %v3416
        %v3420 = vsel %vm993, %v3405, 0
        %3422 = vmatprep.subr.mxu0 0.0
        %3423 = vmatpush1.msra.mxu0 0.0
        %3424 = vmatprep.subr.mxu0 0.0
        %3425 = vmatpush1.msra.mxu0 0.0
        %3426 = vmatprep.subr.mxu0 0.0
        %3427 = vmatpush1.msra.mxu0 0.0
        %3428 = vmatprep.subr.mxu0 0.0
        %3429 = vmatpush1.msra.mxu0 0.0
        %3430 = vmatprep.subr.mxu0 0.0
        %3431 = vmatpush1.msra.mxu0 0.0
        %3432 = vmatprep.subr.mxu0 0.0
        %3433 = vmatpush1.msra.mxu0 0.0
        %3434 = vmatprep.subr.mxu0 0.0
        %3435 = vmatpush1.msra.mxu0 0.0
        %3436 = vmatprep.subr.mxu0 0.0
        %3437 = vmatpush1.msra.mxu0 0.0
        %3438 = vmatprep.subr.mxu0 0.0
        %3439 = vmatpush1.msra.mxu0 0.0
        %3440 = vmatprep.subr.mxu0 0.0
        %3441 = vmatpush1.msra.mxu0 0.0
        %3442 = vmatprep.subr.mxu0 0.0
        %3443 = vmatpush1.msra.mxu0 0.0
        %3444 = vmatprep.subr.mxu0 0.0
        %3445 = vmatpush1.msra.mxu0 0.0
        %3446 = vmatprep.subr.mxu0 0.0
        %3447 = vmatpush1.msra.mxu0 %v3410
        %3448 = vmatprep.subr.mxu0 0.0
        %3449 = vmatpush1.msra.mxu0 %v3409
        %3450 = vmatprep.subr.mxu0 0.0
        %3451 = vmatpush1.msra.mxu0 %v3408
        %3452 = vmatprep.subr.mxu0 0.0
        %3453 = vmatpush1.msra.mxu0 %v3407
        %3454 = vmatprep.subr.mxu0 0.0
        %3455 = vmatpush2.msra.mxu0 0.0
        %3456 = vmatprep.subr.mxu0 0.0
        %3457 = vmatpush2.msra.mxu0 0.0
        %3458 = vmatprep.subr.mxu0 0.0
        %3459 = vmatpush2.msra.mxu0 0.0
        %3460 = vmatprep.subr.mxu0 0.0
        %3461 = vmatpush2.msra.mxu0 0.0
        %3462 = vmatprep.subr.mxu0 0.0
        %3463 = vmatpush2.msra.mxu0 0.0
        %3464 = vmatprep.subr.mxu0 0.0
        %3465 = vmatpush2.msra.mxu0 0.0
        %3466 = vmatprep.subr.mxu0 0.0
        %3467 = vmatpush2.msra.mxu0 0.0
        %3468 = vmatprep.subr.mxu0 0.0
        %3469 = vmatpush2.msra.mxu0 0.0
        %3470 = vmatprep.subr.mxu0 0.0
        %3471 = vmatpush2.msra.mxu0 0.0
        %3472 = vmatprep.subr.mxu0 0.0
        %3473 = vmatpush2.msra.mxu0 0.0
        %3474 = vmatprep.subr.mxu0 0.0
        %3475 = vmatpush2.msra.mxu0 0.0
        %3476 = vmatprep.subr.mxu0 0.0
        %3477 = vmatpush2.msra.mxu0 0.0
        %3478 = vmatprep.subr.mxu0 0.0
        %3479 = vmatpush2.msra.mxu0 0.0
        %3480 = vmatprep.subr.mxu0 0.0
        %3481 = vmatpush2.msra.mxu0 0.0
        %3482 = vmatprep.subr.mxu0 0.0
        %3483 = vmatpush2.msra.mxu0 0.0
        %3484 = vmatprep.subr.mxu0 0.0
        %3485 = vmatpush2.msra.mxu0 0.0
        %3486 = vmatprep.mubr.f32.mxu0 0.0
        %3487 = vmatmul.mubr.f32.gmra.mxu0 %v3420
        %v3488 = vpop.f32.mrf.mxu0
        %v3489 = vadd.f32 %v3417, %v3488
        %v3490 = vpop.f32.mrf.mxu0
        %3491 = vdwg.mxu0
        %v3492 = vmul.f32 %v3489, 0.5
        %v3493 = vmul.f32 %v3489, 0.70710677
        %vm3494 = vcmp.ge.f32.partialorder %v3493, 0.0
        %v3495 = vsel %vm3494, 1.0, -1.0
        %v3496 = vand.u32 2147483647, %v3493
        %v3497 = vmul.f32 %v3496, 0.3275911
        %v3498 = vadd.f32 %v3497, 1.0
        %v3499 = vrcp.pop %v3498
        %v3500 = vmul.f32 1.0, %v3499
        %v3501 = vmul.f32 %v3500, 1.0614054
        %v3502 = vadd.f32 %v3501, -1.4531521
        %v3503 = vmul.f32 %v3502, %v3500
        %v3504 = vadd.f32 %v3503, 1.4214138
        %v3505 = vmul.f32 %v3504, %v3500
        %v3506 = vadd.f32 %v3505, -0.28449672
        %v3507 = vmul.f32 %v3506, %v3500
        %v3508 = vadd.f32 %v3507, 0.2548296
        %v3509 = vmul.f32 %v3508, %v3500
        %v3510 = vsub.f32 0.0, %v3496
        %v3511 = vmul.f32 %v3510, %v3496
        %v3512 = vmul.f32 %v3511, 1.442695
        %v3513 = vpow.pop %v3512
        %v3514 = vmul.f32 %v3509, %v3513
        %v3515 = vsub.f32 1.0, %v3514
        %v3516 = vmul.f32 %v3495, %v3515
        %v3517 = vadd.f32 %v3516, 1.0
        %v3518 = vmul.f32 %v3492, %v3517
        %s3519 = scalar_lea.vmem %s13, 64
        %v3520 = vld [vmem:[%s3519] sm:$0xff]
        %v3521 = vld [vmem:[%s3519 + $0x8] sm:$0xff]
        %v3522 = vld [vmem:[%s3519 + $0x10] sm:$0xff]
        %v3523 = vld [vmem:[%s3519 + $0x18] sm:$0xff]
        %v3524 = vld [vmem:[%s3519 + $0x20] sm:$0xff]
        %v3525 = vld [vmem:[%s3519 + $0x28] sm:$0xff]
        %v3526 = vld [vmem:[%s3519 + $0x30] sm:$0xff]
        %v3527 = vld [vmem:[%s3519 + $0x38] sm:$0xff]
        %v3529 = vsel %vm2196, %v3518, 0
        %3531 = vmatprep.subr.mxu0 0.0
        %3532 = vmatpush1.msra.mxu0 0.0
        %3533 = vmatprep.subr.mxu0 0.0
        %3534 = vmatpush1.msra.mxu0 0.0
        %3535 = vmatprep.subr.mxu0 0.0
        %3536 = vmatpush1.msra.mxu0 0.0
        %3537 = vmatprep.subr.mxu0 0.0
        %3538 = vmatpush1.msra.mxu0 0.0
        %3539 = vmatprep.subr.mxu0 0.0
        %3540 = vmatpush1.msra.mxu0 0.0
        %3541 = vmatprep.subr.mxu0 0.0
        %3542 = vmatpush1.msra.mxu0 0.0
        %3543 = vmatprep.subr.mxu0 0.0
        %3544 = vmatpush1.msra.mxu0 0.0
        %3545 = vmatprep.subr.mxu0 0.0
        %3546 = vmatpush1.msra.mxu0 0.0
        %3547 = vmatprep.subr.mxu0 0.0
        %3548 = vmatpush1.msra.mxu0 %v3527
        %3549 = vmatprep.subr.mxu0 0.0
        %3550 = vmatpush1.msra.mxu0 %v3526
        %3551 = vmatprep.subr.mxu0 0.0
        %3552 = vmatpush1.msra.mxu0 %v3525
        %3553 = vmatprep.subr.mxu0 0.0
        %3554 = vmatpush1.msra.mxu0 %v3524
        %3555 = vmatprep.subr.mxu0 0.0
        %3556 = vmatpush1.msra.mxu0 %v3523
        %3557 = vmatprep.subr.mxu0 0.0
        %3558 = vmatpush1.msra.mxu0 %v3522
        %3559 = vmatprep.subr.mxu0 0.0
        %3560 = vmatpush1.msra.mxu0 %v3521
        %3561 = vmatprep.subr.mxu0 0.0
        %3562 = vmatpush1.msra.mxu0 %v3520
        %3563 = vmatprep.subr.mxu0 0.0
        %3564 = vmatpush2.msra.mxu0 0.0
        %3565 = vmatprep.subr.mxu0 0.0
        %3566 = vmatpush2.msra.mxu0 0.0
        %3567 = vmatprep.subr.mxu0 0.0
        %3568 = vmatpush2.msra.mxu0 0.0
        %3569 = vmatprep.subr.mxu0 0.0
        %3570 = vmatpush2.msra.mxu0 0.0
        %3571 = vmatprep.subr.mxu0 0.0
        %3572 = vmatpush2.msra.mxu0 0.0
        %3573 = vmatprep.subr.mxu0 0.0
        %3574 = vmatpush2.msra.mxu0 0.0
        %3575 = vmatprep.subr.mxu0 0.0
        %3576 = vmatpush2.msra.mxu0 0.0
        %3577 = vmatprep.subr.mxu0 0.0
        %3578 = vmatpush2.msra.mxu0 0.0
        %3579 = vmatprep.subr.mxu0 0.0
        %3580 = vmatpush2.msra.mxu0 0.0
        %3581 = vmatprep.subr.mxu0 0.0
        %3582 = vmatpush2.msra.mxu0 0.0
        %3583 = vmatprep.subr.mxu0 0.0
        %3584 = vmatpush2.msra.mxu0 0.0
        %3585 = vmatprep.subr.mxu0 0.0
        %3586 = vmatpush2.msra.mxu0 0.0
        %3587 = vmatprep.subr.mxu0 0.0
        %3588 = vmatpush2.msra.mxu0 0.0
        %3589 = vmatprep.subr.mxu0 0.0
        %3590 = vmatpush2.msra.mxu0 0.0
        %3591 = vmatprep.subr.mxu0 0.0
        %3592 = vmatpush2.msra.mxu0 0.0
        %3593 = vmatprep.subr.mxu0 0.0
        %3594 = vmatpush2.msra.mxu0 0.0
        %3595 = vmatprep.mubr.f32.mxu0 0.0
        %3596 = vmatmul.mubr.f32.gmra.mxu0 %v3529
        %v3597 = vpop.f32.mrf.mxu0
        %v3598 = vadd.f32 0.0, %v3597
        %v3599 = vpop.f32.mrf.mxu0
        %3600 = vdwg.mxu0
        %v3601 = vadd.f32 %v3374, %v3598
        %s3602 = scalar_lea.vmem %s14, 1
        %v3603 = vld [vmem:[%s3602] sm:$0x1]
        %v3605 = vlaneseq
        %v3606 = vshrl.u32 %v3605, 7
        %v3607 = vsub.s32 0, %v3606
        %v3608 = vrot.slane %v3603, %v3607
        %v3610 = vadd.f32 %v3601, %v3608
        %v3611 = vld [vmem:[%s15] sm:$0x1]
        %v3612 = vld [vmem:[%s16] sm:$0x1]
        %v3613 = vsel %vm953, %v3610, 0.0
        %3614 = vadd.xlane.f32.xlu0 %v3613
        %v3615 = vpop.xlane.xlu0 %3614
        %v3616 = vmul.f32 %v3615, %v957
        %v3617 = vsub.f32 %v3610, %v3616
        %v3618 = vmul.f32 %v3617, %v3617
        %v3619 = vsel %vm953, %v3618, 0.0
        %3620 = vadd.xlane.f32.xlu0 %v3619
        %v3621 = vpop.xlane.xlu0 %3620
        %v3622 = vmul.f32 %v3621, %v957
        %v3623 = vadd.f32 %v3622, 1e-06
        %v3624 = vrsqrt.pop %v3623
        %v3625 = vmul.f32 %v3617, %v3624
        %v3627 = vlaneseq
        %v3628 = vshrl.u32 %v3627, 7
        %v3629 = vsub.s32 0, %v3628
        %v3630 = vrot.slane %v3611, %v3629
        %v3632 = vmul.f32 %v3625, %v3630
        %v3634 = vlaneseq
        %v3635 = vshrl.u32 %v3634, 7
        %v3636 = vsub.s32 0, %v3635
        %v3637 = vrot.slane %v3612, %v3636
        %v3639 = vadd.f32 %v3632, %v3637
        %v3640 = vld [vmem:[%s17] sm:$0xff]
        %v3641 = vld [vmem:[%s17 + $0x8] sm:$0xff]
        %v3642 = vld [vmem:[%s17 + $0x10] sm:$0xff]
        %v3643 = vld [vmem:[%s17 + $0x18] sm:$0xff]
        %v3644 = vld [vmem:[%s18] sm:$0x1]
        %v3646 = vsel %vm993, %v3639, 0
        %3648 = vmatprep.subr.mxu0 0.0
        %3649 = vmatpush1.msra.mxu0 0.0
        %3650 = vmatprep.subr.mxu0 0.0
        %3651 = vmatpush1.msra.mxu0 0.0
        %3652 = vmatprep.subr.mxu0 0.0
        %3653 = vmatpush1.msra.mxu0 0.0
        %3654 = vmatprep.subr.mxu0 0.0
        %3655 = vmatpush1.msra.mxu0 0.0
        %3656 = vmatprep.subr.mxu0 0.0
        %3657 = vmatpush1.msra.mxu0 0.0
        %3658 = vmatprep.subr.mxu0 0.0
        %3659 = vmatpush1.msra.mxu0 0.0
        %3660 = vmatprep.subr.mxu0 0.0
        %3661 = vmatpush1.msra.mxu0 0.0
        %3662 = vmatprep.subr.mxu0 0.0
        %3663 = vmatpush1.msra.mxu0 0.0
        %3664 = vmatprep.subr.mxu0 0.0
        %3665 = vmatpush1.msra.mxu0 0.0
        %3666 = vmatprep.subr.mxu0 0.0
        %3667 = vmatpush1.msra.mxu0 0.0
        %3668 = vmatprep.subr.mxu0 0.0
        %3669 = vmatpush1.msra.mxu0 0.0
        %3670 = vmatprep.subr.mxu0 0.0
        %3671 = vmatpush1.msra.mxu0 0.0
        %3672 = vmatprep.subr.mxu0 0.0
        %3673 = vmatpush1.msra.mxu0 %v3643
        %3674 = vmatprep.subr.mxu0 0.0
        %3675 = vmatpush1.msra.mxu0 %v3642
        %3676 = vmatprep.subr.mxu0 0.0
        %3677 = vmatpush1.msra.mxu0 %v3641
        %3678 = vmatprep.subr.mxu0 0.0
        %3679 = vmatpush1.msra.mxu0 %v3640
        %3680 = vmatprep.subr.mxu0 0.0
        %3681 = vmatpush2.msra.mxu0 0.0
        %3682 = vmatprep.subr.mxu0 0.0
        %3683 = vmatpush2.msra.mxu0 0.0
        %3684 = vmatprep.subr.mxu0 0.0
        %3685 = vmatpush2.msra.mxu0 0.0
        %3686 = vmatprep.subr.mxu0 0.0
        %3687 = vmatpush2.msra.mxu0 0.0
        %3688 = vmatprep.subr.mxu0 0.0
        %3689 = vmatpush2.msra.mxu0 0.0
        %3690 = vmatprep.subr.mxu0 0.0
        %3691 = vmatpush2.msra.mxu0 0.0
        %3692 = vmatprep.subr.mxu0 0.0
        %3693 = vmatpush2.msra.mxu0 0.0
        %3694 = vmatprep.subr.mxu0 0.0
        %3695 = vmatpush2.msra.mxu0 0.0
        %3696 = vmatprep.subr.mxu0 0.0
        %3697 = vmatpush2.msra.mxu0 0.0
        %3698 = vmatprep.subr.mxu0 0.0
        %3699 = vmatpush2.msra.mxu0 0.0
        %3700 = vmatprep.subr.mxu0 0.0
        %3701 = vmatpush2.msra.mxu0 0.0
        %3702 = vmatprep.subr.mxu0 0.0
        %3703 = vmatpush2.msra.mxu0 0.0
        %3704 = vmatprep.subr.mxu0 0.0
        %3705 = vmatpush2.msra.mxu0 0.0
        %3706 = vmatprep.subr.mxu0 0.0
        %3707 = vmatpush2.msra.mxu0 0.0
        %3708 = vmatprep.subr.mxu0 0.0
        %3709 = vmatpush2.msra.mxu0 0.0
        %3710 = vmatprep.subr.mxu0 0.0
        %3711 = vmatpush2.msra.mxu0 0.0
        %3712 = vmatprep.mubr.f32.mxu0 0.0
        %3713 = vmatmul.mubr.f32.gmra.mxu0 %v3646
        %v3714 = vpop.f32.mrf.mxu0
        %v3715 = vadd.f32 %v3644, %v3714
        %v3716 = vpop.f32.mrf.mxu0
        %3717 = vdwg.mxu0
        %3718 = vst [vmem:[%s590] sm:$0x1] %v3715
        %s3719 = sand.u32 %s445, 1
        %s3720 = scalar_lea.sflag [#allocation4], %s3719
        %s3721 = sand.u32 %s445, 1
        %s3722 = scalar_lea.vmem [#allocation3], %s3721
        // Predicated region
        $region97: #{eeg_vit_forward.1} parent=95 // pred_check
          %p3723 = pneg %p455
        $region98: #{eeg_vit_forward.1} parent=95 // pred_check_branch
          %3725 = sbr.rel (%p3723) target = $region100
        $region99: #{eeg_vit_forward.1} parent=95 // pred_region
          %s3727 = ssub.s32 16, 16
          %3728 = vsyncadd %s3720, %s3727
          %s3729 = smul.addr %s33, 16
          %s3730 = scalar_lea.hbm %s19, %s3729
          %s3732 = sshll.u32 %s3722, 4
          %s3733 = int_to_ptr.vmem [resolvable:$true] %s3732
          %3735 = dma.vmem_to_hbm [thread:$0]  %s3733, 16, %s3730, %s3720
        $region100: #{eeg_vit_forward.1} parent=95 // pred_fallthru
          _
      $region96: #{eeg_vit_forward.1} parent=5 // pred_fallthru
        _
      %p3736 = scmp.le.s32.totalorder 2, %s28
      // Predicated region
      $region101: #{eeg_vit_forward.1} parent=5 // pred_check
        %p3737 = pneg %p3736
      $region102: #{eeg_vit_forward.1} parent=5 // pred_check_branch
        %3739 = sbr.rel (%p3737) target = $region104
      $region103: #{eeg_vit_forward.1} parent=5 // pred_region
        %s3740 = ssub.s32 %s28, 2
        // Predicated region
        $region105: #{eeg_vit_forward.1} parent=103 // pred_check
          %p3741 = pneg %p461
        $region106: #{eeg_vit_forward.1} parent=103 // pred_check_branch
          %3743 = sbr.rel (%p3741) target = $region108
        $region107: #{eeg_vit_forward.1} parent=103 // pred_region
          %s3744 = sand.u32 %s446, 1
          %s3745 = scalar_lea.sflag [#allocation4], %s3744
          %s3746 = sand.u32 %s446, 1
          %s3747 = scalar_lea.vmem [#allocation3], %s3746
          %3748 = dma.done %s3745, 16
        $region108: #{eeg_vit_forward.1} parent=103 // pred_fallthru
          _
      $region104: #{eeg_vit_forward.1} parent=5 // pred_fallthru
        _
    $region6: #{eeg_vit_forward.1} parent=1 // loop_footer
      %s32 = sadd.s32 1, %s28
    $region7: #{eeg_vit_forward.1} parent=1 // loop_footer_branch
      %27 = sbr.rel target = $region3
    $region8: #{eeg_vit_forward.1} parent=1 // loop_exit
      _
    %3749 = vsyncpa [#allocation4], 1
    %s3750 = scalar_lea.sflag [#allocation4], 1
    %3751 = vsyncpa %s3750, 1

</llo_original>
